<compile_context>
chip_gen: v5e
topology: v5e:2x2
jax: 0.10.0
libtpu: 0.0.40
codegen_flags: <defaults>
</compile_context>

<pallas_src>
import numpy as np
import jax
import jax.numpy as jnp
from jax.experimental import pallas as pl
from jax.experimental.pallas import tpu as pltpu

K = 5                         # conv_kernel_size = (5, 5), 'same' padding
PAD = (K - 1) // 2
POOL = 2                      # pool_kernel_size = (2, 2), stride 2
_TAPS = [(ky - PAD, kx - PAD) for ky in range(K) for kx in range(K)]


# ----------------------------- host-side constants --------------------------
def _conv_masks(B, H, W):
    """(K*K, B*H*W) f32 validity masks for the 25 'same'-conv taps."""
    n = np.arange(B * H * W)
    y = (n // W) % H
    x = n % W
    rows = []
    for dy, dx in _TAPS:
        valid = (y + dy >= 0) & (y + dy < H) & (x + dx >= 0) & (x + dx < W)
        rows.append(valid.astype(np.float32))
    return jnp.asarray(np.stack(rows, axis=0))


def _pool_select(B, H, W):
    """(B*H*W, B*(H//2)*(W//2)) 0/1 matrix: pick top-left corner of each 2x2
    window (flat (b, y, x) order on both sides)."""
    H2, W2 = H // POOL, W // POOL
    N0, N1 = B * H * W, B * H2 * W2
    S = np.zeros((N0, N1), np.float32)
    n1 = np.arange(N1)
    b = n1 // (H2 * W2)
    rem = n1 % (H2 * W2)
    yy, xx = rem // W2, rem % W2
    S[b * H * W + (POOL * yy) * W + POOL * xx, n1] = 1.0
    return jnp.asarray(S)


def _fc_select(B, H, W):
    """(B, B*H*W, (H//2)*(W//2)) per-batch pooled-pixel selection in
    (y', x') row-major order (the spatial part of the torch NCHW flatten)."""
    H2, W2 = H // POOL, W // POOL
    HW2 = H2 * W2
    S = np.zeros((B, B * H * W, HW2), np.float32)
    j = np.arange(HW2)
    yy, xx = j // W2, j % W2
    for b in range(B):
        S[b, b * H * W + (POOL * yy) * W + POOL * xx, j] = 1.0
    return jnp.asarray(S)


# ----------------------------- fused kernel body ----------------------------
def _make_kernel(B, Ch, layer_hw, last_eff):
    L = len(layer_hw)

    def kernel(*refs):
        it = iter(refs)
        # ---- inputs ----
        xcol_ref = next(it)            # (K*K*Cin, N0) im2col of the frame
        wx0T_ref = next(it)            # (4Ch, K*K*Cin)
        b0_ref = next(it)              # (4Ch, 1)
        wh0T_ref = next(it)            # (4Ch, K*K*Ch)
        mask0_ref = next(it)           # (K*K, N0)
        S_refs, wcatT_refs, bl_refs, maskl_refs = [], [], [], []
        for _ in range(1, L):
            S_refs.append(next(it))        # (N_{l-1}, N_l) pooling selection
            wcatT_refs.append(next(it))    # (4Ch, K*K*2Ch)
            bl_refs.append(next(it))       # (4Ch, 1)
            maskl_refs.append(next(it))    # (K*K, N_l)
        Sfc_ref = next(it)             # (B, N_top, Hf*Wf)
        fcw_ref = next(it)             # (Ch, Hf*Wf, ncls_pad)
        fcb_ref = next(it)             # (1, ncls_pad)
        # ---- output ----
        out_ref = next(it)             # (B, ncls_pad)
        # ---- scratch (persists across grid iterations) ----
        gx0_ref = next(it)             # (4Ch, N0) hoisted input gates (+bias)
        h_refs, c_refs = [], []
        for _ in range(L):
            h_refs.append(next(it))    # (Ch, N_l)
            c_refs.append(next(it))    # (Ch, N_l)
        slab_refs = [next(it) for _ in range(L)]   # im2col slabs per layer

        t = pl.program_id(0)

        def mm(a, b):
            return jax.lax.dot_general(
                a, b, (((1,), (0,)), ((), ())),
                preferred_element_type=jnp.float32)

        # -------- t == 0: zero state, hoist layer-0 input conv (one deep
        # matmul over the wrapper-built im2col slab, bias folded in).
        @pl.when(t == 0)
        def _init():
            for l in range(L):
                h_refs[l][...] = jnp.zeros_like(h_refs[l])
                c_refs[l][...] = jnp.zeros_like(c_refs[l])
            gx0_ref[...] = b0_ref[...] + mm(wx0T_ref[...], xcol_ref[...])

        # -------- lane-dense im2col slab: roll along the flat pixel axis,
        # mask the border wrap-around, store one aligned sublane block per tap.
        def build_slab(src, slab_ref, mask_ref, W, nC):
            N = src.shape[1]
            for ti, (dy, dx) in enumerate(_TAPS):
                s = dy * W + dx
                if s == 0:                       # center tap: no shift, no mask
                    slab_ref[ti * nC:(ti + 1) * nC, :] = src
                else:
                    shifted = pltpu.roll(src, (-s) % N, 1)
                    slab_ref[ti * nC:(ti + 1) * nC, :] = (
                        shifted * mask_ref[ti:ti + 1, :])

        # -------- LSTM cell update entirely in the dense (4Ch, N) layout.
        def cell(gates, c_ref):
            i_g = jax.nn.sigmoid(gates[0 * Ch:1 * Ch, :])
            f_g = jax.nn.sigmoid(gates[1 * Ch:2 * Ch, :])
            g_g = jnp.tanh(gates[2 * Ch:3 * Ch, :])
            o_g = jax.nn.sigmoid(gates[3 * Ch:4 * Ch, :])
            c_new = f_g * c_ref[...] + i_g * g_g
            c_ref[...] = c_new
            return o_g * jnp.tanh(c_new)

        # -------- 2x2/stride-2 max pool, step 1: window max at top-left pos.
        def pool_max(h, W):
            N = h.shape[1]
            m = jnp.maximum(h, pltpu.roll(h, N - 1, 1))     # neighbor x+1
            return jnp.maximum(m, pltpu.roll(m, N - W, 1))  # neighbor y+1

        # -------- layer 0: only the hidden conv runs per step -------------
        W0 = layer_hw[0][1]
        build_slab(h_refs[0][...], slab_refs[0], mask0_ref, W0, Ch)
        gates = gx0_ref[...] + mm(wh0T_ref[...], slab_refs[0][...])
        h_new = cell(gates, c_refs[0])
        h_refs[0][...] = h_new

        # -------- layers 1..L-1: one fused conv over [pooled || hidden] ---
        for l in range(1, L):
            Wp = layer_hw[l - 1][1]
            Wl = layer_hw[l][1]
            pooled = mm(pool_max(h_new, Wp), S_refs[l - 1][...])   # (Ch, N_l)
            cat = jnp.concatenate([pooled, h_refs[l][...]], axis=0)
            build_slab(cat, slab_refs[l], maskl_refs[l - 1], Wl, 2 * Ch)
            gates = bl_refs[l - 1][...] + mm(wcatT_refs[l - 1][...],
                                             slab_refs[l][...])
            h_new = cell(gates, c_refs[l])
            h_refs[l][...] = h_new

        # -------- last effective step: pool top layer + FC (runs once) ----
        # Final pool selection and torch's NCHW flatten are folded into the
        # per-batch selection matrices / FC weight layout.
        @pl.when(t == last_eff)
        def _fc():
            Wt = layer_hw[L - 1][1]
            m = pool_max(h_new, Wt)              # (Ch, N_top)
            for b in range(B):
                p_b = mm(m, Sfc_ref[b])          # (Ch, Hf*Wf)
                acc = fcb_ref[...]               # (1, ncls_pad)
                for c in range(Ch):
                    acc = acc + mm(p_b[c:c + 1, :], fcw_ref[c])
                out_ref[b:b + 1, :] = acc

    return kernel


# ----------------------------- wrapper ---------------------------------------
class PallasCLSTMModel:
    """ConvLSTM stack + FC head (CLSTM_4 Model) as a single fused Pallas kernel."""

    def __init__(self, key, *, num_classes=10, nb_lstm_units=8, channels=3,
                 lstm_layers=2, step=4, image_size=(16, 16),
                 effective_step=(1, 3)):
        self.num_classes = num_classes
        self.hid = nb_lstm_units
        self.channels = channels
        self.layers = lstm_layers
        self.step = step
        self.im = tuple(image_size)
        self.effective_step = tuple(effective_step)
        assert max(self.effective_step) < step
        assert image_size[0] % (POOL ** lstm_layers) == 0
        assert image_size[1] % (POOL ** lstm_layers) == 0

        hid = nb_lstm_units
        keys = jax.random.split(key, 3 * lstm_layers + 2)
        ki = 0
        in_ch = channels
        self.wcatT, self.bias = [], []
        for l in range(lstm_layers):
            wx = 0.1 * jax.random.normal(
                keys[ki], (K, K, in_ch, 4 * hid), jnp.float32); ki += 1
            wh = 0.1 * jax.random.normal(
                keys[ki], (K, K, hid, 4 * hid), jnp.float32); ki += 1
            b = 0.1 * jax.random.normal(keys[ki], (4 * hid,), jnp.float32); ki += 1
            if l == 0:
                # Pre-transposed so gates accumulate directly in (4Ch, N).
                self.wx0T = wx.reshape(K * K * in_ch, 4 * hid).T
                self.wh0T = wh.reshape(K * K * hid, 4 * hid).T
                self.b0 = b.reshape(4 * hid, 1)
            else:
                wcat = jnp.concatenate([wx, wh], axis=2)   # [input || hidden]
                self.wcatT.append(wcat.reshape(K * K * 2 * hid, 4 * hid).T)
                self.bias.append(b.reshape(4 * hid, 1))
            in_ch = hid

        Hf = image_size[0] // (POOL ** lstm_layers)
        Wf = image_size[1] // (POOL ** lstm_layers)
        fc_in = hid * Hf * Wf
        fc_w = 0.1 * jax.random.normal(
            keys[ki], (fc_in, num_classes), jnp.float32); ki += 1
        fc_b = 0.1 * jax.random.normal(keys[ki], (num_classes,), jnp.float32)
        # torch flatten is NCHW: row index = c*Hf*Wf + y*Wf + x.  Class dim
        # padded to a lane-dense multiple of 128.
        self.ncls_pad = 128 * ((num_classes + 127) // 128)
        fcw3 = fc_w.reshape(hid, Hf * Wf, num_classes)
        self.fcw3 = jnp.zeros((hid, Hf * Wf, self.ncls_pad), jnp.float32
                              ).at[..., :num_classes].set(fcw3)
        self.fcb = jnp.zeros((1, self.ncls_pad), jnp.float32
                             ).at[0, :num_classes].set(fc_b)

    def __call__(self, x_nchw):
        B = x_nchw.shape[0]
        H0, W0 = self.im
        Ch, L, Cin = self.hid, self.layers, self.channels
        layer_hw = [(H0 // POOL ** l, W0 // POOL ** l) for l in range(L)]
        last_eff = max(self.effective_step)
        N0 = B * H0 * W0

        # ---- wrapper-side layout plumbing (one-time, outside the time loop):
        # im2col of the (constant) input frame in the lane-dense (C, N) layout.
        x = x_nchw.astype(jnp.float32)
        xpad = jnp.pad(x, ((0, 0), (0, 0), (PAD, PAD), (PAD, PAD)))
        cols = []
        for ky in range(K):
            for kx in range(K):
                sl = xpad[:, :, ky:ky + H0, kx:kx + W0]        # (B,Cin,H0,W0)
                cols.append(jnp.transpose(sl, (1, 0, 2, 3)).reshape(Cin, N0))
        x_col = jnp.concatenate(cols, axis=0)                  # (K*K*Cin, N0)

        inputs = [x_col, self.wx0T, self.b0, self.wh0T,
                  _conv_masks(B, H0, W0)]
        for l in range(1, L):
            Hp, Wp = layer_hw[l - 1]
            Hl, Wl = layer_hw[l]
            inputs += [_pool_select(B, Hp, Wp), self.wcatT[l - 1],
                       self.bias[l - 1], _conv_masks(B, Hl, Wl)]
        Ht, Wt = layer_hw[-1]
        inputs += [_fc_select(B, Ht, Wt), self.fcw3, self.fcb]

        scratch = [pltpu.VMEM((4 * Ch, N0), jnp.float32)]       # hoisted gx0
        for (Hl, Wl) in layer_hw:
            Nl = B * Hl * Wl
            scratch += [pltpu.VMEM((Ch, Nl), jnp.float32),      # h_l
                        pltpu.VMEM((Ch, Nl), jnp.float32)]      # c_l
        scratch += [pltpu.VMEM((K * K * Ch, N0), jnp.float32)]  # layer-0 slab
        for l in range(1, L):
            Hl, Wl = layer_hw[l]
            scratch += [pltpu.VMEM((K * K * 2 * Ch, B * Hl * Wl), jnp.float32)]

        vmem = pl.BlockSpec(memory_space=pltpu.MemorySpace.VMEM)
        kernel = _make_kernel(B, Ch, layer_hw, last_eff)
        out = pl.pallas_call(
            kernel,
            grid=(last_eff + 1,),          # steps past the last output skipped
            out_shape=jax.ShapeDtypeStruct((B, self.ncls_pad), jnp.float32),
            in_specs=[vmem] * len(inputs),
            out_specs=vmem,
            scratch_shapes=scratch,
            compiler_params=pltpu.CompilerParams(
                dimension_semantics=("arbitrary",)),
        )(*inputs)
        return out[:, :self.num_classes]   # add_softmax=False -> raw logits


if __name__ == "__main__":
    key = jax.random.PRNGKey(0)
    k_param, k_x = jax.random.split(key)

    # Small shapes consistent with the module (scaled-down defaults):
    # batch=2, channels=3, image 16x16, 2 ConvLSTM layers of 8 units,
    # step=4, effective_step=[1, 3], num_classes=10.
    model = PallasCLSTMModel(
        k_param, num_classes=10, nb_lstm_units=8, channels=3,
        lstm_layers=2, step=4, image_size=(16, 16), effective_step=(1, 3))

    x = jax.random.normal(k_x, (2, 3, 16, 16), jnp.float32)  # NCHW, like torch
    out = model(x)
    jax.block_until_ready(out)
    assert out.shape == (2, 10) and out.dtype == jnp.float32
    print("KERNEL_OK")
</pallas_src>

<mosaic_0001>
module attributes {stable_mosaic.version = 11 : i64} {
  func.func @kernel(%arg0: i32, %arg1: memref<75x512xf32, #tpu.memory_space<vmem>>, %arg2: memref<32x75xf32, #tpu.memory_space<vmem>>, %arg3: memref<32x1xf32, #tpu.memory_space<vmem>>, %arg4: memref<32x200xf32, #tpu.memory_space<vmem>>, %arg5: memref<25x512xf32, #tpu.memory_space<vmem>>, %arg6: memref<512x128xf32, #tpu.memory_space<vmem>>, %arg7: memref<32x400xf32, #tpu.memory_space<vmem>>, %arg8: memref<32x1xf32, #tpu.memory_space<vmem>>, %arg9: memref<25x128xf32, #tpu.memory_space<vmem>>, %arg10: memref<2x128x16xf32, #tpu.memory_space<vmem>>, %arg11: memref<8x16x128xf32, #tpu.memory_space<vmem>>, %arg12: memref<1x128xf32, #tpu.memory_space<vmem>>, %arg13: memref<2x128xf32, #tpu.memory_space<vmem>>, %arg14: memref<32x512xf32, #tpu.memory_space<vmem>>, %arg15: memref<8x512xf32, #tpu.memory_space<vmem>>, %arg16: memref<8x512xf32, #tpu.memory_space<vmem>>, %arg17: memref<8x128xf32, #tpu.memory_space<vmem>>, %arg18: memref<8x128xf32, #tpu.memory_space<vmem>>, %arg19: memref<200x512xf32, #tpu.memory_space<vmem>>, %arg20: memref<400x128xf32, #tpu.memory_space<vmem>>) attributes {dimension_semantics = [#tpu.dimension_semantics<arbitrary>], iteration_bounds = array<i64: 4>, scalar_prefetch = 0 : i64, scratch_operands = 7 : i64, tpu.core_type = #tpu.core_type<tc>, window_params = [{pipeline_mode = #tpu.pipeline_mode<synchronous>, transform_indices = @transform_0, window_bounds = array<i64: 75, 512>}, {pipeline_mode = #tpu.pipeline_mode<synchronous>, transform_indices = @transform_1, window_bounds = array<i64: 32, 75>}, {pipeline_mode = #tpu.pipeline_mode<synchronous>, transform_indices = @transform_2, window_bounds = array<i64: 32, 1>}, {pipeline_mode = #tpu.pipeline_mode<synchronous>, transform_indices = @transform_3, window_bounds = array<i64: 32, 200>}, {pipeline_mode = #tpu.pipeline_mode<synchronous>, transform_indices = @transform_4, window_bounds = array<i64: 25, 512>}, {pipeline_mode = #tpu.pipeline_mode<synchronous>, transform_indices = @transform_5, window_bounds = array<i64: 512, 128>}, {pipeline_mode = #tpu.pipeline_mode<synchronous>, transform_indices = @transform_6, window_bounds = array<i64: 32, 400>}, {pipeline_mode = #tpu.pipeline_mode<synchronous>, transform_indices = @transform_7, window_bounds = array<i64: 32, 1>}, {pipeline_mode = #tpu.pipeline_mode<synchronous>, transform_indices = @transform_8, window_bounds = array<i64: 25, 128>}, {pipeline_mode = #tpu.pipeline_mode<synchronous>, transform_indices = @transform_9, window_bounds = array<i64: 2, 128, 16>}, {pipeline_mode = #tpu.pipeline_mode<synchronous>, transform_indices = @transform_10, window_bounds = array<i64: 8, 16, 128>}, {pipeline_mode = #tpu.pipeline_mode<synchronous>, transform_indices = @transform_11, window_bounds = array<i64: 1, 128>}, {pipeline_mode = #tpu.pipeline_mode<synchronous>, transform_indices = @transform_12, window_bounds = array<i64: 2, 128>}]} {
    %c0_i32 = arith.constant 0 : i32
    %0 = arith.cmpi eq, %arg0, %c0_i32 : i32
    %1 = arith.extui %0 : i1 to i32
    %c0_i32_0 = arith.constant 0 : i32
    %2 = arith.cmpi ne, %1, %c0_i32_0 : i32
    scf.if %2 {
      %cst_188 = arith.constant 0.000000e+00 : f32
      %324 = vector.broadcast %cst_188 : f32 to vector<8x512xf32>
      %c0_189 = arith.constant 0 : index
      %c0_190 = arith.constant 0 : index
      %325 = vector.load %arg15[%c0_189, %c0_190] : memref<8x512xf32, #tpu.memory_space<vmem>>, vector<8x512xf32>
      tpu.vector_store %arg15[%c0_189, %c0_190], %324 {strides = array<i32>} : memref<8x512xf32, #tpu.memory_space<vmem>>, vector<8x512xf32>,
      %cst_191 = arith.constant 0.000000e+00 : f32
      %326 = vector.broadcast %cst_191 : f32 to vector<8x512xf32>
      %c0_192 = arith.constant 0 : index
      %c0_193 = arith.constant 0 : index
      %327 = vector.load %arg16[%c0_192, %c0_193] : memref<8x512xf32, #tpu.memory_space<vmem>>, vector<8x512xf32>
      tpu.vector_store %arg16[%c0_192, %c0_193], %326 {strides = array<i32>} : memref<8x512xf32, #tpu.memory_space<vmem>>, vector<8x512xf32>,
      %cst_194 = arith.constant 0.000000e+00 : f32
      %328 = vector.broadcast %cst_194 : f32 to vector<8x128xf32>
      %c0_195 = arith.constant 0 : index
      %c0_196 = arith.constant 0 : index
      %329 = vector.load %arg17[%c0_195, %c0_196] : memref<8x128xf32, #tpu.memory_space<vmem>>, vector<8x128xf32>
      tpu.vector_store %arg17[%c0_195, %c0_196], %328 {strides = array<i32>} : memref<8x128xf32, #tpu.memory_space<vmem>>, vector<8x128xf32>,
      %cst_197 = arith.constant 0.000000e+00 : f32
      %330 = vector.broadcast %cst_197 : f32 to vector<8x128xf32>
      %c0_198 = arith.constant 0 : index
      %c0_199 = arith.constant 0 : index
      %331 = vector.load %arg18[%c0_198, %c0_199] : memref<8x128xf32, #tpu.memory_space<vmem>>, vector<8x128xf32>
      tpu.vector_store %arg18[%c0_198, %c0_199], %330 {strides = array<i32>} : memref<8x128xf32, #tpu.memory_space<vmem>>, vector<8x128xf32>,
      %c0_200 = arith.constant 0 : index
      %c0_201 = arith.constant 0 : index
      %332 = vector.load %arg3[%c0_200, %c0_201] : memref<32x1xf32, #tpu.memory_space<vmem>>, vector<32x1xf32>
      %c0_202 = arith.constant 0 : index
      %c0_203 = arith.constant 0 : index
      %333 = vector.load %arg2[%c0_202, %c0_203] : memref<32x75xf32, #tpu.memory_space<vmem>>, vector<32x75xf32>
      %c0_204 = arith.constant 0 : index
      %c0_205 = arith.constant 0 : index
      %334 = vector.load %arg1[%c0_204, %c0_205] : memref<75x512xf32, #tpu.memory_space<vmem>>, vector<75x512xf32>
      %cst_206 = arith.constant dense<0.000000e+00> : vector<32x512xf32>
      %335 = tpu.matmul %333, %334, %cst_206 {dimension_numbers = #tpu.dot_dimension_numbers<[1], [0], [0], [1], [0, 0, 1, 1], [], []>} : vector<32x75xf32>, vector<75x512xf32>, vector<32x512xf32> -> vector<32x512xf32>
      %336 = vector.broadcast %332 : vector<32x1xf32> to vector<32x512xf32>
      %337 = arith.addf %336, %335 : vector<32x512xf32>
      %c0_207 = arith.constant 0 : index
      %c0_208 = arith.constant 0 : index
      %338 = vector.load %arg14[%c0_207, %c0_208] : memref<32x512xf32, #tpu.memory_space<vmem>>, vector<32x512xf32>
      tpu.vector_store %arg14[%c0_207, %c0_208], %337 {strides = array<i32>} : memref<32x512xf32, #tpu.memory_space<vmem>>, vector<32x512xf32>,
    } else {
    }
    %c0 = arith.constant 0 : index
    %c0_1 = arith.constant 0 : index
    %3 = vector.load %arg15[%c0, %c0_1] : memref<8x512xf32, #tpu.memory_space<vmem>>, vector<8x512xf32>
    %c34_i32 = arith.constant 34 : i32
    %4 = tpu.dynamic_rotate %3 by %c34_i32 dim 1 : vector<8x512xf32>, i32 -> vector<8x512xf32>
    %c0_2 = arith.constant 0 : index
    %c0_3 = arith.constant 0 : index
    %5 = vector.load %arg5[%c0_2, %c0_3] : memref<25x512xf32, #tpu.memory_space<vmem>>, vector<1x512xf32>
    %6 = vector.broadcast %5 : vector<1x512xf32> to vector<8x512xf32>
    %7 = arith.mulf %4, %6 : vector<8x512xf32>
    %c0_4 = arith.constant 0 : index
    %c0_5 = arith.constant 0 : index
    %8 = vector.load %arg19[%c0_4, %c0_5] : memref<200x512xf32, #tpu.memory_space<vmem>>, vector<8x512xf32>
    tpu.vector_store %arg19[%c0_4, %c0_5], %7 {strides = array<i32>} : memref<200x512xf32, #tpu.memory_space<vmem>>, vector<8x512xf32>,
    %c33_i32 = arith.constant 33 : i32
    %9 = tpu.dynamic_rotate %3 by %c33_i32 dim 1 : vector<8x512xf32>, i32 -> vector<8x512xf32>
    %c1 = arith.constant 1 : index
    %c0_6 = arith.constant 0 : index
    %10 = vector.load %arg5[%c1, %c0_6] : memref<25x512xf32, #tpu.memory_space<vmem>>, vector<1x512xf32>
    %11 = vector.broadcast %10 : vector<1x512xf32> to vector<8x512xf32>
    %12 = arith.mulf %9, %11 : vector<8x512xf32>
    %c8 = arith.constant 8 : index
    %c0_7 = arith.constant 0 : index
    %13 = vector.load %arg19[%c8, %c0_7] : memref<200x512xf32, #tpu.memory_space<vmem>>, vector<8x512xf32>
    tpu.vector_store %arg19[%c8, %c0_7], %12 {strides = array<i32>} : memref<200x512xf32, #tpu.memory_space<vmem>>, vector<8x512xf32>,
    %c32_i32 = arith.constant 32 : i32
    %14 = tpu.dynamic_rotate %3 by %c32_i32 dim 1 : vector<8x512xf32>, i32 -> vector<8x512xf32>
    %c2 = arith.constant 2 : index
    %c0_8 = arith.constant 0 : index
    %15 = vector.load %arg5[%c2, %c0_8] : memref<25x512xf32, #tpu.memory_space<vmem>>, vector<1x512xf32>
    %16 = vector.broadcast %15 : vector<1x512xf32> to vector<8x512xf32>
    %17 = arith.mulf %14, %16 : vector<8x512xf32>
    %c16 = arith.constant 16 : index
    %c0_9 = arith.constant 0 : index
    %18 = vector.load %arg19[%c16, %c0_9] : memref<200x512xf32, #tpu.memory_space<vmem>>, vector<8x512xf32>
    tpu.vector_store %arg19[%c16, %c0_9], %17 {strides = array<i32>} : memref<200x512xf32, #tpu.memory_space<vmem>>, vector<8x512xf32>,
    %c31_i32 = arith.constant 31 : i32
    %19 = tpu.dynamic_rotate %3 by %c31_i32 dim 1 : vector<8x512xf32>, i32 -> vector<8x512xf32>
    %c3 = arith.constant 3 : index
    %c0_10 = arith.constant 0 : index
    %20 = vector.load %arg5[%c3, %c0_10] : memref<25x512xf32, #tpu.memory_space<vmem>>, vector<1x512xf32>
    %21 = vector.broadcast %20 : vector<1x512xf32> to vector<8x512xf32>
    %22 = arith.mulf %19, %21 : vector<8x512xf32>
    %c24 = arith.constant 24 : index
    %c0_11 = arith.constant 0 : index
    %23 = vector.load %arg19[%c24, %c0_11] : memref<200x512xf32, #tpu.memory_space<vmem>>, vector<8x512xf32>
    tpu.vector_store %arg19[%c24, %c0_11], %22 {strides = array<i32>} : memref<200x512xf32, #tpu.memory_space<vmem>>, vector<8x512xf32>,
    %c30_i32 = arith.constant 30 : i32
    %24 = tpu.dynamic_rotate %3 by %c30_i32 dim 1 : vector<8x512xf32>, i32 -> vector<8x512xf32>
    %c4 = arith.constant 4 : index
    %c0_12 = arith.constant 0 : index
    %25 = vector.load %arg5[%c4, %c0_12] : memref<25x512xf32, #tpu.memory_space<vmem>>, vector<1x512xf32>
    %26 = vector.broadcast %25 : vector<1x512xf32> to vector<8x512xf32>
    %27 = arith.mulf %24, %26 : vector<8x512xf32>
    %c32 = arith.constant 32 : index
    %c0_13 = arith.constant 0 : index
    %28 = vector.load %arg19[%c32, %c0_13] : memref<200x512xf32, #tpu.memory_space<vmem>>, vector<8x512xf32>
    tpu.vector_store %arg19[%c32, %c0_13], %27 {strides = array<i32>} : memref<200x512xf32, #tpu.memory_space<vmem>>, vector<8x512xf32>,
    %c18_i32 = arith.constant 18 : i32
    %29 = tpu.dynamic_rotate %3 by %c18_i32 dim 1 : vector<8x512xf32>, i32 -> vector<8x512xf32>
    %c5 = arith.constant 5 : index
    %c0_14 = arith.constant 0 : index
    %30 = vector.load %arg5[%c5, %c0_14] : memref<25x512xf32, #tpu.memory_space<vmem>>, vector<1x512xf32>
    %31 = vector.broadcast %30 : vector<1x512xf32> to vector<8x512xf32>
    %32 = arith.mulf %29, %31 : vector<8x512xf32>
    %c40 = arith.constant 40 : index
    %c0_15 = arith.constant 0 : index
    %33 = vector.load %arg19[%c40, %c0_15] : memref<200x512xf32, #tpu.memory_space<vmem>>, vector<8x512xf32>
    tpu.vector_store %arg19[%c40, %c0_15], %32 {strides = array<i32>} : memref<200x512xf32, #tpu.memory_space<vmem>>, vector<8x512xf32>,
    %c17_i32 = arith.constant 17 : i32
    %34 = tpu.dynamic_rotate %3 by %c17_i32 dim 1 : vector<8x512xf32>, i32 -> vector<8x512xf32>
    %c6 = arith.constant 6 : index
    %c0_16 = arith.constant 0 : index
    %35 = vector.load %arg5[%c6, %c0_16] : memref<25x512xf32, #tpu.memory_space<vmem>>, vector<1x512xf32>
    %36 = vector.broadcast %35 : vector<1x512xf32> to vector<8x512xf32>
    %37 = arith.mulf %34, %36 : vector<8x512xf32>
    %c48 = arith.constant 48 : index
    %c0_17 = arith.constant 0 : index
    %38 = vector.load %arg19[%c48, %c0_17] : memref<200x512xf32, #tpu.memory_space<vmem>>, vector<8x512xf32>
    tpu.vector_store %arg19[%c48, %c0_17], %37 {strides = array<i32>} : memref<200x512xf32, #tpu.memory_space<vmem>>, vector<8x512xf32>,
    %c16_i32 = arith.constant 16 : i32
    %39 = tpu.dynamic_rotate %3 by %c16_i32 dim 1 : vector<8x512xf32>, i32 -> vector<8x512xf32>
    %c7 = arith.constant 7 : index
    %c0_18 = arith.constant 0 : index
    %40 = vector.load %arg5[%c7, %c0_18] : memref<25x512xf32, #tpu.memory_space<vmem>>, vector<1x512xf32>
    %41 = vector.broadcast %40 : vector<1x512xf32> to vector<8x512xf32>
    %42 = arith.mulf %39, %41 : vector<8x512xf32>
    %c56 = arith.constant 56 : index
    %c0_19 = arith.constant 0 : index
    %43 = vector.load %arg19[%c56, %c0_19] : memref<200x512xf32, #tpu.memory_space<vmem>>, vector<8x512xf32>
    tpu.vector_store %arg19[%c56, %c0_19], %42 {strides = array<i32>} : memref<200x512xf32, #tpu.memory_space<vmem>>, vector<8x512xf32>,
    %c15_i32 = arith.constant 15 : i32
    %44 = tpu.dynamic_rotate %3 by %c15_i32 dim 1 : vector<8x512xf32>, i32 -> vector<8x512xf32>
    %c8_20 = arith.constant 8 : index
    %c0_21 = arith.constant 0 : index
    %45 = vector.load %arg5[%c8_20, %c0_21] : memref<25x512xf32, #tpu.memory_space<vmem>>, vector<1x512xf32>
    %46 = vector.broadcast %45 : vector<1x512xf32> to vector<8x512xf32>
    %47 = arith.mulf %44, %46 : vector<8x512xf32>
    %c64 = arith.constant 64 : index
    %c0_22 = arith.constant 0 : index
    %48 = vector.load %arg19[%c64, %c0_22] : memref<200x512xf32, #tpu.memory_space<vmem>>, vector<8x512xf32>
    tpu.vector_store %arg19[%c64, %c0_22], %47 {strides = array<i32>} : memref<200x512xf32, #tpu.memory_space<vmem>>, vector<8x512xf32>,
    %c14_i32 = arith.constant 14 : i32
    %49 = tpu.dynamic_rotate %3 by %c14_i32 dim 1 : vector<8x512xf32>, i32 -> vector<8x512xf32>
    %c9 = arith.constant 9 : index
    %c0_23 = arith.constant 0 : index
    %50 = vector.load %arg5[%c9, %c0_23] : memref<25x512xf32, #tpu.memory_space<vmem>>, vector<1x512xf32>
    %51 = vector.broadcast %50 : vector<1x512xf32> to vector<8x512xf32>
    %52 = arith.mulf %49, %51 : vector<8x512xf32>
    %c72 = arith.constant 72 : index
    %c0_24 = arith.constant 0 : index
    %53 = vector.load %arg19[%c72, %c0_24] : memref<200x512xf32, #tpu.memory_space<vmem>>, vector<8x512xf32>
    tpu.vector_store %arg19[%c72, %c0_24], %52 {strides = array<i32>} : memref<200x512xf32, #tpu.memory_space<vmem>>, vector<8x512xf32>,
    %c2_i32 = arith.constant 2 : i32
    %54 = tpu.dynamic_rotate %3 by %c2_i32 dim 1 : vector<8x512xf32>, i32 -> vector<8x512xf32>
    %c10 = arith.constant 10 : index
    %c0_25 = arith.constant 0 : index
    %55 = vector.load %arg5[%c10, %c0_25] : memref<25x512xf32, #tpu.memory_space<vmem>>, vector<1x512xf32>
    %56 = vector.broadcast %55 : vector<1x512xf32> to vector<8x512xf32>
    %57 = arith.mulf %54, %56 : vector<8x512xf32>
    %c80 = arith.constant 80 : index
    %c0_26 = arith.constant 0 : index
    %58 = vector.load %arg19[%c80, %c0_26] : memref<200x512xf32, #tpu.memory_space<vmem>>, vector<8x512xf32>
    tpu.vector_store %arg19[%c80, %c0_26], %57 {strides = array<i32>} : memref<200x512xf32, #tpu.memory_space<vmem>>, vector<8x512xf32>,
    %c1_i32 = arith.constant 1 : i32
    %59 = tpu.dynamic_rotate %3 by %c1_i32 dim 1 : vector<8x512xf32>, i32 -> vector<8x512xf32>
    %c11 = arith.constant 11 : index
    %c0_27 = arith.constant 0 : index
    %60 = vector.load %arg5[%c11, %c0_27] : memref<25x512xf32, #tpu.memory_space<vmem>>, vector<1x512xf32>
    %61 = vector.broadcast %60 : vector<1x512xf32> to vector<8x512xf32>
    %62 = arith.mulf %59, %61 : vector<8x512xf32>
    %c88 = arith.constant 88 : index
    %c0_28 = arith.constant 0 : index
    %63 = vector.load %arg19[%c88, %c0_28] : memref<200x512xf32, #tpu.memory_space<vmem>>, vector<8x512xf32>
    tpu.vector_store %arg19[%c88, %c0_28], %62 {strides = array<i32>} : memref<200x512xf32, #tpu.memory_space<vmem>>, vector<8x512xf32>,
    %c96 = arith.constant 96 : index
    %c0_29 = arith.constant 0 : index
    %64 = vector.load %arg19[%c96, %c0_29] : memref<200x512xf32, #tpu.memory_space<vmem>>, vector<8x512xf32>
    tpu.vector_store %arg19[%c96, %c0_29], %3 {strides = array<i32>} : memref<200x512xf32, #tpu.memory_space<vmem>>, vector<8x512xf32>,
    %c511_i32 = arith.constant 511 : i32
    %65 = tpu.dynamic_rotate %3 by %c511_i32 dim 1 : vector<8x512xf32>, i32 -> vector<8x512xf32>
    %c13 = arith.constant 13 : index
    %c0_30 = arith.constant 0 : index
    %66 = vector.load %arg5[%c13, %c0_30] : memref<25x512xf32, #tpu.memory_space<vmem>>, vector<1x512xf32>
    %67 = vector.broadcast %66 : vector<1x512xf32> to vector<8x512xf32>
    %68 = arith.mulf %65, %67 : vector<8x512xf32>
    %c104 = arith.constant 104 : index
    %c0_31 = arith.constant 0 : index
    %69 = vector.load %arg19[%c104, %c0_31] : memref<200x512xf32, #tpu.memory_space<vmem>>, vector<8x512xf32>
    tpu.vector_store %arg19[%c104, %c0_31], %68 {strides = array<i32>} : memref<200x512xf32, #tpu.memory_space<vmem>>, vector<8x512xf32>,
    %c510_i32 = arith.constant 510 : i32
    %70 = tpu.dynamic_rotate %3 by %c510_i32 dim 1 : vector<8x512xf32>, i32 -> vector<8x512xf32>
    %c14 = arith.constant 14 : index
    %c0_32 = arith.constant 0 : index
    %71 = vector.load %arg5[%c14, %c0_32] : memref<25x512xf32, #tpu.memory_space<vmem>>, vector<1x512xf32>
    %72 = vector.broadcast %71 : vector<1x512xf32> to vector<8x512xf32>
    %73 = arith.mulf %70, %72 : vector<8x512xf32>
    %c112 = arith.constant 112 : index
    %c0_33 = arith.constant 0 : index
    %74 = vector.load %arg19[%c112, %c0_33] : memref<200x512xf32, #tpu.memory_space<vmem>>, vector<8x512xf32>
    tpu.vector_store %arg19[%c112, %c0_33], %73 {strides = array<i32>} : memref<200x512xf32, #tpu.memory_space<vmem>>, vector<8x512xf32>,
    %c498_i32 = arith.constant 498 : i32
    %75 = tpu.dynamic_rotate %3 by %c498_i32 dim 1 : vector<8x512xf32>, i32 -> vector<8x512xf32>
    %c15 = arith.constant 15 : index
    %c0_34 = arith.constant 0 : index
    %76 = vector.load %arg5[%c15, %c0_34] : memref<25x512xf32, #tpu.memory_space<vmem>>, vector<1x512xf32>
    %77 = vector.broadcast %76 : vector<1x512xf32> to vector<8x512xf32>
    %78 = arith.mulf %75, %77 : vector<8x512xf32>
    %c120 = arith.constant 120 : index
    %c0_35 = arith.constant 0 : index
    %79 = vector.load %arg19[%c120, %c0_35] : memref<200x512xf32, #tpu.memory_space<vmem>>, vector<8x512xf32>
    tpu.vector_store %arg19[%c120, %c0_35], %78 {strides = array<i32>} : memref<200x512xf32, #tpu.memory_space<vmem>>, vector<8x512xf32>,
    %c497_i32 = arith.constant 497 : i32
    %80 = tpu.dynamic_rotate %3 by %c497_i32 dim 1 : vector<8x512xf32>, i32 -> vector<8x512xf32>
    %c16_36 = arith.constant 16 : index
    %c0_37 = arith.constant 0 : index
    %81 = vector.load %arg5[%c16_36, %c0_37] : memref<25x512xf32, #tpu.memory_space<vmem>>, vector<1x512xf32>
    %82 = vector.broadcast %81 : vector<1x512xf32> to vector<8x512xf32>
    %83 = arith.mulf %80, %82 : vector<8x512xf32>
    %c128 = arith.constant 128 : index
    %c0_38 = arith.constant 0 : index
    %84 = vector.load %arg19[%c128, %c0_38] : memref<200x512xf32, #tpu.memory_space<vmem>>, vector<8x512xf32>
    tpu.vector_store %arg19[%c128, %c0_38], %83 {strides = array<i32>} : memref<200x512xf32, #tpu.memory_space<vmem>>, vector<8x512xf32>,
    %c496_i32 = arith.constant 496 : i32
    %85 = tpu.dynamic_rotate %3 by %c496_i32 dim 1 : vector<8x512xf32>, i32 -> vector<8x512xf32>
    %c17 = arith.constant 17 : index
    %c0_39 = arith.constant 0 : index
    %86 = vector.load %arg5[%c17, %c0_39] : memref<25x512xf32, #tpu.memory_space<vmem>>, vector<1x512xf32>
    %87 = vector.broadcast %86 : vector<1x512xf32> to vector<8x512xf32>
    %88 = arith.mulf %85, %87 : vector<8x512xf32>
    %c136 = arith.constant 136 : index
    %c0_40 = arith.constant 0 : index
    %89 = vector.load %arg19[%c136, %c0_40] : memref<200x512xf32, #tpu.memory_space<vmem>>, vector<8x512xf32>
    tpu.vector_store %arg19[%c136, %c0_40], %88 {strides = array<i32>} : memref<200x512xf32, #tpu.memory_space<vmem>>, vector<8x512xf32>,
    %c495_i32 = arith.constant 495 : i32
    %90 = tpu.dynamic_rotate %3 by %c495_i32 dim 1 : vector<8x512xf32>, i32 -> vector<8x512xf32>
    %c18 = arith.constant 18 : index
    %c0_41 = arith.constant 0 : index
    %91 = vector.load %arg5[%c18, %c0_41] : memref<25x512xf32, #tpu.memory_space<vmem>>, vector<1x512xf32>
    %92 = vector.broadcast %91 : vector<1x512xf32> to vector<8x512xf32>
    %93 = arith.mulf %90, %92 : vector<8x512xf32>
    %c144 = arith.constant 144 : index
    %c0_42 = arith.constant 0 : index
    %94 = vector.load %arg19[%c144, %c0_42] : memref<200x512xf32, #tpu.memory_space<vmem>>, vector<8x512xf32>
    tpu.vector_store %arg19[%c144, %c0_42], %93 {strides = array<i32>} : memref<200x512xf32, #tpu.memory_space<vmem>>, vector<8x512xf32>,
    %c494_i32 = arith.constant 494 : i32
    %95 = tpu.dynamic_rotate %3 by %c494_i32 dim 1 : vector<8x512xf32>, i32 -> vector<8x512xf32>
    %c19 = arith.constant 19 : index
    %c0_43 = arith.constant 0 : index
    %96 = vector.load %arg5[%c19, %c0_43] : memref<25x512xf32, #tpu.memory_space<vmem>>, vector<1x512xf32>
    %97 = vector.broadcast %96 : vector<1x512xf32> to vector<8x512xf32>
    %98 = arith.mulf %95, %97 : vector<8x512xf32>
    %c152 = arith.constant 152 : index
    %c0_44 = arith.constant 0 : index
    %99 = vector.load %arg19[%c152, %c0_44] : memref<200x512xf32, #tpu.memory_space<vmem>>, vector<8x512xf32>
    tpu.vector_store %arg19[%c152, %c0_44], %98 {strides = array<i32>} : memref<200x512xf32, #tpu.memory_space<vmem>>, vector<8x512xf32>,
    %c482_i32 = arith.constant 482 : i32
    %100 = tpu.dynamic_rotate %3 by %c482_i32 dim 1 : vector<8x512xf32>, i32 -> vector<8x512xf32>
    %c20 = arith.constant 20 : index
    %c0_45 = arith.constant 0 : index
    %101 = vector.load %arg5[%c20, %c0_45] : memref<25x512xf32, #tpu.memory_space<vmem>>, vector<1x512xf32>
    %102 = vector.broadcast %101 : vector<1x512xf32> to vector<8x512xf32>
    %103 = arith.mulf %100, %102 : vector<8x512xf32>
    %c160 = arith.constant 160 : index
    %c0_46 = arith.constant 0 : index
    %104 = vector.load %arg19[%c160, %c0_46] : memref<200x512xf32, #tpu.memory_space<vmem>>, vector<8x512xf32>
    tpu.vector_store %arg19[%c160, %c0_46], %103 {strides = array<i32>} : memref<200x512xf32, #tpu.memory_space<vmem>>, vector<8x512xf32>,
    %c481_i32 = arith.constant 481 : i32
    %105 = tpu.dynamic_rotate %3 by %c481_i32 dim 1 : vector<8x512xf32>, i32 -> vector<8x512xf32>
    %c21 = arith.constant 21 : index
    %c0_47 = arith.constant 0 : index
    %106 = vector.load %arg5[%c21, %c0_47] : memref<25x512xf32, #tpu.memory_space<vmem>>, vector<1x512xf32>
    %107 = vector.broadcast %106 : vector<1x512xf32> to vector<8x512xf32>
    %108 = arith.mulf %105, %107 : vector<8x512xf32>
    %c168 = arith.constant 168 : index
    %c0_48 = arith.constant 0 : index
    %109 = vector.load %arg19[%c168, %c0_48] : memref<200x512xf32, #tpu.memory_space<vmem>>, vector<8x512xf32>
    tpu.vector_store %arg19[%c168, %c0_48], %108 {strides = array<i32>} : memref<200x512xf32, #tpu.memory_space<vmem>>, vector<8x512xf32>,
    %c480_i32 = arith.constant 480 : i32
    %110 = tpu.dynamic_rotate %3 by %c480_i32 dim 1 : vector<8x512xf32>, i32 -> vector<8x512xf32>
    %c22 = arith.constant 22 : index
    %c0_49 = arith.constant 0 : index
    %111 = vector.load %arg5[%c22, %c0_49] : memref<25x512xf32, #tpu.memory_space<vmem>>, vector<1x512xf32>
    %112 = vector.broadcast %111 : vector<1x512xf32> to vector<8x512xf32>
    %113 = arith.mulf %110, %112 : vector<8x512xf32>
    %c176 = arith.constant 176 : index
    %c0_50 = arith.constant 0 : index
    %114 = vector.load %arg19[%c176, %c0_50] : memref<200x512xf32, #tpu.memory_space<vmem>>, vector<8x512xf32>
    tpu.vector_store %arg19[%c176, %c0_50], %113 {strides = array<i32>} : memref<200x512xf32, #tpu.memory_space<vmem>>, vector<8x512xf32>,
    %c479_i32 = arith.constant 479 : i32
    %115 = tpu.dynamic_rotate %3 by %c479_i32 dim 1 : vector<8x512xf32>, i32 -> vector<8x512xf32>
    %c23 = arith.constant 23 : index
    %c0_51 = arith.constant 0 : index
    %116 = vector.load %arg5[%c23, %c0_51] : memref<25x512xf32, #tpu.memory_space<vmem>>, vector<1x512xf32>
    %117 = vector.broadcast %116 : vector<1x512xf32> to vector<8x512xf32>
    %118 = arith.mulf %115, %117 : vector<8x512xf32>
    %c184 = arith.constant 184 : index
    %c0_52 = arith.constant 0 : index
    %119 = vector.load %arg19[%c184, %c0_52] : memref<200x512xf32, #tpu.memory_space<vmem>>, vector<8x512xf32>
    tpu.vector_store %arg19[%c184, %c0_52], %118 {strides = array<i32>} : memref<200x512xf32, #tpu.memory_space<vmem>>, vector<8x512xf32>,
    %c478_i32 = arith.constant 478 : i32
    %120 = tpu.dynamic_rotate %3 by %c478_i32 dim 1 : vector<8x512xf32>, i32 -> vector<8x512xf32>
    %c24_53 = arith.constant 24 : index
    %c0_54 = arith.constant 0 : index
    %121 = vector.load %arg5[%c24_53, %c0_54] : memref<25x512xf32, #tpu.memory_space<vmem>>, vector<1x512xf32>
    %122 = vector.broadcast %121 : vector<1x512xf32> to vector<8x512xf32>
    %123 = arith.mulf %120, %122 : vector<8x512xf32>
    %c192 = arith.constant 192 : index
    %c0_55 = arith.constant 0 : index
    %124 = vector.load %arg19[%c192, %c0_55] : memref<200x512xf32, #tpu.memory_space<vmem>>, vector<8x512xf32>
    tpu.vector_store %arg19[%c192, %c0_55], %123 {strides = array<i32>} : memref<200x512xf32, #tpu.memory_space<vmem>>, vector<8x512xf32>,
    %c0_56 = arith.constant 0 : index
    %c0_57 = arith.constant 0 : index
    %125 = vector.load %arg14[%c0_56, %c0_57] : memref<32x512xf32, #tpu.memory_space<vmem>>, vector<32x512xf32>
    %c0_58 = arith.constant 0 : index
    %c0_59 = arith.constant 0 : index
    %126 = vector.load %arg4[%c0_58, %c0_59] : memref<32x200xf32, #tpu.memory_space<vmem>>, vector<32x200xf32>
    %c0_60 = arith.constant 0 : index
    %c0_61 = arith.constant 0 : index
    %127 = vector.load %arg19[%c0_60, %c0_61] : memref<200x512xf32, #tpu.memory_space<vmem>>, vector<200x512xf32>
    %cst = arith.constant dense<0.000000e+00> : vector<32x512xf32>
    %128 = tpu.matmul %126, %127, %cst {dimension_numbers = #tpu.dot_dimension_numbers<[1], [0], [0], [1], [0, 0, 1, 1], [], []>} : vector<32x200xf32>, vector<200x512xf32>, vector<32x512xf32> -> vector<32x512xf32>
    %129 = arith.addf %125, %128 : vector<32x512xf32>
    %130 = vector.extract_strided_slice %129 {offsets = [0, 0], sizes = [8, 512], strides = [1, 1]} : vector<32x512xf32> to vector<8x512xf32>
    %131 = arith.negf %130 : vector<8x512xf32>
    %132 = math.exp %131 : vector<8x512xf32>
    %cst_62 = arith.constant 1.000000e+00 : f32
    %133 = vector.broadcast %cst_62 : f32 to vector<8x512xf32>
    %134 = arith.addf %133, %132 : vector<8x512xf32>
    %135 = arith.divf %133, %134 : vector<8x512xf32>
    %136 = vector.extract_strided_slice %129 {offsets = [8, 0], sizes = [8, 512], strides = [1, 1]} : vector<32x512xf32> to vector<8x512xf32>
    %137 = arith.negf %136 : vector<8x512xf32>
    %138 = math.exp %137 : vector<8x512xf32>
    %cst_63 = arith.constant 1.000000e+00 : f32
    %139 = vector.broadcast %cst_63 : f32 to vector<8x512xf32>
    %140 = arith.addf %139, %138 : vector<8x512xf32>
    %141 = arith.divf %139, %140 : vector<8x512xf32>
    %142 = vector.extract_strided_slice %129 {offsets = [16, 0], sizes = [8, 512], strides = [1, 1]} : vector<32x512xf32> to vector<8x512xf32>
    %143 = math.tanh %142 : vector<8x512xf32>
    %144 = vector.extract_strided_slice %129 {offsets = [24, 0], sizes = [8, 512], strides = [1, 1]} : vector<32x512xf32> to vector<8x512xf32>
    %145 = arith.negf %144 : vector<8x512xf32>
    %146 = math.exp %145 : vector<8x512xf32>
    %cst_64 = arith.constant 1.000000e+00 : f32
    %147 = vector.broadcast %cst_64 : f32 to vector<8x512xf32>
    %148 = arith.addf %147, %146 : vector<8x512xf32>
    %149 = arith.divf %147, %148 : vector<8x512xf32>
    %c0_65 = arith.constant 0 : index
    %c0_66 = arith.constant 0 : index
    %150 = vector.load %arg16[%c0_65, %c0_66] : memref<8x512xf32, #tpu.memory_space<vmem>>, vector<8x512xf32>
    %151 = arith.mulf %141, %150 : vector<8x512xf32>
    %152 = arith.mulf %135, %143 : vector<8x512xf32>
    %153 = arith.addf %151, %152 : vector<8x512xf32>
    %c0_67 = arith.constant 0 : index
    %c0_68 = arith.constant 0 : index
    %154 = vector.load %arg16[%c0_67, %c0_68] : memref<8x512xf32, #tpu.memory_space<vmem>>, vector<8x512xf32>
    tpu.vector_store %arg16[%c0_67, %c0_68], %153 {strides = array<i32>} : memref<8x512xf32, #tpu.memory_space<vmem>>, vector<8x512xf32>,
    %155 = math.tanh %153 : vector<8x512xf32>
    %156 = arith.mulf %149, %155 : vector<8x512xf32>
    %c0_69 = arith.constant 0 : index
    %c0_70 = arith.constant 0 : index
    %157 = vector.load %arg15[%c0_69, %c0_70] : memref<8x512xf32, #tpu.memory_space<vmem>>, vector<8x512xf32>
    tpu.vector_store %arg15[%c0_69, %c0_70], %156 {strides = array<i32>} : memref<8x512xf32, #tpu.memory_space<vmem>>, vector<8x512xf32>,
    %c511_i32_71 = arith.constant 511 : i32
    %158 = tpu.dynamic_rotate %156 by %c511_i32_71 dim 1 : vector<8x512xf32>, i32 -> vector<8x512xf32>
    %159 = arith.maximumf %156, %158 : vector<8x512xf32>
    %c496_i32_72 = arith.constant 496 : i32
    %160 = tpu.dynamic_rotate %159 by %c496_i32_72 dim 1 : vector<8x512xf32>, i32 -> vector<8x512xf32>
    %161 = arith.maximumf %159, %160 : vector<8x512xf32>
    %c0_73 = arith.constant 0 : index
    %c0_74 = arith.constant 0 : index
    %162 = vector.load %arg6[%c0_73, %c0_74] : memref<512x128xf32, #tpu.memory_space<vmem>>, vector<512x128xf32>
    %cst_75 = arith.constant dense<0.000000e+00> : vector<8x128xf32>
    %163 = tpu.matmul %161, %162, %cst_75 {dimension_numbers = #tpu.dot_dimension_numbers<[1], [0], [0], [1], [0, 0, 1, 1], [], []>} : vector<8x512xf32>, vector<512x128xf32>, vector<8x128xf32> -> vector<8x128xf32>
    %c0_76 = arith.constant 0 : index
    %c0_77 = arith.constant 0 : index
    %164 = vector.load %arg17[%c0_76, %c0_77] : memref<8x128xf32, #tpu.memory_space<vmem>>, vector<8x128xf32>
    %165 = tpu.concatenate %163, %164 in 0 : vector<8x128xf32>, vector<8x128xf32> -> vector<16x128xf32>
    %c18_i32_78 = arith.constant 18 : i32
    %166 = tpu.dynamic_rotate %165 by %c18_i32_78 dim 1 : vector<16x128xf32>, i32 -> vector<16x128xf32>
    %c0_79 = arith.constant 0 : index
    %c0_80 = arith.constant 0 : index
    %167 = vector.load %arg9[%c0_79, %c0_80] : memref<25x128xf32, #tpu.memory_space<vmem>>, vector<1x128xf32>
    %168 = vector.broadcast %167 : vector<1x128xf32> to vector<16x128xf32>
    %169 = arith.mulf %166, %168 : vector<16x128xf32>
    %c0_81 = arith.constant 0 : index
    %c0_82 = arith.constant 0 : index
    %170 = vector.load %arg20[%c0_81, %c0_82] : memref<400x128xf32, #tpu.memory_space<vmem>>, vector<16x128xf32>
    tpu.vector_store %arg20[%c0_81, %c0_82], %169 {strides = array<i32>} : memref<400x128xf32, #tpu.memory_space<vmem>>, vector<16x128xf32>,
    %c17_i32_83 = arith.constant 17 : i32
    %171 = tpu.dynamic_rotate %165 by %c17_i32_83 dim 1 : vector<16x128xf32>, i32 -> vector<16x128xf32>
    %c1_84 = arith.constant 1 : index
    %c0_85 = arith.constant 0 : index
    %172 = vector.load %arg9[%c1_84, %c0_85] : memref<25x128xf32, #tpu.memory_space<vmem>>, vector<1x128xf32>
    %173 = vector.broadcast %172 : vector<1x128xf32> to vector<16x128xf32>
    %174 = arith.mulf %171, %173 : vector<16x128xf32>
    %c16_86 = arith.constant 16 : index
    %c0_87 = arith.constant 0 : index
    %175 = vector.load %arg20[%c16_86, %c0_87] : memref<400x128xf32, #tpu.memory_space<vmem>>, vector<16x128xf32>
    tpu.vector_store %arg20[%c16_86, %c0_87], %174 {strides = array<i32>} : memref<400x128xf32, #tpu.memory_space<vmem>>, vector<16x128xf32>,
    %c16_i32_88 = arith.constant 16 : i32
    %176 = tpu.dynamic_rotate %165 by %c16_i32_88 dim 1 : vector<16x128xf32>, i32 -> vector<16x128xf32>
    %c2_89 = arith.constant 2 : index
    %c0_90 = arith.constant 0 : index
    %177 = vector.load %arg9[%c2_89, %c0_90] : memref<25x128xf32, #tpu.memory_space<vmem>>, vector<1x128xf32>
    %178 = vector.broadcast %177 : vector<1x128xf32> to vector<16x128xf32>
    %179 = arith.mulf %176, %178 : vector<16x128xf32>
    %c32_91 = arith.constant 32 : index
    %c0_92 = arith.constant 0 : index
    %180 = vector.load %arg20[%c32_91, %c0_92] : memref<400x128xf32, #tpu.memory_space<vmem>>, vector<16x128xf32>
    tpu.vector_store %arg20[%c32_91, %c0_92], %179 {strides = array<i32>} : memref<400x128xf32, #tpu.memory_space<vmem>>, vector<16x128xf32>,
    %c15_i32_93 = arith.constant 15 : i32
    %181 = tpu.dynamic_rotate %165 by %c15_i32_93 dim 1 : vector<16x128xf32>, i32 -> vector<16x128xf32>
    %c3_94 = arith.constant 3 : index
    %c0_95 = arith.constant 0 : index
    %182 = vector.load %arg9[%c3_94, %c0_95] : memref<25x128xf32, #tpu.memory_space<vmem>>, vector<1x128xf32>
    %183 = vector.broadcast %182 : vector<1x128xf32> to vector<16x128xf32>
    %184 = arith.mulf %181, %183 : vector<16x128xf32>
    %c48_96 = arith.constant 48 : index
    %c0_97 = arith.constant 0 : index
    %185 = vector.load %arg20[%c48_96, %c0_97] : memref<400x128xf32, #tpu.memory_space<vmem>>, vector<16x128xf32>
    tpu.vector_store %arg20[%c48_96, %c0_97], %184 {strides = array<i32>} : memref<400x128xf32, #tpu.memory_space<vmem>>, vector<16x128xf32>,
    %c14_i32_98 = arith.constant 14 : i32
    %186 = tpu.dynamic_rotate %165 by %c14_i32_98 dim 1 : vector<16x128xf32>, i32 -> vector<16x128xf32>
    %c4_99 = arith.constant 4 : index
    %c0_100 = arith.constant 0 : index
    %187 = vector.load %arg9[%c4_99, %c0_100] : memref<25x128xf32, #tpu.memory_space<vmem>>, vector<1x128xf32>
    %188 = vector.broadcast %187 : vector<1x128xf32> to vector<16x128xf32>
    %189 = arith.mulf %186, %188 : vector<16x128xf32>
    %c64_101 = arith.constant 64 : index
    %c0_102 = arith.constant 0 : index
    %190 = vector.load %arg20[%c64_101, %c0_102] : memref<400x128xf32, #tpu.memory_space<vmem>>, vector<16x128xf32>
    tpu.vector_store %arg20[%c64_101, %c0_102], %189 {strides = array<i32>} : memref<400x128xf32, #tpu.memory_space<vmem>>, vector<16x128xf32>,
    %c10_i32 = arith.constant 10 : i32
    %191 = tpu.dynamic_rotate %165 by %c10_i32 dim 1 : vector<16x128xf32>, i32 -> vector<16x128xf32>
    %c5_103 = arith.constant 5 : index
    %c0_104 = arith.constant 0 : index
    %192 = vector.load %arg9[%c5_103, %c0_104] : memref<25x128xf32, #tpu.memory_space<vmem>>, vector<1x128xf32>
    %193 = vector.broadcast %192 : vector<1x128xf32> to vector<16x128xf32>
    %194 = arith.mulf %191, %193 : vector<16x128xf32>
    %c80_105 = arith.constant 80 : index
    %c0_106 = arith.constant 0 : index
    %195 = vector.load %arg20[%c80_105, %c0_106] : memref<400x128xf32, #tpu.memory_space<vmem>>, vector<16x128xf32>
    tpu.vector_store %arg20[%c80_105, %c0_106], %194 {strides = array<i32>} : memref<400x128xf32, #tpu.memory_space<vmem>>, vector<16x128xf32>,
    %c9_i32 = arith.constant 9 : i32
    %196 = tpu.dynamic_rotate %165 by %c9_i32 dim 1 : vector<16x128xf32>, i32 -> vector<16x128xf32>
    %c6_107 = arith.constant 6 : index
    %c0_108 = arith.constant 0 : index
    %197 = vector.load %arg9[%c6_107, %c0_108] : memref<25x128xf32, #tpu.memory_space<vmem>>, vector<1x128xf32>
    %198 = vector.broadcast %197 : vector<1x128xf32> to vector<16x128xf32>
    %199 = arith.mulf %196, %198 : vector<16x128xf32>
    %c96_109 = arith.constant 96 : index
    %c0_110 = arith.constant 0 : index
    %200 = vector.load %arg20[%c96_109, %c0_110] : memref<400x128xf32, #tpu.memory_space<vmem>>, vector<16x128xf32>
    tpu.vector_store %arg20[%c96_109, %c0_110], %199 {strides = array<i32>} : memref<400x128xf32, #tpu.memory_space<vmem>>, vector<16x128xf32>,
    %c8_i32 = arith.constant 8 : i32
    %201 = tpu.dynamic_rotate %165 by %c8_i32 dim 1 : vector<16x128xf32>, i32 -> vector<16x128xf32>
    %c7_111 = arith.constant 7 : index
    %c0_112 = arith.constant 0 : index
    %202 = vector.load %arg9[%c7_111, %c0_112] : memref<25x128xf32, #tpu.memory_space<vmem>>, vector<1x128xf32>
    %203 = vector.broadcast %202 : vector<1x128xf32> to vector<16x128xf32>
    %204 = arith.mulf %201, %203 : vector<16x128xf32>
    %c112_113 = arith.constant 112 : index
    %c0_114 = arith.constant 0 : index
    %205 = vector.load %arg20[%c112_113, %c0_114] : memref<400x128xf32, #tpu.memory_space<vmem>>, vector<16x128xf32>
    tpu.vector_store %arg20[%c112_113, %c0_114], %204 {strides = array<i32>} : memref<400x128xf32, #tpu.memory_space<vmem>>, vector<16x128xf32>,
    %c7_i32 = arith.constant 7 : i32
    %206 = tpu.dynamic_rotate %165 by %c7_i32 dim 1 : vector<16x128xf32>, i32 -> vector<16x128xf32>
    %c8_115 = arith.constant 8 : index
    %c0_116 = arith.constant 0 : index
    %207 = vector.load %arg9[%c8_115, %c0_116] : memref<25x128xf32, #tpu.memory_space<vmem>>, vector<1x128xf32>
    %208 = vector.broadcast %207 : vector<1x128xf32> to vector<16x128xf32>
    %209 = arith.mulf %206, %208 : vector<16x128xf32>
    %c128_117 = arith.constant 128 : index
    %c0_118 = arith.constant 0 : index
    %210 = vector.load %arg20[%c128_117, %c0_118] : memref<400x128xf32, #tpu.memory_space<vmem>>, vector<16x128xf32>
    tpu.vector_store %arg20[%c128_117, %c0_118], %209 {strides = array<i32>} : memref<400x128xf32, #tpu.memory_space<vmem>>, vector<16x128xf32>,
    %c6_i32 = arith.constant 6 : i32
    %211 = tpu.dynamic_rotate %165 by %c6_i32 dim 1 : vector<16x128xf32>, i32 -> vector<16x128xf32>
    %c9_119 = arith.constant 9 : index
    %c0_120 = arith.constant 0 : index
    %212 = vector.load %arg9[%c9_119, %c0_120] : memref<25x128xf32, #tpu.memory_space<vmem>>, vector<1x128xf32>
    %213 = vector.broadcast %212 : vector<1x128xf32> to vector<16x128xf32>
    %214 = arith.mulf %211, %213 : vector<16x128xf32>
    %c144_121 = arith.constant 144 : index
    %c0_122 = arith.constant 0 : index
    %215 = vector.load %arg20[%c144_121, %c0_122] : memref<400x128xf32, #tpu.memory_space<vmem>>, vector<16x128xf32>
    tpu.vector_store %arg20[%c144_121, %c0_122], %214 {strides = array<i32>} : memref<400x128xf32, #tpu.memory_space<vmem>>, vector<16x128xf32>,
    %c2_i32_123 = arith.constant 2 : i32
    %216 = tpu.dynamic_rotate %165 by %c2_i32_123 dim 1 : vector<16x128xf32>, i32 -> vector<16x128xf32>
    %c10_124 = arith.constant 10 : index
    %c0_125 = arith.constant 0 : index
    %217 = vector.load %arg9[%c10_124, %c0_125] : memref<25x128xf32, #tpu.memory_space<vmem>>, vector<1x128xf32>
    %218 = vector.broadcast %217 : vector<1x128xf32> to vector<16x128xf32>
    %219 = arith.mulf %216, %218 : vector<16x128xf32>
    %c160_126 = arith.constant 160 : index
    %c0_127 = arith.constant 0 : index
    %220 = vector.load %arg20[%c160_126, %c0_127] : memref<400x128xf32, #tpu.memory_space<vmem>>, vector<16x128xf32>
    tpu.vector_store %arg20[%c160_126, %c0_127], %219 {strides = array<i32>} : memref<400x128xf32, #tpu.memory_space<vmem>>, vector<16x128xf32>,
    %c1_i32_128 = arith.constant 1 : i32
    %221 = tpu.dynamic_rotate %165 by %c1_i32_128 dim 1 : vector<16x128xf32>, i32 -> vector<16x128xf32>
    %c11_129 = arith.constant 11 : index
    %c0_130 = arith.constant 0 : index
    %222 = vector.load %arg9[%c11_129, %c0_130] : memref<25x128xf32, #tpu.memory_space<vmem>>, vector<1x128xf32>
    %223 = vector.broadcast %222 : vector<1x128xf32> to vector<16x128xf32>
    %224 = arith.mulf %221, %223 : vector<16x128xf32>
    %c176_131 = arith.constant 176 : index
    %c0_132 = arith.constant 0 : index
    %225 = vector.load %arg20[%c176_131, %c0_132] : memref<400x128xf32, #tpu.memory_space<vmem>>, vector<16x128xf32>
    tpu.vector_store %arg20[%c176_131, %c0_132], %224 {strides = array<i32>} : memref<400x128xf32, #tpu.memory_space<vmem>>, vector<16x128xf32>,
    %c192_133 = arith.constant 192 : index
    %c0_134 = arith.constant 0 : index
    %226 = vector.load %arg20[%c192_133, %c0_134] : memref<400x128xf32, #tpu.memory_space<vmem>>, vector<16x128xf32>
    tpu.vector_store %arg20[%c192_133, %c0_134], %165 {strides = array<i32>} : memref<400x128xf32, #tpu.memory_space<vmem>>, vector<16x128xf32>,
    %c127_i32 = arith.constant 127 : i32
    %227 = tpu.dynamic_rotate %165 by %c127_i32 dim 1 : vector<16x128xf32>, i32 -> vector<16x128xf32>
    %c13_135 = arith.constant 13 : index
    %c0_136 = arith.constant 0 : index
    %228 = vector.load %arg9[%c13_135, %c0_136] : memref<25x128xf32, #tpu.memory_space<vmem>>, vector<1x128xf32>
    %229 = vector.broadcast %228 : vector<1x128xf32> to vector<16x128xf32>
    %230 = arith.mulf %227, %229 : vector<16x128xf32>
    %c208 = arith.constant 208 : index
    %c0_137 = arith.constant 0 : index
    %231 = vector.load %arg20[%c208, %c0_137] : memref<400x128xf32, #tpu.memory_space<vmem>>, vector<16x128xf32>
    tpu.vector_store %arg20[%c208, %c0_137], %230 {strides = array<i32>} : memref<400x128xf32, #tpu.memory_space<vmem>>, vector<16x128xf32>,
    %c126_i32 = arith.constant 126 : i32
    %232 = tpu.dynamic_rotate %165 by %c126_i32 dim 1 : vector<16x128xf32>, i32 -> vector<16x128xf32>
    %c14_138 = arith.constant 14 : index
    %c0_139 = arith.constant 0 : index
    %233 = vector.load %arg9[%c14_138, %c0_139] : memref<25x128xf32, #tpu.memory_space<vmem>>, vector<1x128xf32>
    %234 = vector.broadcast %233 : vector<1x128xf32> to vector<16x128xf32>
    %235 = arith.mulf %232, %234 : vector<16x128xf32>
    %c224 = arith.constant 224 : index
    %c0_140 = arith.constant 0 : index
    %236 = vector.load %arg20[%c224, %c0_140] : memref<400x128xf32, #tpu.memory_space<vmem>>, vector<16x128xf32>
    tpu.vector_store %arg20[%c224, %c0_140], %235 {strides = array<i32>} : memref<400x128xf32, #tpu.memory_space<vmem>>, vector<16x128xf32>,
    %c122_i32 = arith.constant 122 : i32
    %237 = tpu.dynamic_rotate %165 by %c122_i32 dim 1 : vector<16x128xf32>, i32 -> vector<16x128xf32>
    %c15_141 = arith.constant 15 : index
    %c0_142 = arith.constant 0 : index
    %238 = vector.load %arg9[%c15_141, %c0_142] : memref<25x128xf32, #tpu.memory_space<vmem>>, vector<1x128xf32>
    %239 = vector.broadcast %238 : vector<1x128xf32> to vector<16x128xf32>
    %240 = arith.mulf %237, %239 : vector<16x128xf32>
    %c240 = arith.constant 240 : index
    %c0_143 = arith.constant 0 : index
    %241 = vector.load %arg20[%c240, %c0_143] : memref<400x128xf32, #tpu.memory_space<vmem>>, vector<16x128xf32>
    tpu.vector_store %arg20[%c240, %c0_143], %240 {strides = array<i32>} : memref<400x128xf32, #tpu.memory_space<vmem>>, vector<16x128xf32>,
    %c121_i32 = arith.constant 121 : i32
    %242 = tpu.dynamic_rotate %165 by %c121_i32 dim 1 : vector<16x128xf32>, i32 -> vector<16x128xf32>
    %c16_144 = arith.constant 16 : index
    %c0_145 = arith.constant 0 : index
    %243 = vector.load %arg9[%c16_144, %c0_145] : memref<25x128xf32, #tpu.memory_space<vmem>>, vector<1x128xf32>
    %244 = vector.broadcast %243 : vector<1x128xf32> to vector<16x128xf32>
    %245 = arith.mulf %242, %244 : vector<16x128xf32>
    %c256 = arith.constant 256 : index
    %c0_146 = arith.constant 0 : index
    %246 = vector.load %arg20[%c256, %c0_146] : memref<400x128xf32, #tpu.memory_space<vmem>>, vector<16x128xf32>
    tpu.vector_store %arg20[%c256, %c0_146], %245 {strides = array<i32>} : memref<400x128xf32, #tpu.memory_space<vmem>>, vector<16x128xf32>,
    %c120_i32 = arith.constant 120 : i32
    %247 = tpu.dynamic_rotate %165 by %c120_i32 dim 1 : vector<16x128xf32>, i32 -> vector<16x128xf32>
    %c17_147 = arith.constant 17 : index
    %c0_148 = arith.constant 0 : index
    %248 = vector.load %arg9[%c17_147, %c0_148] : memref<25x128xf32, #tpu.memory_space<vmem>>, vector<1x128xf32>
    %249 = vector.broadcast %248 : vector<1x128xf32> to vector<16x128xf32>
    %250 = arith.mulf %247, %249 : vector<16x128xf32>
    %c272 = arith.constant 272 : index
    %c0_149 = arith.constant 0 : index
    %251 = vector.load %arg20[%c272, %c0_149] : memref<400x128xf32, #tpu.memory_space<vmem>>, vector<16x128xf32>
    tpu.vector_store %arg20[%c272, %c0_149], %250 {strides = array<i32>} : memref<400x128xf32, #tpu.memory_space<vmem>>, vector<16x128xf32>,
    %c119_i32 = arith.constant 119 : i32
    %252 = tpu.dynamic_rotate %165 by %c119_i32 dim 1 : vector<16x128xf32>, i32 -> vector<16x128xf32>
    %c18_150 = arith.constant 18 : index
    %c0_151 = arith.constant 0 : index
    %253 = vector.load %arg9[%c18_150, %c0_151] : memref<25x128xf32, #tpu.memory_space<vmem>>, vector<1x128xf32>
    %254 = vector.broadcast %253 : vector<1x128xf32> to vector<16x128xf32>
    %255 = arith.mulf %252, %254 : vector<16x128xf32>
    %c288 = arith.constant 288 : index
    %c0_152 = arith.constant 0 : index
    %256 = vector.load %arg20[%c288, %c0_152] : memref<400x128xf32, #tpu.memory_space<vmem>>, vector<16x128xf32>
    tpu.vector_store %arg20[%c288, %c0_152], %255 {strides = array<i32>} : memref<400x128xf32, #tpu.memory_space<vmem>>, vector<16x128xf32>,
    %c118_i32 = arith.constant 118 : i32
    %257 = tpu.dynamic_rotate %165 by %c118_i32 dim 1 : vector<16x128xf32>, i32 -> vector<16x128xf32>
    %c19_153 = arith.constant 19 : index
    %c0_154 = arith.constant 0 : index
    %258 = vector.load %arg9[%c19_153, %c0_154] : memref<25x128xf32, #tpu.memory_space<vmem>>, vector<1x128xf32>
    %259 = vector.broadcast %258 : vector<1x128xf32> to vector<16x128xf32>
    %260 = arith.mulf %257, %259 : vector<16x128xf32>
    %c304 = arith.constant 304 : index
    %c0_155 = arith.constant 0 : index
    %261 = vector.load %arg20[%c304, %c0_155] : memref<400x128xf32, #tpu.memory_space<vmem>>, vector<16x128xf32>
    tpu.vector_store %arg20[%c304, %c0_155], %260 {strides = array<i32>} : memref<400x128xf32, #tpu.memory_space<vmem>>, vector<16x128xf32>,
    %c114_i32 = arith.constant 114 : i32
    %262 = tpu.dynamic_rotate %165 by %c114_i32 dim 1 : vector<16x128xf32>, i32 -> vector<16x128xf32>
    %c20_156 = arith.constant 20 : index
    %c0_157 = arith.constant 0 : index
    %263 = vector.load %arg9[%c20_156, %c0_157] : memref<25x128xf32, #tpu.memory_space<vmem>>, vector<1x128xf32>
    %264 = vector.broadcast %263 : vector<1x128xf32> to vector<16x128xf32>
    %265 = arith.mulf %262, %264 : vector<16x128xf32>
    %c320 = arith.constant 320 : index
    %c0_158 = arith.constant 0 : index
    %266 = vector.load %arg20[%c320, %c0_158] : memref<400x128xf32, #tpu.memory_space<vmem>>, vector<16x128xf32>
    tpu.vector_store %arg20[%c320, %c0_158], %265 {strides = array<i32>} : memref<400x128xf32, #tpu.memory_space<vmem>>, vector<16x128xf32>,
    %c113_i32 = arith.constant 113 : i32
    %267 = tpu.dynamic_rotate %165 by %c113_i32 dim 1 : vector<16x128xf32>, i32 -> vector<16x128xf32>
    %c21_159 = arith.constant 21 : index
    %c0_160 = arith.constant 0 : index
    %268 = vector.load %arg9[%c21_159, %c0_160] : memref<25x128xf32, #tpu.memory_space<vmem>>, vector<1x128xf32>
    %269 = vector.broadcast %268 : vector<1x128xf32> to vector<16x128xf32>
    %270 = arith.mulf %267, %269 : vector<16x128xf32>
    %c336 = arith.constant 336 : index
    %c0_161 = arith.constant 0 : index
    %271 = vector.load %arg20[%c336, %c0_161] : memref<400x128xf32, #tpu.memory_space<vmem>>, vector<16x128xf32>
    tpu.vector_store %arg20[%c336, %c0_161], %270 {strides = array<i32>} : memref<400x128xf32, #tpu.memory_space<vmem>>, vector<16x128xf32>,
    %c112_i32 = arith.constant 112 : i32
    %272 = tpu.dynamic_rotate %165 by %c112_i32 dim 1 : vector<16x128xf32>, i32 -> vector<16x128xf32>
    %c22_162 = arith.constant 22 : index
    %c0_163 = arith.constant 0 : index
    %273 = vector.load %arg9[%c22_162, %c0_163] : memref<25x128xf32, #tpu.memory_space<vmem>>, vector<1x128xf32>
    %274 = vector.broadcast %273 : vector<1x128xf32> to vector<16x128xf32>
    %275 = arith.mulf %272, %274 : vector<16x128xf32>
    %c352 = arith.constant 352 : index
    %c0_164 = arith.constant 0 : index
    %276 = vector.load %arg20[%c352, %c0_164] : memref<400x128xf32, #tpu.memory_space<vmem>>, vector<16x128xf32>
    tpu.vector_store %arg20[%c352, %c0_164], %275 {strides = array<i32>} : memref<400x128xf32, #tpu.memory_space<vmem>>, vector<16x128xf32>,
    %c111_i32 = arith.constant 111 : i32
    %277 = tpu.dynamic_rotate %165 by %c111_i32 dim 1 : vector<16x128xf32>, i32 -> vector<16x128xf32>
    %c23_165 = arith.constant 23 : index
    %c0_166 = arith.constant 0 : index
    %278 = vector.load %arg9[%c23_165, %c0_166] : memref<25x128xf32, #tpu.memory_space<vmem>>, vector<1x128xf32>
    %279 = vector.broadcast %278 : vector<1x128xf32> to vector<16x128xf32>
    %280 = arith.mulf %277, %279 : vector<16x128xf32>
    %c368 = arith.constant 368 : index
    %c0_167 = arith.constant 0 : index
    %281 = vector.load %arg20[%c368, %c0_167] : memref<400x128xf32, #tpu.memory_space<vmem>>, vector<16x128xf32>
    tpu.vector_store %arg20[%c368, %c0_167], %280 {strides = array<i32>} : memref<400x128xf32, #tpu.memory_space<vmem>>, vector<16x128xf32>,
    %c110_i32 = arith.constant 110 : i32
    %282 = tpu.dynamic_rotate %165 by %c110_i32 dim 1 : vector<16x128xf32>, i32 -> vector<16x128xf32>
    %c24_168 = arith.constant 24 : index
    %c0_169 = arith.constant 0 : index
    %283 = vector.load %arg9[%c24_168, %c0_169] : memref<25x128xf32, #tpu.memory_space<vmem>>, vector<1x128xf32>
    %284 = vector.broadcast %283 : vector<1x128xf32> to vector<16x128xf32>
    %285 = arith.mulf %282, %284 : vector<16x128xf32>
    %c384 = arith.constant 384 : index
    %c0_170 = arith.constant 0 : index
    %286 = vector.load %arg20[%c384, %c0_170] : memref<400x128xf32, #tpu.memory_space<vmem>>, vector<16x128xf32>
    tpu.vector_store %arg20[%c384, %c0_170], %285 {strides = array<i32>} : memref<400x128xf32, #tpu.memory_space<vmem>>, vector<16x128xf32>,
    %c0_171 = arith.constant 0 : index
    %c0_172 = arith.constant 0 : index
    %287 = vector.load %arg8[%c0_171, %c0_172] : memref<32x1xf32, #tpu.memory_space<vmem>>, vector<32x1xf32>
    %c0_173 = arith.constant 0 : index
    %c0_174 = arith.constant 0 : index
    %288 = vector.load %arg7[%c0_173, %c0_174] : memref<32x400xf32, #tpu.memory_space<vmem>>, vector<32x400xf32>
    %c0_175 = arith.constant 0 : index
    %c0_176 = arith.constant 0 : index
    %289 = vector.load %arg20[%c0_175, %c0_176] : memref<400x128xf32, #tpu.memory_space<vmem>>, vector<400x128xf32>
    %cst_177 = arith.constant dense<0.000000e+00> : vector<32x128xf32>
    %290 = tpu.matmul %288, %289, %cst_177 {dimension_numbers = #tpu.dot_dimension_numbers<[1], [0], [0], [1], [0, 0, 1, 1], [], []>} : vector<32x400xf32>, vector<400x128xf32>, vector<32x128xf32> -> vector<32x128xf32>
    %291 = vector.broadcast %287 : vector<32x1xf32> to vector<32x128xf32>
    %292 = arith.addf %291, %290 : vector<32x128xf32>
    %293 = vector.extract_strided_slice %292 {offsets = [0, 0], sizes = [8, 128], strides = [1, 1]} : vector<32x128xf32> to vector<8x128xf32>
    %294 = arith.negf %293 : vector<8x128xf32>
    %295 = math.exp %294 : vector<8x128xf32>
    %cst_178 = arith.constant 1.000000e+00 : f32
    %296 = vector.broadcast %cst_178 : f32 to vector<8x128xf32>
    %297 = arith.addf %296, %295 : vector<8x128xf32>
    %298 = arith.divf %296, %297 : vector<8x128xf32>
    %299 = vector.extract_strided_slice %292 {offsets = [8, 0], sizes = [8, 128], strides = [1, 1]} : vector<32x128xf32> to vector<8x128xf32>
    %300 = arith.negf %299 : vector<8x128xf32>
    %301 = math.exp %300 : vector<8x128xf32>
    %cst_179 = arith.constant 1.000000e+00 : f32
    %302 = vector.broadcast %cst_179 : f32 to vector<8x128xf32>
    %303 = arith.addf %302, %301 : vector<8x128xf32>
    %304 = arith.divf %302, %303 : vector<8x128xf32>
    %305 = vector.extract_strided_slice %292 {offsets = [16, 0], sizes = [8, 128], strides = [1, 1]} : vector<32x128xf32> to vector<8x128xf32>
    %306 = math.tanh %305 : vector<8x128xf32>
    %307 = vector.extract_strided_slice %292 {offsets = [24, 0], sizes = [8, 128], strides = [1, 1]} : vector<32x128xf32> to vector<8x128xf32>
    %308 = arith.negf %307 : vector<8x128xf32>
    %309 = math.exp %308 : vector<8x128xf32>
    %cst_180 = arith.constant 1.000000e+00 : f32
    %310 = vector.broadcast %cst_180 : f32 to vector<8x128xf32>
    %311 = arith.addf %310, %309 : vector<8x128xf32>
    %312 = arith.divf %310, %311 : vector<8x128xf32>
    %c0_181 = arith.constant 0 : index
    %c0_182 = arith.constant 0 : index
    %313 = vector.load %arg18[%c0_181, %c0_182] : memref<8x128xf32, #tpu.memory_space<vmem>>, vector<8x128xf32>
    %314 = arith.mulf %304, %313 : vector<8x128xf32>
    %315 = arith.mulf %298, %306 : vector<8x128xf32>
    %316 = arith.addf %314, %315 : vector<8x128xf32>
    %c0_183 = arith.constant 0 : index
    %c0_184 = arith.constant 0 : index
    %317 = vector.load %arg18[%c0_183, %c0_184] : memref<8x128xf32, #tpu.memory_space<vmem>>, vector<8x128xf32>
    tpu.vector_store %arg18[%c0_183, %c0_184], %316 {strides = array<i32>} : memref<8x128xf32, #tpu.memory_space<vmem>>, vector<8x128xf32>,
    %318 = math.tanh %316 : vector<8x128xf32>
    %319 = arith.mulf %312, %318 : vector<8x128xf32>
    %c0_185 = arith.constant 0 : index
    %c0_186 = arith.constant 0 : index
    %320 = vector.load %arg17[%c0_185, %c0_186] : memref<8x128xf32, #tpu.memory_space<vmem>>, vector<8x128xf32>
    tpu.vector_store %arg17[%c0_185, %c0_186], %319 {strides = array<i32>} : memref<8x128xf32, #tpu.memory_space<vmem>>, vector<8x128xf32>,
    %c3_i32 = arith.constant 3 : i32
    %321 = arith.cmpi eq, %arg0, %c3_i32 : i32
    %322 = arith.extui %321 : i1 to i32
    %c0_i32_187 = arith.constant 0 : i32
    %323 = arith.cmpi ne, %322, %c0_i32_187 : i32
    scf.if %323 {
      %c127_i32_188 = arith.constant 127 : i32
      %324 = tpu.dynamic_rotate %319 by %c127_i32_188 dim 1 : vector<8x128xf32>, i32 -> vector<8x128xf32>
      %325 = arith.maximumf %319, %324 : vector<8x128xf32>
      %c120_i32_189 = arith.constant 120 : i32
      %326 = tpu.dynamic_rotate %325 by %c120_i32_189 dim 1 : vector<8x128xf32>, i32 -> vector<8x128xf32>
      %327 = arith.maximumf %325, %326 : vector<8x128xf32>
      %c0_190 = arith.constant 0 : index
      %c0_191 = arith.constant 0 : index
      %c0_192 = arith.constant 0 : index
      %328 = vector.load %arg10[%c0_190, %c0_191, %c0_192] : memref<2x128x16xf32, #tpu.memory_space<vmem>>, vector<1x128x16xf32>
      %329 = vector.shape_cast %328 : vector<1x128x16xf32> to vector<128x16xf32>
      %cst_193 = arith.constant dense<0.000000e+00> : vector<8x16xf32>
      %330 = tpu.matmul %327, %329, %cst_193 {dimension_numbers = #tpu.dot_dimension_numbers<[1], [0], [0], [1], [0, 0, 1, 1], [], []>} : vector<8x128xf32>, vector<128x16xf32>, vector<8x16xf32> -> vector<8x16xf32>
      %c0_194 = arith.constant 0 : index
      %c0_195 = arith.constant 0 : index
      %331 = vector.load %arg12[%c0_194, %c0_195] : memref<1x128xf32, #tpu.memory_space<vmem>>, vector<1x128xf32>
      %332 = vector.extract_strided_slice %330 {offsets = [0, 0], sizes = [1, 16], strides = [1, 1]} : vector<8x16xf32> to vector<1x16xf32>
      %c0_196 = arith.constant 0 : index
      %c0_197 = arith.constant 0 : index
      %c0_198 = arith.constant 0 : index
      %333 = vector.load %arg11[%c0_196, %c0_197, %c0_198] : memref<8x16x128xf32, #tpu.memory_space<vmem>>, vector<1x16x128xf32>
      %334 = vector.shape_cast %333 : vector<1x16x128xf32> to vector<16x128xf32>
      %cst_199 = arith.constant dense<0.000000e+00> : vector<1x128xf32>
      %335 = tpu.matmul %332, %334, %cst_199 {dimension_numbers = #tpu.dot_dimension_numbers<[1], [0], [0], [1], [0, 0, 1, 1], [], []>} : vector<1x16xf32>, vector<16x128xf32>, vector<1x128xf32> -> vector<1x128xf32>
      %336 = arith.addf %331, %335 : vector<1x128xf32>
      %337 = vector.extract_strided_slice %330 {offsets = [1, 0], sizes = [1, 16], strides = [1, 1]} : vector<8x16xf32> to vector<1x16xf32>
      %c1_200 = arith.constant 1 : index
      %c0_201 = arith.constant 0 : index
      %c0_202 = arith.constant 0 : index
      %338 = vector.load %arg11[%c1_200, %c0_201, %c0_202] : memref<8x16x128xf32, #tpu.memory_space<vmem>>, vector<1x16x128xf32>
      %339 = vector.shape_cast %338 : vector<1x16x128xf32> to vector<16x128xf32>
      %cst_203 = arith.constant dense<0.000000e+00> : vector<1x128xf32>
      %340 = tpu.matmul %337, %339, %cst_203 {dimension_numbers = #tpu.dot_dimension_numbers<[1], [0], [0], [1], [0, 0, 1, 1], [], []>} : vector<1x16xf32>, vector<16x128xf32>, vector<1x128xf32> -> vector<1x128xf32>
      %341 = arith.addf %336, %340 : vector<1x128xf32>
      %342 = vector.extract_strided_slice %330 {offsets = [2, 0], sizes = [1, 16], strides = [1, 1]} : vector<8x16xf32> to vector<1x16xf32>
      %c2_204 = arith.constant 2 : index
      %c0_205 = arith.constant 0 : index
      %c0_206 = arith.constant 0 : index
      %343 = vector.load %arg11[%c2_204, %c0_205, %c0_206] : memref<8x16x128xf32, #tpu.memory_space<vmem>>, vector<1x16x128xf32>
      %344 = vector.shape_cast %343 : vector<1x16x128xf32> to vector<16x128xf32>
      %cst_207 = arith.constant dense<0.000000e+00> : vector<1x128xf32>
      %345 = tpu.matmul %342, %344, %cst_207 {dimension_numbers = #tpu.dot_dimension_numbers<[1], [0], [0], [1], [0, 0, 1, 1], [], []>} : vector<1x16xf32>, vector<16x128xf32>, vector<1x128xf32> -> vector<1x128xf32>
      %346 = arith.addf %341, %345 : vector<1x128xf32>
      %347 = vector.extract_strided_slice %330 {offsets = [3, 0], sizes = [1, 16], strides = [1, 1]} : vector<8x16xf32> to vector<1x16xf32>
      %c3_208 = arith.constant 3 : index
      %c0_209 = arith.constant 0 : index
      %c0_210 = arith.constant 0 : index
      %348 = vector.load %arg11[%c3_208, %c0_209, %c0_210] : memref<8x16x128xf32, #tpu.memory_space<vmem>>, vector<1x16x128xf32>
      %349 = vector.shape_cast %348 : vector<1x16x128xf32> to vector<16x128xf32>
      %cst_211 = arith.constant dense<0.000000e+00> : vector<1x128xf32>
      %350 = tpu.matmul %347, %349, %cst_211 {dimension_numbers = #tpu.dot_dimension_numbers<[1], [0], [0], [1], [0, 0, 1, 1], [], []>} : vector<1x16xf32>, vector<16x128xf32>, vector<1x128xf32> -> vector<1x128xf32>
      %351 = arith.addf %346, %350 : vector<1x128xf32>
      %352 = vector.extract_strided_slice %330 {offsets = [4, 0], sizes = [1, 16], strides = [1, 1]} : vector<8x16xf32> to vector<1x16xf32>
      %c4_212 = arith.constant 4 : index
      %c0_213 = arith.constant 0 : index
      %c0_214 = arith.constant 0 : index
      %353 = vector.load %arg11[%c4_212, %c0_213, %c0_214] : memref<8x16x128xf32, #tpu.memory_space<vmem>>, vector<1x16x128xf32>
      %354 = vector.shape_cast %353 : vector<1x16x128xf32> to vector<16x128xf32>
      %cst_215 = arith.constant dense<0.000000e+00> : vector<1x128xf32>
      %355 = tpu.matmul %352, %354, %cst_215 {dimension_numbers = #tpu.dot_dimension_numbers<[1], [0], [0], [1], [0, 0, 1, 1], [], []>} : vector<1x16xf32>, vector<16x128xf32>, vector<1x128xf32> -> vector<1x128xf32>
      %356 = arith.addf %351, %355 : vector<1x128xf32>
      %357 = vector.extract_strided_slice %330 {offsets = [5, 0], sizes = [1, 16], strides = [1, 1]} : vector<8x16xf32> to vector<1x16xf32>
      %c5_216 = arith.constant 5 : index
      %c0_217 = arith.constant 0 : index
      %c0_218 = arith.constant 0 : index
      %358 = vector.load %arg11[%c5_216, %c0_217, %c0_218] : memref<8x16x128xf32, #tpu.memory_space<vmem>>, vector<1x16x128xf32>
      %359 = vector.shape_cast %358 : vector<1x16x128xf32> to vector<16x128xf32>
      %cst_219 = arith.constant dense<0.000000e+00> : vector<1x128xf32>
      %360 = tpu.matmul %357, %359, %cst_219 {dimension_numbers = #tpu.dot_dimension_numbers<[1], [0], [0], [1], [0, 0, 1, 1], [], []>} : vector<1x16xf32>, vector<16x128xf32>, vector<1x128xf32> -> vector<1x128xf32>
      %361 = arith.addf %356, %360 : vector<1x128xf32>
      %362 = vector.extract_strided_slice %330 {offsets = [6, 0], sizes = [1, 16], strides = [1, 1]} : vector<8x16xf32> to vector<1x16xf32>
      %c6_220 = arith.constant 6 : index
      %c0_221 = arith.constant 0 : index
      %c0_222 = arith.constant 0 : index
      %363 = vector.load %arg11[%c6_220, %c0_221, %c0_222] : memref<8x16x128xf32, #tpu.memory_space<vmem>>, vector<1x16x128xf32>
      %364 = vector.shape_cast %363 : vector<1x16x128xf32> to vector<16x128xf32>
      %cst_223 = arith.constant dense<0.000000e+00> : vector<1x128xf32>
      %365 = tpu.matmul %362, %364, %cst_223 {dimension_numbers = #tpu.dot_dimension_numbers<[1], [0], [0], [1], [0, 0, 1, 1], [], []>} : vector<1x16xf32>, vector<16x128xf32>, vector<1x128xf32> -> vector<1x128xf32>
      %366 = arith.addf %361, %365 : vector<1x128xf32>
      %367 = vector.extract_strided_slice %330 {offsets = [7, 0], sizes = [1, 16], strides = [1, 1]} : vector<8x16xf32> to vector<1x16xf32>
      %c7_224 = arith.constant 7 : index
      %c0_225 = arith.constant 0 : index
      %c0_226 = arith.constant 0 : index
      %368 = vector.load %arg11[%c7_224, %c0_225, %c0_226] : memref<8x16x128xf32, #tpu.memory_space<vmem>>, vector<1x16x128xf32>
      %369 = vector.shape_cast %368 : vector<1x16x128xf32> to vector<16x128xf32>
      %cst_227 = arith.constant dense<0.000000e+00> : vector<1x128xf32>
      %370 = tpu.matmul %367, %369, %cst_227 {dimension_numbers = #tpu.dot_dimension_numbers<[1], [0], [0], [1], [0, 0, 1, 1], [], []>} : vector<1x16xf32>, vector<16x128xf32>, vector<1x128xf32> -> vector<1x128xf32>
      %371 = arith.addf %366, %370 : vector<1x128xf32>
      %c0_228 = arith.constant 0 : index
      %c0_229 = arith.constant 0 : index
      %372 = vector.load %arg13[%c0_228, %c0_229] : memref<2x128xf32, #tpu.memory_space<vmem>>, vector<1x128xf32>
      tpu.vector_store %arg13[%c0_228, %c0_229], %371 {strides = array<i32>} : memref<2x128xf32, #tpu.memory_space<vmem>>, vector<1x128xf32>,
      %c1_230 = arith.constant 1 : index
      %c0_231 = arith.constant 0 : index
      %c0_232 = arith.constant 0 : index
      %373 = vector.load %arg10[%c1_230, %c0_231, %c0_232] : memref<2x128x16xf32, #tpu.memory_space<vmem>>, vector<1x128x16xf32>
      %374 = vector.shape_cast %373 : vector<1x128x16xf32> to vector<128x16xf32>
      %cst_233 = arith.constant dense<0.000000e+00> : vector<8x16xf32>
      %375 = tpu.matmul %327, %374, %cst_233 {dimension_numbers = #tpu.dot_dimension_numbers<[1], [0], [0], [1], [0, 0, 1, 1], [], []>} : vector<8x128xf32>, vector<128x16xf32>, vector<8x16xf32> -> vector<8x16xf32>
      %c0_234 = arith.constant 0 : index
      %c0_235 = arith.constant 0 : index
      %376 = vector.load %arg12[%c0_234, %c0_235] : memref<1x128xf32, #tpu.memory_space<vmem>>, vector<1x128xf32>
      %377 = vector.extract_strided_slice %375 {offsets = [0, 0], sizes = [1, 16], strides = [1, 1]} : vector<8x16xf32> to vector<1x16xf32>
      %c0_236 = arith.constant 0 : index
      %c0_237 = arith.constant 0 : index
      %c0_238 = arith.constant 0 : index
      %378 = vector.load %arg11[%c0_236, %c0_237, %c0_238] : memref<8x16x128xf32, #tpu.memory_space<vmem>>, vector<1x16x128xf32>
      %379 = vector.shape_cast %378 : vector<1x16x128xf32> to vector<16x128xf32>
      %cst_239 = arith.constant dense<0.000000e+00> : vector<1x128xf32>
      %380 = tpu.matmul %377, %379, %cst_239 {dimension_numbers = #tpu.dot_dimension_numbers<[1], [0], [0], [1], [0, 0, 1, 1], [], []>} : vector<1x16xf32>, vector<16x128xf32>, vector<1x128xf32> -> vector<1x128xf32>
      %381 = arith.addf %376, %380 : vector<1x128xf32>
      %382 = vector.extract_strided_slice %375 {offsets = [1, 0], sizes = [1, 16], strides = [1, 1]} : vector<8x16xf32> to vector<1x16xf32>
      %c1_240 = arith.constant 1 : index
      %c0_241 = arith.constant 0 : index
      %c0_242 = arith.constant 0 : index
      %383 = vector.load %arg11[%c1_240, %c0_241, %c0_242] : memref<8x16x128xf32, #tpu.memory_space<vmem>>, vector<1x16x128xf32>
      %384 = vector.shape_cast %383 : vector<1x16x128xf32> to vector<16x128xf32>
      %cst_243 = arith.constant dense<0.000000e+00> : vector<1x128xf32>
      %385 = tpu.matmul %382, %384, %cst_243 {dimension_numbers = #tpu.dot_dimension_numbers<[1], [0], [0], [1], [0, 0, 1, 1], [], []>} : vector<1x16xf32>, vector<16x128xf32>, vector<1x128xf32> -> vector<1x128xf32>
      %386 = arith.addf %381, %385 : vector<1x128xf32>
      %387 = vector.extract_strided_slice %375 {offsets = [2, 0], sizes = [1, 16], strides = [1, 1]} : vector<8x16xf32> to vector<1x16xf32>
      %c2_244 = arith.constant 2 : index
      %c0_245 = arith.constant 0 : index
      %c0_246 = arith.constant 0 : index
      %388 = vector.load %arg11[%c2_244, %c0_245, %c0_246] : memref<8x16x128xf32, #tpu.memory_space<vmem>>, vector<1x16x128xf32>
      %389 = vector.shape_cast %388 : vector<1x16x128xf32> to vector<16x128xf32>
      %cst_247 = arith.constant dense<0.000000e+00> : vector<1x128xf32>
      %390 = tpu.matmul %387, %389, %cst_247 {dimension_numbers = #tpu.dot_dimension_numbers<[1], [0], [0], [1], [0, 0, 1, 1], [], []>} : vector<1x16xf32>, vector<16x128xf32>, vector<1x128xf32> -> vector<1x128xf32>
      %391 = arith.addf %386, %390 : vector<1x128xf32>
      %392 = vector.extract_strided_slice %375 {offsets = [3, 0], sizes = [1, 16], strides = [1, 1]} : vector<8x16xf32> to vector<1x16xf32>
      %c3_248 = arith.constant 3 : index
      %c0_249 = arith.constant 0 : index
      %c0_250 = arith.constant 0 : index
      %393 = vector.load %arg11[%c3_248, %c0_249, %c0_250] : memref<8x16x128xf32, #tpu.memory_space<vmem>>, vector<1x16x128xf32>
      %394 = vector.shape_cast %393 : vector<1x16x128xf32> to vector<16x128xf32>
      %cst_251 = arith.constant dense<0.000000e+00> : vector<1x128xf32>
      %395 = tpu.matmul %392, %394, %cst_251 {dimension_numbers = #tpu.dot_dimension_numbers<[1], [0], [0], [1], [0, 0, 1, 1], [], []>} : vector<1x16xf32>, vector<16x128xf32>, vector<1x128xf32> -> vector<1x128xf32>
      %396 = arith.addf %391, %395 : vector<1x128xf32>
      %397 = vector.extract_strided_slice %375 {offsets = [4, 0], sizes = [1, 16], strides = [1, 1]} : vector<8x16xf32> to vector<1x16xf32>
      %c4_252 = arith.constant 4 : index
      %c0_253 = arith.constant 0 : index
      %c0_254 = arith.constant 0 : index
      %398 = vector.load %arg11[%c4_252, %c0_253, %c0_254] : memref<8x16x128xf32, #tpu.memory_space<vmem>>, vector<1x16x128xf32>
      %399 = vector.shape_cast %398 : vector<1x16x128xf32> to vector<16x128xf32>
      %cst_255 = arith.constant dense<0.000000e+00> : vector<1x128xf32>
      %400 = tpu.matmul %397, %399, %cst_255 {dimension_numbers = #tpu.dot_dimension_numbers<[1], [0], [0], [1], [0, 0, 1, 1], [], []>} : vector<1x16xf32>, vector<16x128xf32>, vector<1x128xf32> -> vector<1x128xf32>
      %401 = arith.addf %396, %400 : vector<1x128xf32>
      %402 = vector.extract_strided_slice %375 {offsets = [5, 0], sizes = [1, 16], strides = [1, 1]} : vector<8x16xf32> to vector<1x16xf32>
      %c5_256 = arith.constant 5 : index
      %c0_257 = arith.constant 0 : index
      %c0_258 = arith.constant 0 : index
      %403 = vector.load %arg11[%c5_256, %c0_257, %c0_258] : memref<8x16x128xf32, #tpu.memory_space<vmem>>, vector<1x16x128xf32>
      %404 = vector.shape_cast %403 : vector<1x16x128xf32> to vector<16x128xf32>
      %cst_259 = arith.constant dense<0.000000e+00> : vector<1x128xf32>
      %405 = tpu.matmul %402, %404, %cst_259 {dimension_numbers = #tpu.dot_dimension_numbers<[1], [0], [0], [1], [0, 0, 1, 1], [], []>} : vector<1x16xf32>, vector<16x128xf32>, vector<1x128xf32> -> vector<1x128xf32>
      %406 = arith.addf %401, %405 : vector<1x128xf32>
      %407 = vector.extract_strided_slice %375 {offsets = [6, 0], sizes = [1, 16], strides = [1, 1]} : vector<8x16xf32> to vector<1x16xf32>
      %c6_260 = arith.constant 6 : index
      %c0_261 = arith.constant 0 : index
      %c0_262 = arith.constant 0 : index
      %408 = vector.load %arg11[%c6_260, %c0_261, %c0_262] : memref<8x16x128xf32, #tpu.memory_space<vmem>>, vector<1x16x128xf32>
      %409 = vector.shape_cast %408 : vector<1x16x128xf32> to vector<16x128xf32>
      %cst_263 = arith.constant dense<0.000000e+00> : vector<1x128xf32>
      %410 = tpu.matmul %407, %409, %cst_263 {dimension_numbers = #tpu.dot_dimension_numbers<[1], [0], [0], [1], [0, 0, 1, 1], [], []>} : vector<1x16xf32>, vector<16x128xf32>, vector<1x128xf32> -> vector<1x128xf32>
      %411 = arith.addf %406, %410 : vector<1x128xf32>
      %412 = vector.extract_strided_slice %375 {offsets = [7, 0], sizes = [1, 16], strides = [1, 1]} : vector<8x16xf32> to vector<1x16xf32>
      %c7_264 = arith.constant 7 : index
      %c0_265 = arith.constant 0 : index
      %c0_266 = arith.constant 0 : index
      %413 = vector.load %arg11[%c7_264, %c0_265, %c0_266] : memref<8x16x128xf32, #tpu.memory_space<vmem>>, vector<1x16x128xf32>
      %414 = vector.shape_cast %413 : vector<1x16x128xf32> to vector<16x128xf32>
      %cst_267 = arith.constant dense<0.000000e+00> : vector<1x128xf32>
      %415 = tpu.matmul %412, %414, %cst_267 {dimension_numbers = #tpu.dot_dimension_numbers<[1], [0], [0], [1], [0, 0, 1, 1], [], []>} : vector<1x16xf32>, vector<16x128xf32>, vector<1x128xf32> -> vector<1x128xf32>
      %416 = arith.addf %411, %415 : vector<1x128xf32>
      %c1_268 = arith.constant 1 : index
      %c0_269 = arith.constant 0 : index
      %417 = vector.load %arg13[%c1_268, %c0_269] : memref<2x128xf32, #tpu.memory_space<vmem>>, vector<1x128xf32>
      tpu.vector_store %arg13[%c1_268, %c0_269], %416 {strides = array<i32>} : memref<2x128xf32, #tpu.memory_space<vmem>>, vector<1x128xf32>,
    } else {
    }
    return
  }
  func.func @transform_0(%arg0: i32) -> (i32, i32) {
    %c0_i32 = arith.constant 0 : i32
    %c0_i32_0 = arith.constant 0 : i32
    %c0_i32_1 = arith.constant 0 : i32
    return %c0_i32, %c0_i32_0 : i32, i32
  }
  func.func @transform_1(%arg0: i32) -> (i32, i32) {
    %c0_i32 = arith.constant 0 : i32
    %c0_i32_0 = arith.constant 0 : i32
    %c0_i32_1 = arith.constant 0 : i32
    return %c0_i32, %c0_i32_0 : i32, i32
  }
  func.func @transform_2(%arg0: i32) -> (i32, i32) {
    %c0_i32 = arith.constant 0 : i32
    %c0_i32_0 = arith.constant 0 : i32
    %c0_i32_1 = arith.constant 0 : i32
    return %c0_i32, %c0_i32_0 : i32, i32
  }
  func.func @transform_3(%arg0: i32) -> (i32, i32) {
    %c0_i32 = arith.constant 0 : i32
    %c0_i32_0 = arith.constant 0 : i32
    %c0_i32_1 = arith.constant 0 : i32
    return %c0_i32, %c0_i32_0 : i32, i32
  }
  func.func @transform_4(%arg0: i32) -> (i32, i32) {
    %c0_i32 = arith.constant 0 : i32
    %c0_i32_0 = arith.constant 0 : i32
    %c0_i32_1 = arith.constant 0 : i32
    return %c0_i32, %c0_i32_0 : i32, i32
  }
  func.func @transform_5(%arg0: i32) -> (i32, i32) {
    %c0_i32 = arith.constant 0 : i32
    %c0_i32_0 = arith.constant 0 : i32
    %c0_i32_1 = arith.constant 0 : i32
    return %c0_i32, %c0_i32_0 : i32, i32
  }
  func.func @transform_6(%arg0: i32) -> (i32, i32) {
    %c0_i32 = arith.constant 0 : i32
    %c0_i32_0 = arith.constant 0 : i32
    %c0_i32_1 = arith.constant 0 : i32
    return %c0_i32, %c0_i32_0 : i32, i32
  }
  func.func @transform_7(%arg0: i32) -> (i32, i32) {
    %c0_i32 = arith.constant 0 : i32
    %c0_i32_0 = arith.constant 0 : i32
    %c0_i32_1 = arith.constant 0 : i32
    return %c0_i32, %c0_i32_0 : i32, i32
  }
  func.func @transform_8(%arg0: i32) -> (i32, i32) {
    %c0_i32 = arith.constant 0 : i32
    %c0_i32_0 = arith.constant 0 : i32
    %c0_i32_1 = arith.constant 0 : i32
    return %c0_i32, %c0_i32_0 : i32, i32
  }
  func.func @transform_9(%arg0: i32) -> (i32, i32, i32) {
    %c0_i32 = arith.constant 0 : i32
    %c0_i32_0 = arith.constant 0 : i32
    %c0_i32_1 = arith.constant 0 : i32
    %c0_i32_2 = arith.constant 0 : i32
    return %c0_i32, %c0_i32_0, %c0_i32_1 : i32, i32, i32
  }
  func.func @transform_10(%arg0: i32) -> (i32, i32, i32) {
    %c0_i32 = arith.constant 0 : i32
    %c0_i32_0 = arith.constant 0 : i32
    %c0_i32_1 = arith.constant 0 : i32
    %c0_i32_2 = arith.constant 0 : i32
    return %c0_i32, %c0_i32_0, %c0_i32_1 : i32, i32, i32
  }
  func.func @transform_11(%arg0: i32) -> (i32, i32) {
    %c0_i32 = arith.constant 0 : i32
    %c0_i32_0 = arith.constant 0 : i32
    %c0_i32_1 = arith.constant 0 : i32
    return %c0_i32, %c0_i32_0 : i32, i32
  }
  func.func @transform_12(%arg0: i32) -> (i32, i32) {
    %c0_i32 = arith.constant 0 : i32
    %c0_i32_0 = arith.constant 0 : i32
    %c0_i32_1 = arith.constant 0 : i32
    return %c0_i32, %c0_i32_0 : i32, i32
  }
}

</mosaic_0001>

<llo_original>
// kernel: tpu_custom_call.1
$region0: #{tpu_custom_call.1}
  #allocation0 [shape = 'u32[]', space=smem, size = 0x4, offset = 0x4, fixed_abs, tag = 'smem constant byte address 0x4 - core index']
  #allocation1 [shape = 'u32[72,128]{1,0:T(1,128)}', space=vmem, size = 0x9000, scoped, tag = 'internal scratch']
  #allocation2 [shape = 'f32[32,512]{1,0:T(8,128)}', space=vmem, size = 0x10000, scoped, tag = 'scratch operand']
  #allocation3 [shape = 'f32[8,512]{1,0:T(8,128)}', space=vmem, size = 0x4000, scoped, tag = 'scratch operand']
  #allocation4 [shape = 'f32[8,512]{1,0:T(8,128)}', space=vmem, size = 0x4000, scoped, tag = 'scratch operand']
  #allocation5 [shape = 'f32[8,128]{1,0:T(8,128)}', space=vmem, size = 0x1000, scoped, tag = 'scratch operand']
  #allocation6 [shape = 'f32[8,128]{1,0:T(8,128)}', space=vmem, size = 0x1000, scoped, tag = 'scratch operand']
  #allocation7 [shape = 'f32[200,512]{1,0:T(8,128)}', space=vmem, size = 0x64000, scoped, tag = 'scratch operand']
  #allocation8 [shape = 'f32[400,128]{1,0:T(8,128)}', space=vmem, size = 0x32000, scoped, tag = 'scratch operand']
  %s0 = inlined_call_operand.vmem [shape: f32[75,512], index: 0, kind: input, shape index: {}]
  %s1 = inlined_call_operand.hbm [shape: f32[32,75], index: 1, kind: input, shape index: {}]
  %s2 = inlined_call_operand.vmem [shape: f32[32,1], index: 2, kind: input, shape index: {}]
  %s3 = inlined_call_operand.hbm [shape: f32[32,200], index: 3, kind: input, shape index: {}]
  %s4 = inlined_call_operand.hbm [shape: f32[25,512], index: 4, kind: input, shape index: {}]
  %s5 = inlined_call_operand.hbm [shape: f32[512,128], index: 5, kind: input, shape index: {}]
  %s6 = inlined_call_operand.hbm [shape: f32[32,400], index: 6, kind: input, shape index: {}]
  %s7 = inlined_call_operand.vmem [shape: f32[32,1], index: 7, kind: input, shape index: {}]
  %s8 = inlined_call_operand.hbm [shape: f32[25,128], index: 8, kind: input, shape index: {}]
  %s9 = inlined_call_operand.vmem [shape: f32[2,128,16], index: 9, kind: input, shape index: {}]
  %s10 = inlined_call_operand.hbm [shape: f32[8,16,128], index: 10, kind: input, shape index: {}]
  %s11 = inlined_call_operand.vmem [shape: f32[1,128], index: 11, kind: input, shape index: {}]
  %s12 = inlined_call_operand.hbm [shape: f32[2,128], index: 12, kind: output, shape index: {}]
  %s13 = sld [smem:[#allocation0]]
  $region117: #{tpu_custom_call.1} parent=0
    _
  %s15 = ssub.s32 1, %s13
  %s16 = scalar_select 0, %s15, %s13
  $region1: #{tpu_custom_call.1} parent=0
    #allocation9 [shape = 'u8[16384]{0}', space=vmem, size = 0x4000, scoped, tag = 'input window, operand 1, single buffered']
    #allocation10 [shape = 's32[2]{0}', space=sflag, size = 0x8, scoped, tag = 'scoped memory for tpu_custom_call.1']
    #allocation11 [shape = 's32[2]{0}', space=sflag, size = 0x8, scoped, tag = 'scoped memory for tpu_custom_call.1']
    #allocation12 [shape = 'u8[32768]{0}', space=vmem, size = 0x8000, scoped, tag = 'input window, operand 3, single buffered']
    #allocation13 [shape = 's32[1]{0}', space=sflag, size = 0x4, scoped, tag = 'scoped memory for tpu_custom_call.1']
    #allocation14 [shape = 'u8[65536]{0}', space=vmem, size = 0x10000, scoped, tag = 'input window, operand 4, single buffered']
    #allocation15 [shape = 'u8[262144]{0}', space=vmem, size = 0x40000, scoped, tag = 'input window, operand 5, single buffered']
    #allocation16 [shape = 's32[1]{0}', space=sflag, size = 0x4, scoped, tag = 'scoped memory for tpu_custom_call.1']
    #allocation17 [shape = 'u8[65536]{0}', space=vmem, size = 0x10000, scoped, tag = 'input window, operand 6, single buffered']
    #allocation18 [shape = 'u8[16384]{0}', space=vmem, size = 0x4000, scoped, tag = 'input window, operand 8, single buffered']
    #allocation19 [shape = 's32[1]{0}', space=sflag, size = 0x4, scoped, tag = 'scoped memory for tpu_custom_call.1']
    #allocation20 [shape = 'u8[65536]{0}', space=vmem, size = 0x10000, scoped, tag = 'input window, operand 10, single buffered']
    #allocation21 [shape = 'u8[1024]{0}', space=vmem, size = 0x400, scoped, tag = 'output window, operand 0, single buffered']
    %17 = vsyncpa [#allocation10], 0
    %18 = vsyncpa [#allocation13], 0
    %19 = vsyncpa [#allocation16], 0
    %20 = vsyncpa [#allocation19], 0
    %21 = vsyncpa [#allocation11], 0
    loop: start=0, step=1, limit=6
    $region2: #{tpu_custom_call.1} parent=1 // loop_pre_header
      _
    $region3: #{tpu_custom_call.1} parent=1 // loop_header
      %s23 = sphi 0, %s27
      %p24 = scmp.ge.s32.totalorder %s23, 6
      %s31 = sphi 0, %s31
      %s33 = sphi 0, %s31
      %s34 = sphi 0, %s33
      %s48 = sphi 0, %s34
      %s52 = sphi 0, %s52
      %s54 = sphi 0, %s52
      %s55 = sphi 0, %s54
      %s69 = sphi 0, %s55
      %s73 = sphi 0, %s73
      %s75 = sphi 0, %s73
      %s76 = sphi 0, %s75
      %s90 = sphi 0, %s76
      %s94 = sphi 0, %s94
      %s96 = sphi 0, %s94
      %s97 = sphi 0, %s96
      %s111 = sphi 0, %s97
      %s115 = sphi 0, %s115
      %s117 = sphi 0, %s115
      %s118 = sphi 0, %s117
      %s132 = sphi 0, %s118
      %s136 = sphi 0, %s136
      %s138 = sphi 0, %s136
      %s139 = sphi 0, %s138
      %s153 = sphi 0, %s139
      %s157 = sphi 0, %s157
      %s159 = sphi 0, %s157
      %s160 = sphi 0, %s159
      %s174 = sphi 0, %s160
      %s178 = sphi 0, %s178
      %s180 = sphi 0, %s178
      %s181 = sphi 0, %s180
      %s195 = sphi 0, %s181
      %s199 = sphi 0, %s199
      %s201 = sphi 0, %s199
      %s202 = sphi 0, %s201
      %s216 = sphi 0, %s202
      %s220 = sphi 0, %s220
      %s222 = sphi 0, %s220
      %s223 = sphi 0, %s222
      %s237 = sphi 0, %s223
      %s241 = sphi 0, %s241
      %s243 = sphi 0, %s241
      %s244 = sphi 0, %s243
      %s258 = sphi 0, %s244
      %s262 = sphi 0, %s262
      %s264 = sphi 0, %s262
      %s265 = sphi 0, %s264
      %s279 = sphi 0, %s265
      %s283 = sphi 0, %s283
      %s285 = sphi 0, %s283
      %s286 = sphi 0, %s285
      %s300 = sphi 0, %s286
    $region4: #{tpu_custom_call.1} parent=1 // loop_header_branch
      %26 = sbr.rel (%p24) target = $region8
    $region5: #{tpu_custom_call.1} parent=1 // loop_body
      %s28 = ssub.s32 %s23, 1
      %s29 = ssub.s32 %s23, 2
      %s30 = sadd.s32 %s23, 1
      %s32 = sadd.s32 %s31, 1
      %p35 = scmp.eq.s32.totalorder %s23, 3
      %p36 = scmp.ne.s32.totalorder %s31, %s33
      %p37 = scmp.eq.s32.totalorder %s23, 0
      %p38 = por %p36, %p37
      %p39 = scmp.ne.s32.totalorder %s31, %s33
      %p40 = scmp.eq.s32.totalorder %s28, 3
      %p41 = por %p39, %p40
      %p42 = scmp.ne.s32.totalorder %s33, %s34
      %p43 = scmp.eq.s32.totalorder %s28, 0
      %p44 = por %p42, %p43
      %p45 = scmp.ne.s32.totalorder %s33, %s34
      %p46 = scmp.eq.s32.totalorder %s29, 3
      %p47 = por %p45, %p46
      %p49 = scmp.ne.s32.totalorder %s34, %s48
      %p50 = scmp.eq.s32.totalorder %s29, 0
      %p51 = por %p49, %p50
      %s53 = sadd.s32 %s52, 1
      %p56 = scmp.eq.s32.totalorder %s23, 3
      %p57 = scmp.ne.s32.totalorder %s52, %s54
      %p58 = scmp.eq.s32.totalorder %s23, 0
      %p59 = por %p57, %p58
      %p60 = scmp.ne.s32.totalorder %s52, %s54
      %p61 = scmp.eq.s32.totalorder %s28, 3
      %p62 = por %p60, %p61
      %p63 = scmp.ne.s32.totalorder %s54, %s55
      %p64 = scmp.eq.s32.totalorder %s28, 0
      %p65 = por %p63, %p64
      %p66 = scmp.ne.s32.totalorder %s54, %s55
      %p67 = scmp.eq.s32.totalorder %s29, 3
      %p68 = por %p66, %p67
      %p70 = scmp.ne.s32.totalorder %s55, %s69
      %p71 = scmp.eq.s32.totalorder %s29, 0
      %p72 = por %p70, %p71
      %s74 = sadd.s32 %s73, 1
      %p77 = scmp.eq.s32.totalorder %s23, 3
      %p78 = scmp.ne.s32.totalorder %s73, %s75
      %p79 = scmp.eq.s32.totalorder %s23, 0
      %p80 = por %p78, %p79
      %p81 = scmp.ne.s32.totalorder %s73, %s75
      %p82 = scmp.eq.s32.totalorder %s28, 3
      %p83 = por %p81, %p82
      %p84 = scmp.ne.s32.totalorder %s75, %s76
      %p85 = scmp.eq.s32.totalorder %s28, 0
      %p86 = por %p84, %p85
      %p87 = scmp.ne.s32.totalorder %s75, %s76
      %p88 = scmp.eq.s32.totalorder %s29, 3
      %p89 = por %p87, %p88
      %p91 = scmp.ne.s32.totalorder %s76, %s90
      %p92 = scmp.eq.s32.totalorder %s29, 0
      %p93 = por %p91, %p92
      %s95 = sadd.s32 %s94, 1
      %p98 = scmp.eq.s32.totalorder %s23, 3
      %p99 = scmp.ne.s32.totalorder %s94, %s96
      %p100 = scmp.eq.s32.totalorder %s23, 0
      %p101 = por %p99, %p100
      %p102 = scmp.ne.s32.totalorder %s94, %s96
      %p103 = scmp.eq.s32.totalorder %s28, 3
      %p104 = por %p102, %p103
      %p105 = scmp.ne.s32.totalorder %s96, %s97
      %p106 = scmp.eq.s32.totalorder %s28, 0
      %p107 = por %p105, %p106
      %p108 = scmp.ne.s32.totalorder %s96, %s97
      %p109 = scmp.eq.s32.totalorder %s29, 3
      %p110 = por %p108, %p109
      %p112 = scmp.ne.s32.totalorder %s97, %s111
      %p113 = scmp.eq.s32.totalorder %s29, 0
      %p114 = por %p112, %p113
      %s116 = sadd.s32 %s115, 1
      %p119 = scmp.eq.s32.totalorder %s23, 3
      %p120 = scmp.ne.s32.totalorder %s115, %s117
      %p121 = scmp.eq.s32.totalorder %s23, 0
      %p122 = por %p120, %p121
      %p123 = scmp.ne.s32.totalorder %s115, %s117
      %p124 = scmp.eq.s32.totalorder %s28, 3
      %p125 = por %p123, %p124
      %p126 = scmp.ne.s32.totalorder %s117, %s118
      %p127 = scmp.eq.s32.totalorder %s28, 0
      %p128 = por %p126, %p127
      %p129 = scmp.ne.s32.totalorder %s117, %s118
      %p130 = scmp.eq.s32.totalorder %s29, 3
      %p131 = por %p129, %p130
      %p133 = scmp.ne.s32.totalorder %s118, %s132
      %p134 = scmp.eq.s32.totalorder %s29, 0
      %p135 = por %p133, %p134
      %s137 = sadd.s32 %s136, 1
      %p140 = scmp.eq.s32.totalorder %s23, 3
      %p141 = scmp.ne.s32.totalorder %s136, %s138
      %p142 = scmp.eq.s32.totalorder %s23, 0
      %p143 = por %p141, %p142
      %p144 = scmp.ne.s32.totalorder %s136, %s138
      %p145 = scmp.eq.s32.totalorder %s28, 3
      %p146 = por %p144, %p145
      %p147 = scmp.ne.s32.totalorder %s138, %s139
      %p148 = scmp.eq.s32.totalorder %s28, 0
      %p149 = por %p147, %p148
      %p150 = scmp.ne.s32.totalorder %s138, %s139
      %p151 = scmp.eq.s32.totalorder %s29, 3
      %p152 = por %p150, %p151
      %p154 = scmp.ne.s32.totalorder %s139, %s153
      %p155 = scmp.eq.s32.totalorder %s29, 0
      %p156 = por %p154, %p155
      %s158 = sadd.s32 %s157, 1
      %p161 = scmp.eq.s32.totalorder %s23, 3
      %p162 = scmp.ne.s32.totalorder %s157, %s159
      %p163 = scmp.eq.s32.totalorder %s23, 0
      %p164 = por %p162, %p163
      %p165 = scmp.ne.s32.totalorder %s157, %s159
      %p166 = scmp.eq.s32.totalorder %s28, 3
      %p167 = por %p165, %p166
      %p168 = scmp.ne.s32.totalorder %s159, %s160
      %p169 = scmp.eq.s32.totalorder %s28, 0
      %p170 = por %p168, %p169
      %p171 = scmp.ne.s32.totalorder %s159, %s160
      %p172 = scmp.eq.s32.totalorder %s29, 3
      %p173 = por %p171, %p172
      %p175 = scmp.ne.s32.totalorder %s160, %s174
      %p176 = scmp.eq.s32.totalorder %s29, 0
      %p177 = por %p175, %p176
      %s179 = sadd.s32 %s178, 1
      %p182 = scmp.eq.s32.totalorder %s23, 3
      %p183 = scmp.ne.s32.totalorder %s178, %s180
      %p184 = scmp.eq.s32.totalorder %s23, 0
      %p185 = por %p183, %p184
      %p186 = scmp.ne.s32.totalorder %s178, %s180
      %p187 = scmp.eq.s32.totalorder %s28, 3
      %p188 = por %p186, %p187
      %p189 = scmp.ne.s32.totalorder %s180, %s181
      %p190 = scmp.eq.s32.totalorder %s28, 0
      %p191 = por %p189, %p190
      %p192 = scmp.ne.s32.totalorder %s180, %s181
      %p193 = scmp.eq.s32.totalorder %s29, 3
      %p194 = por %p192, %p193
      %p196 = scmp.ne.s32.totalorder %s181, %s195
      %p197 = scmp.eq.s32.totalorder %s29, 0
      %p198 = por %p196, %p197
      %s200 = sadd.s32 %s199, 1
      %p203 = scmp.eq.s32.totalorder %s23, 3
      %p204 = scmp.ne.s32.totalorder %s199, %s201
      %p205 = scmp.eq.s32.totalorder %s23, 0
      %p206 = por %p204, %p205
      %p207 = scmp.ne.s32.totalorder %s199, %s201
      %p208 = scmp.eq.s32.totalorder %s28, 3
      %p209 = por %p207, %p208
      %p210 = scmp.ne.s32.totalorder %s201, %s202
      %p211 = scmp.eq.s32.totalorder %s28, 0
      %p212 = por %p210, %p211
      %p213 = scmp.ne.s32.totalorder %s201, %s202
      %p214 = scmp.eq.s32.totalorder %s29, 3
      %p215 = por %p213, %p214
      %p217 = scmp.ne.s32.totalorder %s202, %s216
      %p218 = scmp.eq.s32.totalorder %s29, 0
      %p219 = por %p217, %p218
      %s221 = sadd.s32 %s220, 1
      %p224 = scmp.eq.s32.totalorder %s23, 3
      %p225 = scmp.ne.s32.totalorder %s220, %s222
      %p226 = scmp.eq.s32.totalorder %s23, 0
      %p227 = por %p225, %p226
      %p228 = scmp.ne.s32.totalorder %s220, %s222
      %p229 = scmp.eq.s32.totalorder %s28, 3
      %p230 = por %p228, %p229
      %p231 = scmp.ne.s32.totalorder %s222, %s223
      %p232 = scmp.eq.s32.totalorder %s28, 0
      %p233 = por %p231, %p232
      %p234 = scmp.ne.s32.totalorder %s222, %s223
      %p235 = scmp.eq.s32.totalorder %s29, 3
      %p236 = por %p234, %p235
      %p238 = scmp.ne.s32.totalorder %s223, %s237
      %p239 = scmp.eq.s32.totalorder %s29, 0
      %p240 = por %p238, %p239
      %s242 = sadd.s32 %s241, 1
      %p245 = scmp.eq.s32.totalorder %s23, 3
      %p246 = scmp.ne.s32.totalorder %s241, %s243
      %p247 = scmp.eq.s32.totalorder %s23, 0
      %p248 = por %p246, %p247
      %p249 = scmp.ne.s32.totalorder %s241, %s243
      %p250 = scmp.eq.s32.totalorder %s28, 3
      %p251 = por %p249, %p250
      %p252 = scmp.ne.s32.totalorder %s243, %s244
      %p253 = scmp.eq.s32.totalorder %s28, 0
      %p254 = por %p252, %p253
      %p255 = scmp.ne.s32.totalorder %s243, %s244
      %p256 = scmp.eq.s32.totalorder %s29, 3
      %p257 = por %p255, %p256
      %p259 = scmp.ne.s32.totalorder %s244, %s258
      %p260 = scmp.eq.s32.totalorder %s29, 0
      %p261 = por %p259, %p260
      %s263 = sadd.s32 %s262, 1
      %p266 = scmp.eq.s32.totalorder %s23, 3
      %p267 = scmp.ne.s32.totalorder %s262, %s264
      %p268 = scmp.eq.s32.totalorder %s23, 0
      %p269 = por %p267, %p268
      %p270 = scmp.ne.s32.totalorder %s262, %s264
      %p271 = scmp.eq.s32.totalorder %s28, 3
      %p272 = por %p270, %p271
      %p273 = scmp.ne.s32.totalorder %s264, %s265
      %p274 = scmp.eq.s32.totalorder %s28, 0
      %p275 = por %p273, %p274
      %p276 = scmp.ne.s32.totalorder %s264, %s265
      %p277 = scmp.eq.s32.totalorder %s29, 3
      %p278 = por %p276, %p277
      %p280 = scmp.ne.s32.totalorder %s265, %s279
      %p281 = scmp.eq.s32.totalorder %s29, 0
      %p282 = por %p280, %p281
      %s284 = sadd.s32 %s283, 1
      %p287 = scmp.eq.s32.totalorder %s23, 3
      %p288 = scmp.ne.s32.totalorder %s283, %s285
      %p289 = scmp.eq.s32.totalorder %s23, 0
      %p290 = por %p288, %p289
      %p291 = scmp.ne.s32.totalorder %s283, %s285
      %p292 = scmp.eq.s32.totalorder %s28, 3
      %p293 = por %p291, %p292
      %p294 = scmp.ne.s32.totalorder %s285, %s286
      %p295 = scmp.eq.s32.totalorder %s28, 0
      %p296 = por %p294, %p295
      %p297 = scmp.ne.s32.totalorder %s285, %s286
      %p298 = scmp.eq.s32.totalorder %s29, 3
      %p299 = por %p297, %p298
      %p301 = scmp.ne.s32.totalorder %s286, %s300
      %p302 = scmp.eq.s32.totalorder %s29, 0
      %p303 = por %p301, %p302
      %p304 = scmp.le.s32.totalorder 1, %s23
      %p305 = scmp.lt.s32.totalorder %s23, 5
      %p306 = pnand %p304, %p305
      %p307 = pneg %p306
      // Predicated region
      $region9: #{tpu_custom_call.1} parent=5 // pred_check
        _
      $region10: #{tpu_custom_call.1} parent=5 // pred_check_branch
        %309 = sbr.rel (%p306) target = $region12
      $region11: #{tpu_custom_call.1} parent=5 // pred_region
        %s310 = ssub.s32 %s23, 1
        // Predicated region
        $region13: #{tpu_custom_call.1} parent=11 // pred_check
          %p311 = pneg %p44
        $region14: #{tpu_custom_call.1} parent=11 // pred_check_branch
          %313 = sbr.rel (%p311) target = $region16
        $region15: #{tpu_custom_call.1} parent=11 // pred_region
          _
        $region16: #{tpu_custom_call.1} parent=11 // pred_fallthru
          _
        // Predicated region
        $region17: #{tpu_custom_call.1} parent=11 // pred_check
          %p314 = pneg %p65
        $region18: #{tpu_custom_call.1} parent=11 // pred_check_branch
          %316 = sbr.rel (%p314) target = $region20
        $region19: #{tpu_custom_call.1} parent=11 // pred_region
          %318 = vsyncadd [#allocation10], 0
          %s319 = sshll.u32 %s1, 4
          %s320 = int_to_ptr.hbm [resolvable:$true] %s319
          %s321 = sshll.u32 [#allocation9], 4
          %s322 = int_to_ptr.vmem [resolvable:$true] %s321
          %327 = dma.hbm_to_vmem [thread:$0]  %s320, 512, %s322, [#allocation10], 128, 128, 8
        $region20: #{tpu_custom_call.1} parent=11 // pred_fallthru
          _
        // Predicated region
        $region21: #{tpu_custom_call.1} parent=11 // pred_check
          %p328 = pneg %p86
        $region22: #{tpu_custom_call.1} parent=11 // pred_check_branch
          %330 = sbr.rel (%p328) target = $region24
        $region23: #{tpu_custom_call.1} parent=11 // pred_region
          _
        $region24: #{tpu_custom_call.1} parent=11 // pred_fallthru
          _
        // Predicated region
        $region25: #{tpu_custom_call.1} parent=11 // pred_check
          %p331 = pneg %p107
        $region26: #{tpu_custom_call.1} parent=11 // pred_check_branch
          %333 = sbr.rel (%p331) target = $region28
        $region27: #{tpu_custom_call.1} parent=11 // pred_region
          %335 = vsyncadd [#allocation13], 0
          %s336 = sshll.u32 %s3, 4
          %s337 = int_to_ptr.hbm [resolvable:$true] %s336
          %s338 = sshll.u32 [#allocation12], 4
          %s339 = int_to_ptr.vmem [resolvable:$true] %s338
          %344 = dma.hbm_to_vmem [thread:$0]  %s337, 1024, %s339, [#allocation13], 256, 256, 16
        $region28: #{tpu_custom_call.1} parent=11 // pred_fallthru
          _
        // Predicated region
        $region29: #{tpu_custom_call.1} parent=11 // pred_check
          %p345 = pneg %p128
        $region30: #{tpu_custom_call.1} parent=11 // pred_check_branch
          %347 = sbr.rel (%p345) target = $region32
        $region31: #{tpu_custom_call.1} parent=11 // pred_region
          %349 = vsyncadd [#allocation13], 0
          %s350 = sshll.u32 %s4, 4
          %s351 = int_to_ptr.hbm [resolvable:$true] %s350
          %s352 = sshll.u32 [#allocation14], 4
          %s353 = int_to_ptr.vmem [resolvable:$true] %s352
          %358 = dma.hbm_to_vmem [thread:$0]  %s351, 2048, %s353, [#allocation13], 512, 512, 32
        $region32: #{tpu_custom_call.1} parent=11 // pred_fallthru
          _
        // Predicated region
        $region33: #{tpu_custom_call.1} parent=11 // pred_check
          %p359 = pneg %p149
        $region34: #{tpu_custom_call.1} parent=11 // pred_check_branch
          %361 = sbr.rel (%p359) target = $region36
        $region35: #{tpu_custom_call.1} parent=11 // pred_region
          %363 = vsyncadd [#allocation16], 0
          %s364 = sshll.u32 %s5, 4
          %s365 = int_to_ptr.hbm [resolvable:$true] %s364
          %s366 = sshll.u32 [#allocation15], 4
          %s367 = int_to_ptr.vmem [resolvable:$true] %s366
          %372 = dma.hbm_to_vmem [thread:$0]  %s365, 8192, %s367, [#allocation16], 128, 128, 8
        $region36: #{tpu_custom_call.1} parent=11 // pred_fallthru
          _
        // Predicated region
        $region37: #{tpu_custom_call.1} parent=11 // pred_check
          %p373 = pneg %p170
        $region38: #{tpu_custom_call.1} parent=11 // pred_check_branch
          %375 = sbr.rel (%p373) target = $region40
        $region39: #{tpu_custom_call.1} parent=11 // pred_region
          %377 = vsyncadd [#allocation16], 0
          %s378 = sshll.u32 %s6, 4
          %s379 = int_to_ptr.hbm [resolvable:$true] %s378
          %s380 = sshll.u32 [#allocation17], 4
          %s381 = int_to_ptr.vmem [resolvable:$true] %s380
          %386 = dma.hbm_to_vmem [thread:$0]  %s379, 2048, %s381, [#allocation16], 512, 512, 32
        $region40: #{tpu_custom_call.1} parent=11 // pred_fallthru
          _
        // Predicated region
        $region41: #{tpu_custom_call.1} parent=11 // pred_check
          %p387 = pneg %p191
        $region42: #{tpu_custom_call.1} parent=11 // pred_check_branch
          %389 = sbr.rel (%p387) target = $region44
        $region43: #{tpu_custom_call.1} parent=11 // pred_region
          _
        $region44: #{tpu_custom_call.1} parent=11 // pred_fallthru
          _
        // Predicated region
        $region45: #{tpu_custom_call.1} parent=11 // pred_check
          %p390 = pneg %p212
        $region46: #{tpu_custom_call.1} parent=11 // pred_check_branch
          %392 = sbr.rel (%p390) target = $region48
        $region47: #{tpu_custom_call.1} parent=11 // pred_region
          %394 = vsyncadd [#allocation19], 0
          %s395 = sshll.u32 %s8, 4
          %s396 = int_to_ptr.hbm [resolvable:$true] %s395
          %s397 = sshll.u32 [#allocation18], 4
          %s398 = int_to_ptr.vmem [resolvable:$true] %s397
          %403 = dma.hbm_to_vmem [thread:$0]  %s396, 512, %s398, [#allocation19], 128, 128, 8
        $region48: #{tpu_custom_call.1} parent=11 // pred_fallthru
          _
        // Predicated region
        $region49: #{tpu_custom_call.1} parent=11 // pred_check
          %p404 = pneg %p233
        $region50: #{tpu_custom_call.1} parent=11 // pred_check_branch
          %406 = sbr.rel (%p404) target = $region52
        $region51: #{tpu_custom_call.1} parent=11 // pred_region
          _
        $region52: #{tpu_custom_call.1} parent=11 // pred_fallthru
          _
        // Predicated region
        $region53: #{tpu_custom_call.1} parent=11 // pred_check
          %p407 = pneg %p254
        $region54: #{tpu_custom_call.1} parent=11 // pred_check_branch
          %409 = sbr.rel (%p407) target = $region56
        $region55: #{tpu_custom_call.1} parent=11 // pred_region
          %411 = vsyncadd [#allocation19], 0
          %s412 = sshll.u32 %s10, 4
          %s413 = int_to_ptr.hbm [resolvable:$true] %s412
          %s414 = sshll.u32 [#allocation20], 4
          %s415 = int_to_ptr.vmem [resolvable:$true] %s414
          %420 = dma.hbm_to_vmem [thread:$0]  %s413, 2048, %s415, [#allocation19], 128, 128, 8
        $region56: #{tpu_custom_call.1} parent=11 // pred_fallthru
          _
        // Predicated region
        $region57: #{tpu_custom_call.1} parent=11 // pred_check
          %p421 = pneg %p275
        $region58: #{tpu_custom_call.1} parent=11 // pred_check_branch
          %423 = sbr.rel (%p421) target = $region60
        $region59: #{tpu_custom_call.1} parent=11 // pred_region
          _
        $region60: #{tpu_custom_call.1} parent=11 // pred_fallthru
          _
      $region12: #{tpu_custom_call.1} parent=5 // pred_fallthru
        _
      %p424 = scmp.lt.s32.totalorder %s23, 4
      // Predicated region
      $region61: #{tpu_custom_call.1} parent=5 // pred_check
        %p425 = pneg %p424
      $region62: #{tpu_custom_call.1} parent=5 // pred_check_branch
        %427 = sbr.rel (%p425) target = $region64
      $region63: #{tpu_custom_call.1} parent=5 // pred_region
        _
      $region64: #{tpu_custom_call.1} parent=5 // pred_fallthru
        _
      %p428 = scmp.le.s32.totalorder 1, %s23
      %p429 = scmp.lt.s32.totalorder %s23, 5
      %p430 = pnand %p428, %p429
      %p431 = pneg %p430
      // Predicated region
      $region65: #{tpu_custom_call.1} parent=5 // pred_check
        _
      $region66: #{tpu_custom_call.1} parent=5 // pred_check_branch
        %433 = sbr.rel (%p430) target = $region68
      $region67: #{tpu_custom_call.1} parent=5 // pred_region
        %s434 = ssub.s32 %s23, 1
        // Predicated region
        $region69: #{tpu_custom_call.1} parent=67 // pred_check
          %p435 = pneg %p65
        $region70: #{tpu_custom_call.1} parent=67 // pred_check_branch
          %437 = sbr.rel (%p435) target = $region72
        $region71: #{tpu_custom_call.1} parent=67 // pred_region
          %439 = dma.done [#allocation10], 512
        $region72: #{tpu_custom_call.1} parent=67 // pred_fallthru
          _
        // Predicated region
        $region73: #{tpu_custom_call.1} parent=67 // pred_check
          %p440 = pneg %p107
        $region74: #{tpu_custom_call.1} parent=67 // pred_check_branch
          %442 = sbr.rel (%p440) target = $region76
        $region75: #{tpu_custom_call.1} parent=67 // pred_region
          %444 = dma.done [#allocation13], 1024
        $region76: #{tpu_custom_call.1} parent=67 // pred_fallthru
          _
        // Predicated region
        $region77: #{tpu_custom_call.1} parent=67 // pred_check
          %p445 = pneg %p128
        $region78: #{tpu_custom_call.1} parent=67 // pred_check_branch
          %447 = sbr.rel (%p445) target = $region80
        $region79: #{tpu_custom_call.1} parent=67 // pred_region
          %449 = dma.done [#allocation13], 2048
        $region80: #{tpu_custom_call.1} parent=67 // pred_fallthru
          _
        // Predicated region
        $region81: #{tpu_custom_call.1} parent=67 // pred_check
          %p450 = pneg %p149
        $region82: #{tpu_custom_call.1} parent=67 // pred_check_branch
          %452 = sbr.rel (%p450) target = $region84
        $region83: #{tpu_custom_call.1} parent=67 // pred_region
          %454 = dma.done [#allocation16], 8192
        $region84: #{tpu_custom_call.1} parent=67 // pred_fallthru
          _
        // Predicated region
        $region85: #{tpu_custom_call.1} parent=67 // pred_check
          %p455 = pneg %p170
        $region86: #{tpu_custom_call.1} parent=67 // pred_check_branch
          %457 = sbr.rel (%p455) target = $region88
        $region87: #{tpu_custom_call.1} parent=67 // pred_region
          %459 = dma.done [#allocation16], 2048
        $region88: #{tpu_custom_call.1} parent=67 // pred_fallthru
          _
        // Predicated region
        $region89: #{tpu_custom_call.1} parent=67 // pred_check
          %p460 = pneg %p212
        $region90: #{tpu_custom_call.1} parent=67 // pred_check_branch
          %462 = sbr.rel (%p460) target = $region92
        $region91: #{tpu_custom_call.1} parent=67 // pred_region
          %464 = dma.done [#allocation19], 512
        $region92: #{tpu_custom_call.1} parent=67 // pred_fallthru
          _
        // Predicated region
        $region93: #{tpu_custom_call.1} parent=67 // pred_check
          %p465 = pneg %p254
        $region94: #{tpu_custom_call.1} parent=67 // pred_check_branch
          %467 = sbr.rel (%p465) target = $region96
        $region95: #{tpu_custom_call.1} parent=67 // pred_region
          %469 = dma.done [#allocation19], 2048
        $region96: #{tpu_custom_call.1} parent=67 // pred_fallthru
          _
        %p470 = pneg %p44
        %p471 = pneg %p41
        %p472 = pneg %p65
        %p473 = pneg %p62
        %p474 = pneg %p86
        %p475 = pneg %p83
        %p476 = pneg %p107
        %p477 = pneg %p104
        %p478 = pneg %p128
        %p479 = pneg %p125
        %p480 = pneg %p149
        %p481 = pneg %p146
        %p482 = pneg %p170
        %p483 = pneg %p167
        %p484 = pneg %p191
        %p485 = pneg %p188
        %p486 = pneg %p212
        %p487 = pneg %p209
        %p488 = pneg %p233
        %p489 = pneg %p230
        %p490 = pneg %p254
        %p491 = pneg %p251
        %p492 = pneg %p275
        %p493 = pneg %p272
        %p494 = pneg %p296
        %p495 = pneg %p293
        %p496 = scmp.eq.s32.totalorder %s28, 0
        // Predicated region
        $region97: #{tpu_custom_call.1} parent=67 // pred_check
          %p497 = pneg %p496
        $region98: #{tpu_custom_call.1} parent=67 // pred_check_branch
          %499 = sbr.rel (%p497) target = $region100
        $region99: #{tpu_custom_call.1} parent=67 // pred_region
          %500 = vst [vmem:[#allocation3] sm:$0xff] 0.0
          %501 = vst [vmem:[#allocation3 + $0x8] sm:$0xff] 0.0
          %502 = vst [vmem:[#allocation3 + $0x10] sm:$0xff] 0.0
          %503 = vst [vmem:[#allocation3 + $0x18] sm:$0xff] 0.0
          %504 = vst [vmem:[#allocation4] sm:$0xff] 0.0
          %505 = vst [vmem:[#allocation4 + $0x8] sm:$0xff] 0.0
          %506 = vst [vmem:[#allocation4 + $0x10] sm:$0xff] 0.0
          %507 = vst [vmem:[#allocation4 + $0x18] sm:$0xff] 0.0
          %508 = vst [vmem:[#allocation5] sm:$0xff] 0.0
          %509 = vst [vmem:[#allocation6] sm:$0xff] 0.0
          %v510 = vld [vmem:[%s2] sm:$0xff]
          %v511 = vld [vmem:[%s2 + $0x8] sm:$0xff]
          %v512 = vld [vmem:[%s2 + $0x10] sm:$0xff]
          %v513 = vld [vmem:[%s2 + $0x18] sm:$0xff]
          %v514 = vld [vmem:[#allocation9] sm:$0xff]
          %v515 = vld [vmem:[#allocation9 + $0x8] sm:$0xff]
          %v516 = vld [vmem:[#allocation9 + $0x10] sm:$0xff]
          %v517 = vld [vmem:[#allocation9 + $0x18] sm:$0xff]
          %v518 = vld [vmem:[%s0] sm:$0xff]
          %v519 = vld [vmem:[%s0 + $0x8] sm:$0xff]
          %v520 = vld [vmem:[%s0 + $0x10] sm:$0xff]
          %v521 = vld [vmem:[%s0 + $0x18] sm:$0xff]
          %v522 = vld [vmem:[%s0 + $0x20] sm:$0xff]
          %v523 = vld [vmem:[%s0 + $0x28] sm:$0xff]
          %v524 = vld [vmem:[%s0 + $0x30] sm:$0xff]
          %v525 = vld [vmem:[%s0 + $0x38] sm:$0xff]
          %v526 = vld [vmem:[%s0 + $0x40] sm:$0xff]
          %v527 = vld [vmem:[%s0 + $0x48] sm:$0xff]
          %v528 = vld [vmem:[%s0 + $0x50] sm:$0xff]
          %v529 = vld [vmem:[%s0 + $0x58] sm:$0xff]
          %v530 = vld [vmem:[%s0 + $0x60] sm:$0xff]
          %v531 = vld [vmem:[%s0 + $0x68] sm:$0xff]
          %v532 = vld [vmem:[%s0 + $0x70] sm:$0xff]
          %v533 = vld [vmem:[%s0 + $0x78] sm:$0xff]
          %v534 = vld [vmem:[%s0 + $0x80] sm:$0xff]
          %v535 = vld [vmem:[%s0 + $0x88] sm:$0xff]
          %v536 = vld [vmem:[%s0 + $0x90] sm:$0xff]
          %v537 = vld [vmem:[%s0 + $0x98] sm:$0xff]
          %v538 = vld [vmem:[%s0 + $0xa0] sm:$0xff]
          %v539 = vld [vmem:[%s0 + $0xa8] sm:$0xff]
          %v540 = vld [vmem:[%s0 + $0xb0] sm:$0xff]
          %v541 = vld [vmem:[%s0 + $0xb8] sm:$0xff]
          %v542 = vld [vmem:[%s0 + $0xc0] sm:$0xff]
          %v543 = vld [vmem:[%s0 + $0xc8] sm:$0xff]
          %v544 = vld [vmem:[%s0 + $0xd0] sm:$0xff]
          %v545 = vld [vmem:[%s0 + $0xd8] sm:$0xff]
          %v546 = vld [vmem:[%s0 + $0xe0] sm:$0xff]
          %v547 = vld [vmem:[%s0 + $0xe8] sm:$0xff]
          %v548 = vld [vmem:[%s0 + $0xf0] sm:$0xff]
          %v549 = vld [vmem:[%s0 + $0xf8] sm:$0xff]
          %v550 = vld [vmem:[%s0 + $0x100] sm:$0xff]
          %v551 = vld [vmem:[%s0 + $0x108] sm:$0xff]
          %v552 = vld [vmem:[%s0 + $0x110] sm:$0xff]
          %v553 = vld [vmem:[%s0 + $0x118] sm:$0xff]
          %v554 = vld [vmem:[%s0 + $0x120] sm:$0x7]
          %v555 = vld [vmem:[%s0 + $0x128] sm:$0x7]
          %v556 = vld [vmem:[%s0 + $0x130] sm:$0x7]
          %v557 = vld [vmem:[%s0 + $0x138] sm:$0x7]
          %vm558 = vcmask 613376
          %v560 = vsel %vm558, %v514, 0
          %v563 = vsel %vm558, %v515, 0
          %v566 = vsel %vm558, %v516, 0
          %v569 = vsel %vm558, %v517, 0
          %vm571 = vcmask 1042432
          %v573 = vsel %vm571, %v554, 0
          %v576 = vsel %vm571, %v555, 0
          %v579 = vsel %vm571, %v556, 0
          %v582 = vsel %vm571, %v557, 0
          %584 = vmatpush.msra.mxu0 0.0
          %585 = vmatpush.msra.mxu0 0.0
          %586 = vmatpush.msra.mxu0 0.0
          %587 = vmatpush.msra.mxu0 0.0
          %588 = vmatpush.msra.mxu0 0.0
          %589 = vmatpush.msra.mxu0 0.0
          %590 = vmatpush.msra.mxu0 %v573
          %591 = vmatpush.msra.mxu0 %v550
          %592 = vmatpush.msra.mxu0 %v546
          %593 = vmatpush.msra.mxu0 %v542
          %594 = vmatpush.msra.mxu0 %v538
          %595 = vmatpush.msra.mxu0 %v534
          %596 = vmatpush.msra.mxu0 %v530
          %597 = vmatpush.msra.mxu0 %v526
          %598 = vmatpush.msra.mxu0 %v522
          %599 = vmatpush.msra.mxu0 %v518
          %600 = vmatmul.f32.gmra.mxu0 %v560
          %v601 = vpop.f32.mrf.mxu0
          %v602 = vadd.f32 0.0, %v601
          %603 = vmatmul.f32.gmra.mxu0 %v563
          %v604 = vpop.f32.mrf.mxu0
          %v605 = vadd.f32 0.0, %v604
          %606 = vmatmul.f32.gmra.mxu0 %v566
          %v607 = vpop.f32.mrf.mxu0
          %v608 = vadd.f32 0.0, %v607
          %609 = vmatmul.f32.gmra.mxu0 %v569
          %v610 = vpop.f32.mrf.mxu0
          %v611 = vadd.f32 0.0, %v610
          %612 = vdwg.mxu0
          %613 = vmatpush.msra.mxu0 0.0
          %614 = vmatpush.msra.mxu0 0.0
          %615 = vmatpush.msra.mxu0 0.0
          %616 = vmatpush.msra.mxu0 0.0
          %617 = vmatpush.msra.mxu0 0.0
          %618 = vmatpush.msra.mxu0 0.0
          %619 = vmatpush.msra.mxu0 %v576
          %620 = vmatpush.msra.mxu0 %v551
          %621 = vmatpush.msra.mxu0 %v547
          %622 = vmatpush.msra.mxu0 %v543
          %623 = vmatpush.msra.mxu0 %v539
          %624 = vmatpush.msra.mxu0 %v535
          %625 = vmatpush.msra.mxu0 %v531
          %626 = vmatpush.msra.mxu0 %v527
          %627 = vmatpush.msra.mxu0 %v523
          %628 = vmatpush.msra.mxu0 %v519
          %629 = vmatmul.f32.gmra.mxu0 %v560
          %v630 = vpop.f32.mrf.mxu0
          %v631 = vadd.f32 0.0, %v630
          %632 = vmatmul.f32.gmra.mxu0 %v563
          %v633 = vpop.f32.mrf.mxu0
          %v634 = vadd.f32 0.0, %v633
          %635 = vmatmul.f32.gmra.mxu0 %v566
          %v636 = vpop.f32.mrf.mxu0
          %v637 = vadd.f32 0.0, %v636
          %638 = vmatmul.f32.gmra.mxu0 %v569
          %v639 = vpop.f32.mrf.mxu0
          %v640 = vadd.f32 0.0, %v639
          %641 = vdwg.mxu0
          %642 = vmatpush.msra.mxu0 0.0
          %643 = vmatpush.msra.mxu0 0.0
          %644 = vmatpush.msra.mxu0 0.0
          %645 = vmatpush.msra.mxu0 0.0
          %646 = vmatpush.msra.mxu0 0.0
          %647 = vmatpush.msra.mxu0 0.0
          %648 = vmatpush.msra.mxu0 %v579
          %649 = vmatpush.msra.mxu0 %v552
          %650 = vmatpush.msra.mxu0 %v548
          %651 = vmatpush.msra.mxu0 %v544
          %652 = vmatpush.msra.mxu0 %v540
          %653 = vmatpush.msra.mxu0 %v536
          %654 = vmatpush.msra.mxu0 %v532
          %655 = vmatpush.msra.mxu0 %v528
          %656 = vmatpush.msra.mxu0 %v524
          %657 = vmatpush.msra.mxu0 %v520
          %658 = vmatmul.f32.gmra.mxu0 %v560
          %v659 = vpop.f32.mrf.mxu0
          %v660 = vadd.f32 0.0, %v659
          %661 = vmatmul.f32.gmra.mxu0 %v563
          %v662 = vpop.f32.mrf.mxu0
          %v663 = vadd.f32 0.0, %v662
          %664 = vmatmul.f32.gmra.mxu0 %v566
          %v665 = vpop.f32.mrf.mxu0
          %v666 = vadd.f32 0.0, %v665
          %667 = vmatmul.f32.gmra.mxu0 %v569
          %v668 = vpop.f32.mrf.mxu0
          %v669 = vadd.f32 0.0, %v668
          %670 = vdwg.mxu0
          %671 = vmatpush.msra.mxu0 0.0
          %672 = vmatpush.msra.mxu0 0.0
          %673 = vmatpush.msra.mxu0 0.0
          %674 = vmatpush.msra.mxu0 0.0
          %675 = vmatpush.msra.mxu0 0.0
          %676 = vmatpush.msra.mxu0 0.0
          %677 = vmatpush.msra.mxu0 %v582
          %678 = vmatpush.msra.mxu0 %v553
          %679 = vmatpush.msra.mxu0 %v549
          %680 = vmatpush.msra.mxu0 %v545
          %681 = vmatpush.msra.mxu0 %v541
          %682 = vmatpush.msra.mxu0 %v537
          %683 = vmatpush.msra.mxu0 %v533
          %684 = vmatpush.msra.mxu0 %v529
          %685 = vmatpush.msra.mxu0 %v525
          %686 = vmatpush.msra.mxu0 %v521
          %687 = vmatmul.f32.gmra.mxu0 %v560
          %v688 = vpop.f32.mrf.mxu0
          %v689 = vadd.f32 0.0, %v688
          %690 = vmatmul.f32.gmra.mxu0 %v563
          %v691 = vpop.f32.mrf.mxu0
          %v692 = vadd.f32 0.0, %v691
          %693 = vmatmul.f32.gmra.mxu0 %v566
          %v694 = vpop.f32.mrf.mxu0
          %v695 = vadd.f32 0.0, %v694
          %696 = vmatmul.f32.gmra.mxu0 %v569
          %v697 = vpop.f32.mrf.mxu0
          %v698 = vadd.f32 0.0, %v697
          %699 = vdwg.mxu0
          %701 = vset.pattern.permute.xlu0 0
          %702 = vperm.xlu0 %701, %v510
          %v703 = vpop.permute.xlu0 %702
          %706 = vset.pattern.permute.xlu0 0
          %707 = vperm.xlu0 %706, %v511
          %v708 = vpop.permute.xlu0 %707
          %711 = vset.pattern.permute.xlu0 0
          %712 = vperm.xlu0 %711, %v512
          %v713 = vpop.permute.xlu0 %712
          %716 = vset.pattern.permute.xlu0 0
          %717 = vperm.xlu0 %716, %v513
          %v718 = vpop.permute.xlu0 %717
          %v720 = vadd.f32 %v703, %v602
          %v721 = vadd.f32 %v703, %v631
          %v722 = vadd.f32 %v703, %v660
          %v723 = vadd.f32 %v703, %v689
          %v724 = vadd.f32 %v708, %v605
          %v725 = vadd.f32 %v708, %v634
          %v726 = vadd.f32 %v708, %v663
          %v727 = vadd.f32 %v708, %v692
          %v728 = vadd.f32 %v713, %v608
          %v729 = vadd.f32 %v713, %v637
          %v730 = vadd.f32 %v713, %v666
          %v731 = vadd.f32 %v713, %v695
          %v732 = vadd.f32 %v718, %v611
          %v733 = vadd.f32 %v718, %v640
          %v734 = vadd.f32 %v718, %v669
          %v735 = vadd.f32 %v718, %v698
          %736 = vst [vmem:[#allocation2] sm:$0xff] %v720
          %737 = vst [vmem:[#allocation2 + $0x8] sm:$0xff] %v721
          %738 = vst [vmem:[#allocation2 + $0x10] sm:$0xff] %v722
          %739 = vst [vmem:[#allocation2 + $0x18] sm:$0xff] %v723
          %740 = vst [vmem:[#allocation2 + $0x20] sm:$0xff] %v724
          %741 = vst [vmem:[#allocation2 + $0x28] sm:$0xff] %v725
          %742 = vst [vmem:[#allocation2 + $0x30] sm:$0xff] %v726
          %743 = vst [vmem:[#allocation2 + $0x38] sm:$0xff] %v727
          %744 = vst [vmem:[#allocation2 + $0x40] sm:$0xff] %v728
          %745 = vst [vmem:[#allocation2 + $0x48] sm:$0xff] %v729
          %746 = vst [vmem:[#allocation2 + $0x50] sm:$0xff] %v730
          %747 = vst [vmem:[#allocation2 + $0x58] sm:$0xff] %v731
          %748 = vst [vmem:[#allocation2 + $0x60] sm:$0xff] %v732
          %749 = vst [vmem:[#allocation2 + $0x68] sm:$0xff] %v733
          %750 = vst [vmem:[#allocation2 + $0x70] sm:$0xff] %v734
          %751 = vst [vmem:[#allocation2 + $0x78] sm:$0xff] %v735
        $region100: #{tpu_custom_call.1} parent=67 // pred_fallthru
          _
        %v752 = vld [vmem:[#allocation3] sm:$0xff]
        %v753 = vld [vmem:[#allocation3 + $0x8] sm:$0xff]
        %v754 = vld [vmem:[#allocation3 + $0x10] sm:$0xff]
        %v755 = vld [vmem:[#allocation3 + $0x18] sm:$0xff]
        %756 = vrot.lane.b32.xlu0 %v752, 34
        %v757 = vpop.permute.xlu0 %756
        %758 = vrot.lane.b32.xlu0 %v753, 34
        %v759 = vpop.permute.xlu0 %758
        %760 = vrot.lane.b32.xlu0 %v754, 34
        %v761 = vpop.permute.xlu0 %760
        %762 = vrot.lane.b32.xlu0 %v755, 34
        %v763 = vpop.permute.xlu0 %762
        %v764 = vlaneseq
        %v765 = vand.u32 %v764, 127
        %vm766 = vcmp.lt.s32.totalorder %v765, 34
        %v767 = vsel %vm766, %v761, %v763
        %v768 = vsel %vm766, %v759, %v761
        %v769 = vsel %vm766, %v757, %v759
        %v770 = vsel %vm766, %v763, %v757
        %v771 = vld [vmem:[#allocation14] ss:$8 sm:$0xf]
        %v773 = vperm.slane %v771, 0
        %v774 = vperm.slane %v771, 1
        %v775 = vperm.slane %v771, 2
        %v776 = vperm.slane %v771, 3
        %v781 = vmul.f32 %v770, %v773
        %v782 = vmul.f32 %v769, %v774
        %v783 = vmul.f32 %v768, %v775
        %v784 = vmul.f32 %v767, %v776
        %785 = vst [vmem:[#allocation7] sm:$0xff] %v781
        %786 = vst [vmem:[#allocation7 + $0x8] sm:$0xff] %v782
        %787 = vst [vmem:[#allocation7 + $0x10] sm:$0xff] %v783
        %788 = vst [vmem:[#allocation7 + $0x18] sm:$0xff] %v784
        %789 = vrot.lane.b32.xlu0 %v752, 33
        %v790 = vpop.permute.xlu0 %789
        %791 = vrot.lane.b32.xlu0 %v753, 33
        %v792 = vpop.permute.xlu0 %791
        %793 = vrot.lane.b32.xlu0 %v754, 33
        %v794 = vpop.permute.xlu0 %793
        %795 = vrot.lane.b32.xlu0 %v755, 33
        %v796 = vpop.permute.xlu0 %795
        %vm797 = vcmp.lt.s32.totalorder %v765, 33
        %v798 = vsel %vm797, %v794, %v796
        %v799 = vsel %vm797, %v792, %v794
        %v800 = vsel %vm797, %v790, %v792
        %v801 = vsel %vm797, %v796, %v790
        %s802 = scalar_lea.vmem [#allocation14], 1
        %v803 = vld [vmem:[%s802] ss:$8 sm:$0xf]
        %v805 = vperm.slane %v803, 0
        %v806 = vperm.slane %v803, 1
        %v807 = vperm.slane %v803, 2
        %v808 = vperm.slane %v803, 3
        %v813 = vmul.f32 %v801, %v805
        %v814 = vmul.f32 %v800, %v806
        %v815 = vmul.f32 %v799, %v807
        %v816 = vmul.f32 %v798, %v808
        %817 = vst [vmem:[#allocation7 + $0x20] sm:$0xff] %v813
        %818 = vst [vmem:[#allocation7 + $0x28] sm:$0xff] %v814
        %819 = vst [vmem:[#allocation7 + $0x30] sm:$0xff] %v815
        %820 = vst [vmem:[#allocation7 + $0x38] sm:$0xff] %v816
        %821 = vrot.lane.b32.xlu0 %v752, 32
        %v822 = vpop.permute.xlu0 %821
        %823 = vrot.lane.b32.xlu0 %v753, 32
        %v824 = vpop.permute.xlu0 %823
        %825 = vrot.lane.b32.xlu0 %v754, 32
        %v826 = vpop.permute.xlu0 %825
        %827 = vrot.lane.b32.xlu0 %v755, 32
        %v828 = vpop.permute.xlu0 %827
        %vm829 = vcmp.lt.s32.totalorder %v765, 32
        %v830 = vsel %vm829, %v826, %v828
        %v831 = vsel %vm829, %v824, %v826
        %v832 = vsel %vm829, %v822, %v824
        %v833 = vsel %vm829, %v828, %v822
        %s834 = scalar_lea.vmem [#allocation14], 2
        %v835 = vld [vmem:[%s834] ss:$8 sm:$0xf]
        %v837 = vperm.slane %v835, 0
        %v838 = vperm.slane %v835, 1
        %v839 = vperm.slane %v835, 2
        %v840 = vperm.slane %v835, 3
        %v845 = vmul.f32 %v833, %v837
        %v846 = vmul.f32 %v832, %v838
        %v847 = vmul.f32 %v831, %v839
        %v848 = vmul.f32 %v830, %v840
        %849 = vst [vmem:[#allocation7 + $0x40] sm:$0xff] %v845
        %850 = vst [vmem:[#allocation7 + $0x48] sm:$0xff] %v846
        %851 = vst [vmem:[#allocation7 + $0x50] sm:$0xff] %v847
        %852 = vst [vmem:[#allocation7 + $0x58] sm:$0xff] %v848
        %853 = vrot.lane.b32.xlu0 %v752, 31
        %v854 = vpop.permute.xlu0 %853
        %855 = vrot.lane.b32.xlu0 %v753, 31
        %v856 = vpop.permute.xlu0 %855
        %857 = vrot.lane.b32.xlu0 %v754, 31
        %v858 = vpop.permute.xlu0 %857
        %859 = vrot.lane.b32.xlu0 %v755, 31
        %v860 = vpop.permute.xlu0 %859
        %vm861 = vcmp.lt.s32.totalorder %v765, 31
        %v862 = vsel %vm861, %v858, %v860
        %v863 = vsel %vm861, %v856, %v858
        %v864 = vsel %vm861, %v854, %v856
        %v865 = vsel %vm861, %v860, %v854
        %s866 = scalar_lea.vmem [#allocation14], 3
        %v867 = vld [vmem:[%s866] ss:$8 sm:$0xf]
        %v869 = vperm.slane %v867, 0
        %v870 = vperm.slane %v867, 1
        %v871 = vperm.slane %v867, 2
        %v872 = vperm.slane %v867, 3
        %v877 = vmul.f32 %v865, %v869
        %v878 = vmul.f32 %v864, %v870
        %v879 = vmul.f32 %v863, %v871
        %v880 = vmul.f32 %v862, %v872
        %881 = vst [vmem:[#allocation7 + $0x60] sm:$0xff] %v877
        %882 = vst [vmem:[#allocation7 + $0x68] sm:$0xff] %v878
        %883 = vst [vmem:[#allocation7 + $0x70] sm:$0xff] %v879
        %884 = vst [vmem:[#allocation7 + $0x78] sm:$0xff] %v880
        %885 = vrot.lane.b32.xlu0 %v752, 30
        %v886 = vpop.permute.xlu0 %885
        %887 = vrot.lane.b32.xlu0 %v753, 30
        %v888 = vpop.permute.xlu0 %887
        %889 = vrot.lane.b32.xlu0 %v754, 30
        %v890 = vpop.permute.xlu0 %889
        %891 = vrot.lane.b32.xlu0 %v755, 30
        %v892 = vpop.permute.xlu0 %891
        %vm893 = vcmp.lt.s32.totalorder %v765, 30
        %v894 = vsel %vm893, %v890, %v892
        %v895 = vsel %vm893, %v888, %v890
        %v896 = vsel %vm893, %v886, %v888
        %v897 = vsel %vm893, %v892, %v886
        %s898 = scalar_lea.vmem [#allocation14], 4
        %v899 = vld [vmem:[%s898] ss:$8 sm:$0xf]
        %v901 = vperm.slane %v899, 0
        %v902 = vperm.slane %v899, 1
        %v903 = vperm.slane %v899, 2
        %v904 = vperm.slane %v899, 3
        %v909 = vmul.f32 %v897, %v901
        %v910 = vmul.f32 %v896, %v902
        %v911 = vmul.f32 %v895, %v903
        %v912 = vmul.f32 %v894, %v904
        %913 = vst [vmem:[#allocation7 + $0x80] sm:$0xff] %v909
        %914 = vst [vmem:[#allocation7 + $0x88] sm:$0xff] %v910
        %915 = vst [vmem:[#allocation7 + $0x90] sm:$0xff] %v911
        %916 = vst [vmem:[#allocation7 + $0x98] sm:$0xff] %v912
        %917 = vrot.lane.b32.xlu0 %v752, 18
        %v918 = vpop.permute.xlu0 %917
        %919 = vrot.lane.b32.xlu0 %v753, 18
        %v920 = vpop.permute.xlu0 %919
        %921 = vrot.lane.b32.xlu0 %v754, 18
        %v922 = vpop.permute.xlu0 %921
        %923 = vrot.lane.b32.xlu0 %v755, 18
        %v924 = vpop.permute.xlu0 %923
        %vm925 = vcmp.lt.s32.totalorder %v765, 18
        %v926 = vsel %vm925, %v922, %v924
        %v927 = vsel %vm925, %v920, %v922
        %v928 = vsel %vm925, %v918, %v920
        %v929 = vsel %vm925, %v924, %v918
        %s930 = scalar_lea.vmem [#allocation14], 5
        %v931 = vld [vmem:[%s930] ss:$8 sm:$0xf]
        %v933 = vperm.slane %v931, 0
        %v934 = vperm.slane %v931, 1
        %v935 = vperm.slane %v931, 2
        %v936 = vperm.slane %v931, 3
        %v941 = vmul.f32 %v929, %v933
        %v942 = vmul.f32 %v928, %v934
        %v943 = vmul.f32 %v927, %v935
        %v944 = vmul.f32 %v926, %v936
        %945 = vst [vmem:[#allocation7 + $0xa0] sm:$0xff] %v941
        %946 = vst [vmem:[#allocation7 + $0xa8] sm:$0xff] %v942
        %947 = vst [vmem:[#allocation7 + $0xb0] sm:$0xff] %v943
        %948 = vst [vmem:[#allocation7 + $0xb8] sm:$0xff] %v944
        %949 = vrot.lane.b32.xlu0 %v752, 17
        %v950 = vpop.permute.xlu0 %949
        %951 = vrot.lane.b32.xlu0 %v753, 17
        %v952 = vpop.permute.xlu0 %951
        %953 = vrot.lane.b32.xlu0 %v754, 17
        %v954 = vpop.permute.xlu0 %953
        %955 = vrot.lane.b32.xlu0 %v755, 17
        %v956 = vpop.permute.xlu0 %955
        %vm957 = vcmp.lt.s32.totalorder %v765, 17
        %v958 = vsel %vm957, %v954, %v956
        %v959 = vsel %vm957, %v952, %v954
        %v960 = vsel %vm957, %v950, %v952
        %v961 = vsel %vm957, %v956, %v950
        %s962 = scalar_lea.vmem [#allocation14], 6
        %v963 = vld [vmem:[%s962] ss:$8 sm:$0xf]
        %v965 = vperm.slane %v963, 0
        %v966 = vperm.slane %v963, 1
        %v967 = vperm.slane %v963, 2
        %v968 = vperm.slane %v963, 3
        %v973 = vmul.f32 %v961, %v965
        %v974 = vmul.f32 %v960, %v966
        %v975 = vmul.f32 %v959, %v967
        %v976 = vmul.f32 %v958, %v968
        %977 = vst [vmem:[#allocation7 + $0xc0] sm:$0xff] %v973
        %978 = vst [vmem:[#allocation7 + $0xc8] sm:$0xff] %v974
        %979 = vst [vmem:[#allocation7 + $0xd0] sm:$0xff] %v975
        %980 = vst [vmem:[#allocation7 + $0xd8] sm:$0xff] %v976
        %981 = vrot.lane.b32.xlu0 %v752, 16
        %v982 = vpop.permute.xlu0 %981
        %983 = vrot.lane.b32.xlu0 %v753, 16
        %v984 = vpop.permute.xlu0 %983
        %985 = vrot.lane.b32.xlu0 %v754, 16
        %v986 = vpop.permute.xlu0 %985
        %987 = vrot.lane.b32.xlu0 %v755, 16
        %v988 = vpop.permute.xlu0 %987
        %vm989 = vcmp.lt.s32.totalorder %v765, 16
        %v990 = vsel %vm989, %v986, %v988
        %v991 = vsel %vm989, %v984, %v986
        %v992 = vsel %vm989, %v982, %v984
        %v993 = vsel %vm989, %v988, %v982
        %s994 = scalar_lea.vmem [#allocation14], 7
        %v995 = vld [vmem:[%s994] ss:$8 sm:$0xf]
        %v997 = vperm.slane %v995, 0
        %v998 = vperm.slane %v995, 1
        %v999 = vperm.slane %v995, 2
        %v1000 = vperm.slane %v995, 3
        %v1005 = vmul.f32 %v993, %v997
        %v1006 = vmul.f32 %v992, %v998
        %v1007 = vmul.f32 %v991, %v999
        %v1008 = vmul.f32 %v990, %v1000
        %1009 = vst [vmem:[#allocation7 + $0xe0] sm:$0xff] %v1005
        %1010 = vst [vmem:[#allocation7 + $0xe8] sm:$0xff] %v1006
        %1011 = vst [vmem:[#allocation7 + $0xf0] sm:$0xff] %v1007
        %1012 = vst [vmem:[#allocation7 + $0xf8] sm:$0xff] %v1008
        %1013 = vrot.lane.b32.xlu0 %v752, 15
        %v1014 = vpop.permute.xlu0 %1013
        %1015 = vrot.lane.b32.xlu0 %v753, 15
        %v1016 = vpop.permute.xlu0 %1015
        %1017 = vrot.lane.b32.xlu0 %v754, 15
        %v1018 = vpop.permute.xlu0 %1017
        %1019 = vrot.lane.b32.xlu0 %v755, 15
        %v1020 = vpop.permute.xlu0 %1019
        %vm1021 = vcmp.lt.s32.totalorder %v765, 15
        %v1022 = vsel %vm1021, %v1018, %v1020
        %v1023 = vsel %vm1021, %v1016, %v1018
        %v1024 = vsel %vm1021, %v1014, %v1016
        %v1025 = vsel %vm1021, %v1020, %v1014
        %s1026 = scalar_lea.vmem [#allocation14], 32
        %v1027 = vld [vmem:[%s1026] ss:$8 sm:$0xf]
        %v1029 = vperm.slane %v1027, 0
        %v1030 = vperm.slane %v1027, 1
        %v1031 = vperm.slane %v1027, 2
        %v1032 = vperm.slane %v1027, 3
        %v1037 = vmul.f32 %v1025, %v1029
        %v1038 = vmul.f32 %v1024, %v1030
        %v1039 = vmul.f32 %v1023, %v1031
        %v1040 = vmul.f32 %v1022, %v1032
        %1041 = vst [vmem:[#allocation7 + $0x100] sm:$0xff] %v1037
        %1042 = vst [vmem:[#allocation7 + $0x108] sm:$0xff] %v1038
        %1043 = vst [vmem:[#allocation7 + $0x110] sm:$0xff] %v1039
        %1044 = vst [vmem:[#allocation7 + $0x118] sm:$0xff] %v1040
        %1045 = vrot.lane.b32.xlu0 %v752, 14
        %v1046 = vpop.permute.xlu0 %1045
        %1047 = vrot.lane.b32.xlu0 %v753, 14
        %v1048 = vpop.permute.xlu0 %1047
        %1049 = vrot.lane.b32.xlu0 %v754, 14
        %v1050 = vpop.permute.xlu0 %1049
        %1051 = vrot.lane.b32.xlu0 %v755, 14
        %v1052 = vpop.permute.xlu0 %1051
        %vm1053 = vcmp.lt.s32.totalorder %v765, 14
        %v1054 = vsel %vm1053, %v1050, %v1052
        %v1055 = vsel %vm1053, %v1048, %v1050
        %v1056 = vsel %vm1053, %v1046, %v1048
        %v1057 = vsel %vm1053, %v1052, %v1046
        %s1058 = scalar_lea.vmem [#allocation14], 33
        %v1059 = vld [vmem:[%s1058] ss:$8 sm:$0xf]
        %v1061 = vperm.slane %v1059, 0
        %v1062 = vperm.slane %v1059, 1
        %v1063 = vperm.slane %v1059, 2
        %v1064 = vperm.slane %v1059, 3
        %v1069 = vmul.f32 %v1057, %v1061
        %v1070 = vmul.f32 %v1056, %v1062
        %v1071 = vmul.f32 %v1055, %v1063
        %v1072 = vmul.f32 %v1054, %v1064
        %1073 = vst [vmem:[#allocation7 + $0x120] sm:$0xff] %v1069
        %1074 = vst [vmem:[#allocation7 + $0x128] sm:$0xff] %v1070
        %1075 = vst [vmem:[#allocation7 + $0x130] sm:$0xff] %v1071
        %1076 = vst [vmem:[#allocation7 + $0x138] sm:$0xff] %v1072
        %1077 = vrot.lane.b32.xlu0 %v752, 2
        %v1078 = vpop.permute.xlu0 %1077
        %1079 = vrot.lane.b32.xlu0 %v753, 2
        %v1080 = vpop.permute.xlu0 %1079
        %1081 = vrot.lane.b32.xlu0 %v754, 2
        %v1082 = vpop.permute.xlu0 %1081
        %1083 = vrot.lane.b32.xlu0 %v755, 2
        %v1084 = vpop.permute.xlu0 %1083
        %vm1085 = vcmp.lt.s32.totalorder %v765, 2
        %v1086 = vsel %vm1085, %v1082, %v1084
        %v1087 = vsel %vm1085, %v1080, %v1082
        %v1088 = vsel %vm1085, %v1078, %v1080
        %v1089 = vsel %vm1085, %v1084, %v1078
        %s1090 = scalar_lea.vmem [#allocation14], 34
        %v1091 = vld [vmem:[%s1090] ss:$8 sm:$0xf]
        %v1093 = vperm.slane %v1091, 0
        %v1094 = vperm.slane %v1091, 1
        %v1095 = vperm.slane %v1091, 2
        %v1096 = vperm.slane %v1091, 3
        %v1101 = vmul.f32 %v1089, %v1093
        %v1102 = vmul.f32 %v1088, %v1094
        %v1103 = vmul.f32 %v1087, %v1095
        %v1104 = vmul.f32 %v1086, %v1096
        %1105 = vst [vmem:[#allocation7 + $0x140] sm:$0xff] %v1101
        %1106 = vst [vmem:[#allocation7 + $0x148] sm:$0xff] %v1102
        %1107 = vst [vmem:[#allocation7 + $0x150] sm:$0xff] %v1103
        %1108 = vst [vmem:[#allocation7 + $0x158] sm:$0xff] %v1104
        %1109 = vrot.lane.b32.xlu0 %v752, 1
        %v1110 = vpop.permute.xlu0 %1109
        %1111 = vrot.lane.b32.xlu0 %v753, 1
        %v1112 = vpop.permute.xlu0 %1111
        %1113 = vrot.lane.b32.xlu0 %v754, 1
        %v1114 = vpop.permute.xlu0 %1113
        %1115 = vrot.lane.b32.xlu0 %v755, 1
        %v1116 = vpop.permute.xlu0 %1115
        %vm1117 = vcmp.lt.s32.totalorder %v765, 1
        %v1118 = vsel %vm1117, %v1114, %v1116
        %v1119 = vsel %vm1117, %v1112, %v1114
        %v1120 = vsel %vm1117, %v1110, %v1112
        %v1121 = vsel %vm1117, %v1116, %v1110
        %s1122 = scalar_lea.vmem [#allocation14], 35
        %v1123 = vld [vmem:[%s1122] ss:$8 sm:$0xf]
        %v1125 = vperm.slane %v1123, 0
        %v1126 = vperm.slane %v1123, 1
        %v1127 = vperm.slane %v1123, 2
        %v1128 = vperm.slane %v1123, 3
        %v1133 = vmul.f32 %v1121, %v1125
        %v1134 = vmul.f32 %v1120, %v1126
        %v1135 = vmul.f32 %v1119, %v1127
        %v1136 = vmul.f32 %v1118, %v1128
        %1137 = vst [vmem:[#allocation7 + $0x160] sm:$0xff] %v1133
        %1138 = vst [vmem:[#allocation7 + $0x168] sm:$0xff] %v1134
        %1139 = vst [vmem:[#allocation7 + $0x170] sm:$0xff] %v1135
        %1140 = vst [vmem:[#allocation7 + $0x178] sm:$0xff] %v1136
        %1141 = vst [vmem:[#allocation7 + $0x180] sm:$0xff] %v752
        %1142 = vst [vmem:[#allocation7 + $0x188] sm:$0xff] %v753
        %1143 = vst [vmem:[#allocation7 + $0x190] sm:$0xff] %v754
        %1144 = vst [vmem:[#allocation7 + $0x198] sm:$0xff] %v755
        %1145 = vrot.lane.b32.xlu0 %v752, 127
        %v1146 = vpop.permute.xlu0 %1145
        %1147 = vrot.lane.b32.xlu0 %v753, 127
        %v1148 = vpop.permute.xlu0 %1147
        %1149 = vrot.lane.b32.xlu0 %v754, 127
        %v1150 = vpop.permute.xlu0 %1149
        %1151 = vrot.lane.b32.xlu0 %v755, 127
        %v1152 = vpop.permute.xlu0 %1151
        %vm1153 = vcmp.lt.s32.totalorder %v765, 127
        %v1154 = vsel %vm1153, %v1150, %v1152
        %v1155 = vsel %vm1153, %v1148, %v1150
        %v1156 = vsel %vm1153, %v1146, %v1148
        %v1157 = vsel %vm1153, %v1152, %v1146
        %s1158 = scalar_lea.vmem [#allocation14], 37
        %v1159 = vld [vmem:[%s1158] ss:$8 sm:$0xf]
        %v1161 = vperm.slane %v1159, 0
        %v1162 = vperm.slane %v1159, 1
        %v1163 = vperm.slane %v1159, 2
        %v1164 = vperm.slane %v1159, 3
        %v1169 = vmul.f32 %v1156, %v1161
        %v1170 = vmul.f32 %v1155, %v1162
        %v1171 = vmul.f32 %v1154, %v1163
        %v1172 = vmul.f32 %v1157, %v1164
        %1173 = vst [vmem:[#allocation7 + $0x1a0] sm:$0xff] %v1169
        %1174 = vst [vmem:[#allocation7 + $0x1a8] sm:$0xff] %v1170
        %1175 = vst [vmem:[#allocation7 + $0x1b0] sm:$0xff] %v1171
        %1176 = vst [vmem:[#allocation7 + $0x1b8] sm:$0xff] %v1172
        %1177 = vrot.lane.b32.xlu0 %v752, 126
        %v1178 = vpop.permute.xlu0 %1177
        %1179 = vrot.lane.b32.xlu0 %v753, 126
        %v1180 = vpop.permute.xlu0 %1179
        %1181 = vrot.lane.b32.xlu0 %v754, 126
        %v1182 = vpop.permute.xlu0 %1181
        %1183 = vrot.lane.b32.xlu0 %v755, 126
        %v1184 = vpop.permute.xlu0 %1183
        %vm1185 = vcmp.lt.s32.totalorder %v765, 126
        %v1186 = vsel %vm1185, %v1182, %v1184
        %v1187 = vsel %vm1185, %v1180, %v1182
        %v1188 = vsel %vm1185, %v1178, %v1180
        %v1189 = vsel %vm1185, %v1184, %v1178
        %s1190 = scalar_lea.vmem [#allocation14], 38
        %v1191 = vld [vmem:[%s1190] ss:$8 sm:$0xf]
        %v1193 = vperm.slane %v1191, 0
        %v1194 = vperm.slane %v1191, 1
        %v1195 = vperm.slane %v1191, 2
        %v1196 = vperm.slane %v1191, 3
        %v1201 = vmul.f32 %v1188, %v1193
        %v1202 = vmul.f32 %v1187, %v1194
        %v1203 = vmul.f32 %v1186, %v1195
        %v1204 = vmul.f32 %v1189, %v1196
        %1205 = vst [vmem:[#allocation7 + $0x1c0] sm:$0xff] %v1201
        %1206 = vst [vmem:[#allocation7 + $0x1c8] sm:$0xff] %v1202
        %1207 = vst [vmem:[#allocation7 + $0x1d0] sm:$0xff] %v1203
        %1208 = vst [vmem:[#allocation7 + $0x1d8] sm:$0xff] %v1204
        %1209 = vrot.lane.b32.xlu0 %v752, 114
        %v1210 = vpop.permute.xlu0 %1209
        %1211 = vrot.lane.b32.xlu0 %v753, 114
        %v1212 = vpop.permute.xlu0 %1211
        %1213 = vrot.lane.b32.xlu0 %v754, 114
        %v1214 = vpop.permute.xlu0 %1213
        %1215 = vrot.lane.b32.xlu0 %v755, 114
        %v1216 = vpop.permute.xlu0 %1215
        %vm1217 = vcmp.lt.s32.totalorder %v765, 114
        %v1218 = vsel %vm1217, %v1214, %v1216
        %v1219 = vsel %vm1217, %v1212, %v1214
        %v1220 = vsel %vm1217, %v1210, %v1212
        %v1221 = vsel %vm1217, %v1216, %v1210
        %s1222 = scalar_lea.vmem [#allocation14], 39
        %v1223 = vld [vmem:[%s1222] ss:$8 sm:$0xf]
        %v1225 = vperm.slane %v1223, 0
        %v1226 = vperm.slane %v1223, 1
        %v1227 = vperm.slane %v1223, 2
        %v1228 = vperm.slane %v1223, 3
        %v1233 = vmul.f32 %v1220, %v1225
        %v1234 = vmul.f32 %v1219, %v1226
        %v1235 = vmul.f32 %v1218, %v1227
        %v1236 = vmul.f32 %v1221, %v1228
        %1237 = vst [vmem:[#allocation7 + $0x1e0] sm:$0xff] %v1233
        %1238 = vst [vmem:[#allocation7 + $0x1e8] sm:$0xff] %v1234
        %1239 = vst [vmem:[#allocation7 + $0x1f0] sm:$0xff] %v1235
        %1240 = vst [vmem:[#allocation7 + $0x1f8] sm:$0xff] %v1236
        %1241 = vrot.lane.b32.xlu0 %v752, 113
        %v1242 = vpop.permute.xlu0 %1241
        %1243 = vrot.lane.b32.xlu0 %v753, 113
        %v1244 = vpop.permute.xlu0 %1243
        %1245 = vrot.lane.b32.xlu0 %v754, 113
        %v1246 = vpop.permute.xlu0 %1245
        %1247 = vrot.lane.b32.xlu0 %v755, 113
        %v1248 = vpop.permute.xlu0 %1247
        %vm1249 = vcmp.lt.s32.totalorder %v765, 113
        %v1250 = vsel %vm1249, %v1246, %v1248
        %v1251 = vsel %vm1249, %v1244, %v1246
        %v1252 = vsel %vm1249, %v1242, %v1244
        %v1253 = vsel %vm1249, %v1248, %v1242
        %s1254 = scalar_lea.vmem [#allocation14], 64
        %v1255 = vld [vmem:[%s1254] ss:$8 sm:$0xf]
        %v1257 = vperm.slane %v1255, 0
        %v1258 = vperm.slane %v1255, 1
        %v1259 = vperm.slane %v1255, 2
        %v1260 = vperm.slane %v1255, 3
        %v1265 = vmul.f32 %v1252, %v1257
        %v1266 = vmul.f32 %v1251, %v1258
        %v1267 = vmul.f32 %v1250, %v1259
        %v1268 = vmul.f32 %v1253, %v1260
        %1269 = vst [vmem:[#allocation7 + $0x200] sm:$0xff] %v1265
        %1270 = vst [vmem:[#allocation7 + $0x208] sm:$0xff] %v1266
        %1271 = vst [vmem:[#allocation7 + $0x210] sm:$0xff] %v1267
        %1272 = vst [vmem:[#allocation7 + $0x218] sm:$0xff] %v1268
        %1273 = vrot.lane.b32.xlu0 %v752, 112
        %v1274 = vpop.permute.xlu0 %1273
        %1275 = vrot.lane.b32.xlu0 %v753, 112
        %v1276 = vpop.permute.xlu0 %1275
        %1277 = vrot.lane.b32.xlu0 %v754, 112
        %v1278 = vpop.permute.xlu0 %1277
        %1279 = vrot.lane.b32.xlu0 %v755, 112
        %v1280 = vpop.permute.xlu0 %1279
        %vm1281 = vcmp.lt.s32.totalorder %v765, 112
        %v1282 = vsel %vm1281, %v1278, %v1280
        %v1283 = vsel %vm1281, %v1276, %v1278
        %v1284 = vsel %vm1281, %v1274, %v1276
        %v1285 = vsel %vm1281, %v1280, %v1274
        %s1286 = scalar_lea.vmem [#allocation14], 65
        %v1287 = vld [vmem:[%s1286] ss:$8 sm:$0xf]
        %v1289 = vperm.slane %v1287, 0
        %v1290 = vperm.slane %v1287, 1
        %v1291 = vperm.slane %v1287, 2
        %v1292 = vperm.slane %v1287, 3
        %v1297 = vmul.f32 %v1284, %v1289
        %v1298 = vmul.f32 %v1283, %v1290
        %v1299 = vmul.f32 %v1282, %v1291
        %v1300 = vmul.f32 %v1285, %v1292
        %1301 = vst [vmem:[#allocation7 + $0x220] sm:$0xff] %v1297
        %1302 = vst [vmem:[#allocation7 + $0x228] sm:$0xff] %v1298
        %1303 = vst [vmem:[#allocation7 + $0x230] sm:$0xff] %v1299
        %1304 = vst [vmem:[#allocation7 + $0x238] sm:$0xff] %v1300
        %1305 = vrot.lane.b32.xlu0 %v752, 111
        %v1306 = vpop.permute.xlu0 %1305
        %1307 = vrot.lane.b32.xlu0 %v753, 111
        %v1308 = vpop.permute.xlu0 %1307
        %1309 = vrot.lane.b32.xlu0 %v754, 111
        %v1310 = vpop.permute.xlu0 %1309
        %1311 = vrot.lane.b32.xlu0 %v755, 111
        %v1312 = vpop.permute.xlu0 %1311
        %vm1313 = vcmp.lt.s32.totalorder %v765, 111
        %v1314 = vsel %vm1313, %v1310, %v1312
        %v1315 = vsel %vm1313, %v1308, %v1310
        %v1316 = vsel %vm1313, %v1306, %v1308
        %v1317 = vsel %vm1313, %v1312, %v1306
        %s1318 = scalar_lea.vmem [#allocation14], 66
        %v1319 = vld [vmem:[%s1318] ss:$8 sm:$0xf]
        %v1321 = vperm.slane %v1319, 0
        %v1322 = vperm.slane %v1319, 1
        %v1323 = vperm.slane %v1319, 2
        %v1324 = vperm.slane %v1319, 3
        %v1329 = vmul.f32 %v1316, %v1321
        %v1330 = vmul.f32 %v1315, %v1322
        %v1331 = vmul.f32 %v1314, %v1323
        %v1332 = vmul.f32 %v1317, %v1324
        %1333 = vst [vmem:[#allocation7 + $0x240] sm:$0xff] %v1329
        %1334 = vst [vmem:[#allocation7 + $0x248] sm:$0xff] %v1330
        %1335 = vst [vmem:[#allocation7 + $0x250] sm:$0xff] %v1331
        %1336 = vst [vmem:[#allocation7 + $0x258] sm:$0xff] %v1332
        %1337 = vrot.lane.b32.xlu0 %v752, 110
        %v1338 = vpop.permute.xlu0 %1337
        %1339 = vrot.lane.b32.xlu0 %v753, 110
        %v1340 = vpop.permute.xlu0 %1339
        %1341 = vrot.lane.b32.xlu0 %v754, 110
        %v1342 = vpop.permute.xlu0 %1341
        %1343 = vrot.lane.b32.xlu0 %v755, 110
        %v1344 = vpop.permute.xlu0 %1343
        %vm1345 = vcmp.lt.s32.totalorder %v765, 110
        %v1346 = vsel %vm1345, %v1342, %v1344
        %v1347 = vsel %vm1345, %v1340, %v1342
        %v1348 = vsel %vm1345, %v1338, %v1340
        %v1349 = vsel %vm1345, %v1344, %v1338
        %s1350 = scalar_lea.vmem [#allocation14], 67
        %v1351 = vld [vmem:[%s1350] ss:$8 sm:$0xf]
        %v1353 = vperm.slane %v1351, 0
        %v1354 = vperm.slane %v1351, 1
        %v1355 = vperm.slane %v1351, 2
        %v1356 = vperm.slane %v1351, 3
        %v1361 = vmul.f32 %v1348, %v1353
        %v1362 = vmul.f32 %v1347, %v1354
        %v1363 = vmul.f32 %v1346, %v1355
        %v1364 = vmul.f32 %v1349, %v1356
        %1365 = vst [vmem:[#allocation7 + $0x260] sm:$0xff] %v1361
        %1366 = vst [vmem:[#allocation7 + $0x268] sm:$0xff] %v1362
        %1367 = vst [vmem:[#allocation7 + $0x270] sm:$0xff] %v1363
        %1368 = vst [vmem:[#allocation7 + $0x278] sm:$0xff] %v1364
        %1369 = vrot.lane.b32.xlu0 %v752, 98
        %v1370 = vpop.permute.xlu0 %1369
        %1371 = vrot.lane.b32.xlu0 %v753, 98
        %v1372 = vpop.permute.xlu0 %1371
        %1373 = vrot.lane.b32.xlu0 %v754, 98
        %v1374 = vpop.permute.xlu0 %1373
        %1375 = vrot.lane.b32.xlu0 %v755, 98
        %v1376 = vpop.permute.xlu0 %1375
        %vm1377 = vcmp.lt.s32.totalorder %v765, 98
        %v1378 = vsel %vm1377, %v1374, %v1376
        %v1379 = vsel %vm1377, %v1372, %v1374
        %v1380 = vsel %vm1377, %v1370, %v1372
        %v1381 = vsel %vm1377, %v1376, %v1370
        %s1382 = scalar_lea.vmem [#allocation14], 68
        %v1383 = vld [vmem:[%s1382] ss:$8 sm:$0xf]
        %v1385 = vperm.slane %v1383, 0
        %v1386 = vperm.slane %v1383, 1
        %v1387 = vperm.slane %v1383, 2
        %v1388 = vperm.slane %v1383, 3
        %v1393 = vmul.f32 %v1380, %v1385
        %v1394 = vmul.f32 %v1379, %v1386
        %v1395 = vmul.f32 %v1378, %v1387
        %v1396 = vmul.f32 %v1381, %v1388
        %1397 = vst [vmem:[#allocation7 + $0x280] sm:$0xff] %v1393
        %1398 = vst [vmem:[#allocation7 + $0x288] sm:$0xff] %v1394
        %1399 = vst [vmem:[#allocation7 + $0x290] sm:$0xff] %v1395
        %1400 = vst [vmem:[#allocation7 + $0x298] sm:$0xff] %v1396
        %1401 = vrot.lane.b32.xlu0 %v752, 97
        %v1402 = vpop.permute.xlu0 %1401
        %1403 = vrot.lane.b32.xlu0 %v753, 97
        %v1404 = vpop.permute.xlu0 %1403
        %1405 = vrot.lane.b32.xlu0 %v754, 97
        %v1406 = vpop.permute.xlu0 %1405
        %1407 = vrot.lane.b32.xlu0 %v755, 97
        %v1408 = vpop.permute.xlu0 %1407
        %vm1409 = vcmp.lt.s32.totalorder %v765, 97
        %v1410 = vsel %vm1409, %v1406, %v1408
        %v1411 = vsel %vm1409, %v1404, %v1406
        %v1412 = vsel %vm1409, %v1402, %v1404
        %v1413 = vsel %vm1409, %v1408, %v1402
        %s1414 = scalar_lea.vmem [#allocation14], 69
        %v1415 = vld [vmem:[%s1414] ss:$8 sm:$0xf]
        %v1417 = vperm.slane %v1415, 0
        %v1418 = vperm.slane %v1415, 1
        %v1419 = vperm.slane %v1415, 2
        %v1420 = vperm.slane %v1415, 3
        %v1425 = vmul.f32 %v1412, %v1417
        %v1426 = vmul.f32 %v1411, %v1418
        %v1427 = vmul.f32 %v1410, %v1419
        %v1428 = vmul.f32 %v1413, %v1420
        %1429 = vst [vmem:[#allocation7 + $0x2a0] sm:$0xff] %v1425
        %1430 = vst [vmem:[#allocation7 + $0x2a8] sm:$0xff] %v1426
        %1431 = vst [vmem:[#allocation7 + $0x2b0] sm:$0xff] %v1427
        %1432 = vst [vmem:[#allocation7 + $0x2b8] sm:$0xff] %v1428
        %1433 = vrot.lane.b32.xlu0 %v752, 96
        %v1434 = vpop.permute.xlu0 %1433
        %1435 = vrot.lane.b32.xlu0 %v753, 96
        %v1436 = vpop.permute.xlu0 %1435
        %1437 = vrot.lane.b32.xlu0 %v754, 96
        %v1438 = vpop.permute.xlu0 %1437
        %1439 = vrot.lane.b32.xlu0 %v755, 96
        %v1440 = vpop.permute.xlu0 %1439
        %vm1441 = vcmp.lt.s32.totalorder %v765, 96
        %v1442 = vsel %vm1441, %v1438, %v1440
        %v1443 = vsel %vm1441, %v1436, %v1438
        %v1444 = vsel %vm1441, %v1434, %v1436
        %v1445 = vsel %vm1441, %v1440, %v1434
        %s1446 = scalar_lea.vmem [#allocation14], 70
        %v1447 = vld [vmem:[%s1446] ss:$8 sm:$0xf]
        %v1449 = vperm.slane %v1447, 0
        %v1450 = vperm.slane %v1447, 1
        %v1451 = vperm.slane %v1447, 2
        %v1452 = vperm.slane %v1447, 3
        %v1457 = vmul.f32 %v1444, %v1449
        %v1458 = vmul.f32 %v1443, %v1450
        %v1459 = vmul.f32 %v1442, %v1451
        %v1460 = vmul.f32 %v1445, %v1452
        %1461 = vst [vmem:[#allocation7 + $0x2c0] sm:$0xff] %v1457
        %1462 = vst [vmem:[#allocation7 + $0x2c8] sm:$0xff] %v1458
        %1463 = vst [vmem:[#allocation7 + $0x2d0] sm:$0xff] %v1459
        %1464 = vst [vmem:[#allocation7 + $0x2d8] sm:$0xff] %v1460
        %1465 = vrot.lane.b32.xlu0 %v752, 95
        %v1466 = vpop.permute.xlu0 %1465
        %1467 = vrot.lane.b32.xlu0 %v753, 95
        %v1468 = vpop.permute.xlu0 %1467
        %1469 = vrot.lane.b32.xlu0 %v754, 95
        %v1470 = vpop.permute.xlu0 %1469
        %1471 = vrot.lane.b32.xlu0 %v755, 95
        %v1472 = vpop.permute.xlu0 %1471
        %vm1473 = vcmp.lt.s32.totalorder %v765, 95
        %v1474 = vsel %vm1473, %v1470, %v1472
        %v1475 = vsel %vm1473, %v1468, %v1470
        %v1476 = vsel %vm1473, %v1466, %v1468
        %v1477 = vsel %vm1473, %v1472, %v1466
        %s1478 = scalar_lea.vmem [#allocation14], 71
        %v1479 = vld [vmem:[%s1478] ss:$8 sm:$0xf]
        %v1481 = vperm.slane %v1479, 0
        %v1482 = vperm.slane %v1479, 1
        %v1483 = vperm.slane %v1479, 2
        %v1484 = vperm.slane %v1479, 3
        %v1489 = vmul.f32 %v1476, %v1481
        %v1490 = vmul.f32 %v1475, %v1482
        %v1491 = vmul.f32 %v1474, %v1483
        %v1492 = vmul.f32 %v1477, %v1484
        %1493 = vst [vmem:[#allocation7 + $0x2e0] sm:$0xff] %v1489
        %1494 = vst [vmem:[#allocation7 + $0x2e8] sm:$0xff] %v1490
        %1495 = vst [vmem:[#allocation7 + $0x2f0] sm:$0xff] %v1491
        %1496 = vst [vmem:[#allocation7 + $0x2f8] sm:$0xff] %v1492
        %1497 = vrot.lane.b32.xlu0 %v752, 94
        %v1498 = vpop.permute.xlu0 %1497
        %1499 = vrot.lane.b32.xlu0 %v753, 94
        %v1500 = vpop.permute.xlu0 %1499
        %1501 = vrot.lane.b32.xlu0 %v754, 94
        %v1502 = vpop.permute.xlu0 %1501
        %1503 = vrot.lane.b32.xlu0 %v755, 94
        %v1504 = vpop.permute.xlu0 %1503
        %vm1505 = vcmp.lt.s32.totalorder %v765, 94
        %v1506 = vsel %vm1505, %v1502, %v1504
        %v1507 = vsel %vm1505, %v1500, %v1502
        %v1508 = vsel %vm1505, %v1498, %v1500
        %v1509 = vsel %vm1505, %v1504, %v1498
        %s1510 = scalar_lea.vmem [#allocation14], 96
        %v1511 = vld [vmem:[%s1510] ss:$8 sm:$0xf]
        %v1513 = vperm.slane %v1511, 0
        %v1514 = vperm.slane %v1511, 1
        %v1515 = vperm.slane %v1511, 2
        %v1516 = vperm.slane %v1511, 3
        %v1521 = vmul.f32 %v1508, %v1513
        %v1522 = vmul.f32 %v1507, %v1514
        %v1523 = vmul.f32 %v1506, %v1515
        %v1524 = vmul.f32 %v1509, %v1516
        %1525 = vst [vmem:[#allocation7 + $0x300] sm:$0xff] %v1521
        %1526 = vst [vmem:[#allocation7 + $0x308] sm:$0xff] %v1522
        %1527 = vst [vmem:[#allocation7 + $0x310] sm:$0xff] %v1523
        %1528 = vst [vmem:[#allocation7 + $0x318] sm:$0xff] %v1524
        %v1529 = vld [vmem:[#allocation2] sm:$0xff]
        %v1530 = vld [vmem:[#allocation2 + $0x8] sm:$0xff]
        %v1531 = vld [vmem:[#allocation2 + $0x10] sm:$0xff]
        %v1532 = vld [vmem:[#allocation2 + $0x18] sm:$0xff]
        %v1533 = vld [vmem:[#allocation2 + $0x20] sm:$0xff]
        %v1534 = vld [vmem:[#allocation2 + $0x28] sm:$0xff]
        %v1535 = vld [vmem:[#allocation2 + $0x30] sm:$0xff]
        %v1536 = vld [vmem:[#allocation2 + $0x38] sm:$0xff]
        %v1537 = vld [vmem:[#allocation2 + $0x40] sm:$0xff]
        %v1538 = vld [vmem:[#allocation2 + $0x48] sm:$0xff]
        %v1539 = vld [vmem:[#allocation2 + $0x50] sm:$0xff]
        %v1540 = vld [vmem:[#allocation2 + $0x58] sm:$0xff]
        %v1541 = vld [vmem:[#allocation2 + $0x60] sm:$0xff]
        %v1542 = vld [vmem:[#allocation2 + $0x68] sm:$0xff]
        %v1543 = vld [vmem:[#allocation2 + $0x70] sm:$0xff]
        %v1544 = vld [vmem:[#allocation2 + $0x78] sm:$0xff]
        %v1545 = vld [vmem:[#allocation12] sm:$0xff]
        %v1546 = vld [vmem:[#allocation12 + $0x8] sm:$0xff]
        %v1547 = vld [vmem:[#allocation12 + $0x10] sm:$0xff]
        %v1548 = vld [vmem:[#allocation12 + $0x18] sm:$0xff]
        %v1549 = vld [vmem:[#allocation12 + $0x20] sm:$0xff]
        %v1550 = vld [vmem:[#allocation12 + $0x28] sm:$0xff]
        %v1551 = vld [vmem:[#allocation12 + $0x30] sm:$0xff]
        %v1552 = vld [vmem:[#allocation12 + $0x38] sm:$0xff]
        %v1553 = vld [vmem:[#allocation7] sm:$0xff]
        %v1554 = vld [vmem:[#allocation7 + $0x8] sm:$0xff]
        %v1555 = vld [vmem:[#allocation7 + $0x10] sm:$0xff]
        %v1556 = vld [vmem:[#allocation7 + $0x18] sm:$0xff]
        %v1557 = vld [vmem:[#allocation7 + $0x20] sm:$0xff]
        %v1558 = vld [vmem:[#allocation7 + $0x28] sm:$0xff]
        %v1559 = vld [vmem:[#allocation7 + $0x30] sm:$0xff]
        %v1560 = vld [vmem:[#allocation7 + $0x38] sm:$0xff]
        %v1561 = vld [vmem:[#allocation7 + $0x40] sm:$0xff]
        %v1562 = vld [vmem:[#allocation7 + $0x48] sm:$0xff]
        %v1563 = vld [vmem:[#allocation7 + $0x50] sm:$0xff]
        %v1564 = vld [vmem:[#allocation7 + $0x58] sm:$0xff]
        %v1565 = vld [vmem:[#allocation7 + $0x60] sm:$0xff]
        %v1566 = vld [vmem:[#allocation7 + $0x68] sm:$0xff]
        %v1567 = vld [vmem:[#allocation7 + $0x70] sm:$0xff]
        %v1568 = vld [vmem:[#allocation7 + $0x78] sm:$0xff]
        %v1569 = vld [vmem:[#allocation7 + $0x80] sm:$0xff]
        %v1570 = vld [vmem:[#allocation7 + $0x88] sm:$0xff]
        %v1571 = vld [vmem:[#allocation7 + $0x90] sm:$0xff]
        %v1572 = vld [vmem:[#allocation7 + $0x98] sm:$0xff]
        %v1573 = vld [vmem:[#allocation7 + $0xa0] sm:$0xff]
        %v1574 = vld [vmem:[#allocation7 + $0xa8] sm:$0xff]
        %v1575 = vld [vmem:[#allocation7 + $0xb0] sm:$0xff]
        %v1576 = vld [vmem:[#allocation7 + $0xb8] sm:$0xff]
        %v1577 = vld [vmem:[#allocation7 + $0xc0] sm:$0xff]
        %v1578 = vld [vmem:[#allocation7 + $0xc8] sm:$0xff]
        %v1579 = vld [vmem:[#allocation7 + $0xd0] sm:$0xff]
        %v1580 = vld [vmem:[#allocation7 + $0xd8] sm:$0xff]
        %v1581 = vld [vmem:[#allocation7 + $0xe0] sm:$0xff]
        %v1582 = vld [vmem:[#allocation7 + $0xe8] sm:$0xff]
        %v1583 = vld [vmem:[#allocation7 + $0xf0] sm:$0xff]
        %v1584 = vld [vmem:[#allocation7 + $0xf8] sm:$0xff]
        %v1585 = vld [vmem:[#allocation7 + $0x100] sm:$0xff]
        %v1586 = vld [vmem:[#allocation7 + $0x108] sm:$0xff]
        %v1587 = vld [vmem:[#allocation7 + $0x110] sm:$0xff]
        %v1588 = vld [vmem:[#allocation7 + $0x118] sm:$0xff]
        %v1589 = vld [vmem:[#allocation7 + $0x120] sm:$0xff]
        %v1590 = vld [vmem:[#allocation7 + $0x128] sm:$0xff]
        %v1591 = vld [vmem:[#allocation7 + $0x130] sm:$0xff]
        %v1592 = vld [vmem:[#allocation7 + $0x138] sm:$0xff]
        %v1593 = vld [vmem:[#allocation7 + $0x140] sm:$0xff]
        %v1594 = vld [vmem:[#allocation7 + $0x148] sm:$0xff]
        %v1595 = vld [vmem:[#allocation7 + $0x150] sm:$0xff]
        %v1596 = vld [vmem:[#allocation7 + $0x158] sm:$0xff]
        %v1597 = vld [vmem:[#allocation7 + $0x160] sm:$0xff]
        %v1598 = vld [vmem:[#allocation7 + $0x168] sm:$0xff]
        %v1599 = vld [vmem:[#allocation7 + $0x170] sm:$0xff]
        %v1600 = vld [vmem:[#allocation7 + $0x178] sm:$0xff]
        %v1601 = vld [vmem:[#allocation7 + $0x180] sm:$0xff]
        %v1602 = vld [vmem:[#allocation7 + $0x188] sm:$0xff]
        %v1603 = vld [vmem:[#allocation7 + $0x190] sm:$0xff]
        %v1604 = vld [vmem:[#allocation7 + $0x198] sm:$0xff]
        %v1605 = vld [vmem:[#allocation7 + $0x1a0] sm:$0xff]
        %v1606 = vld [vmem:[#allocation7 + $0x1a8] sm:$0xff]
        %v1607 = vld [vmem:[#allocation7 + $0x1b0] sm:$0xff]
        %v1608 = vld [vmem:[#allocation7 + $0x1b8] sm:$0xff]
        %v1609 = vld [vmem:[#allocation7 + $0x1c0] sm:$0xff]
        %v1610 = vld [vmem:[#allocation7 + $0x1c8] sm:$0xff]
        %v1611 = vld [vmem:[#allocation7 + $0x1d0] sm:$0xff]
        %v1612 = vld [vmem:[#allocation7 + $0x1d8] sm:$0xff]
        %v1613 = vld [vmem:[#allocation7 + $0x1e0] sm:$0xff]
        %v1614 = vld [vmem:[#allocation7 + $0x1e8] sm:$0xff]
        %v1615 = vld [vmem:[#allocation7 + $0x1f0] sm:$0xff]
        %v1616 = vld [vmem:[#allocation7 + $0x1f8] sm:$0xff]
        %v1617 = vld [vmem:[#allocation7 + $0x200] sm:$0xff]
        %v1618 = vld [vmem:[#allocation7 + $0x208] sm:$0xff]
        %v1619 = vld [vmem:[#allocation7 + $0x210] sm:$0xff]
        %v1620 = vld [vmem:[#allocation7 + $0x218] sm:$0xff]
        %v1621 = vld [vmem:[#allocation7 + $0x220] sm:$0xff]
        %v1622 = vld [vmem:[#allocation7 + $0x228] sm:$0xff]
        %v1623 = vld [vmem:[#allocation7 + $0x230] sm:$0xff]
        %v1624 = vld [vmem:[#allocation7 + $0x238] sm:$0xff]
        %v1625 = vld [vmem:[#allocation7 + $0x240] sm:$0xff]
        %v1626 = vld [vmem:[#allocation7 + $0x248] sm:$0xff]
        %v1627 = vld [vmem:[#allocation7 + $0x250] sm:$0xff]
        %v1628 = vld [vmem:[#allocation7 + $0x258] sm:$0xff]
        %v1629 = vld [vmem:[#allocation7 + $0x260] sm:$0xff]
        %v1630 = vld [vmem:[#allocation7 + $0x268] sm:$0xff]
        %v1631 = vld [vmem:[#allocation7 + $0x270] sm:$0xff]
        %v1632 = vld [vmem:[#allocation7 + $0x278] sm:$0xff]
        %v1633 = vld [vmem:[#allocation7 + $0x280] sm:$0xff]
        %v1634 = vld [vmem:[#allocation7 + $0x288] sm:$0xff]
        %v1635 = vld [vmem:[#allocation7 + $0x290] sm:$0xff]
        %v1636 = vld [vmem:[#allocation7 + $0x298] sm:$0xff]
        %v1637 = vld [vmem:[#allocation7 + $0x2a0] sm:$0xff]
        %v1638 = vld [vmem:[#allocation7 + $0x2a8] sm:$0xff]
        %v1639 = vld [vmem:[#allocation7 + $0x2b0] sm:$0xff]
        %v1640 = vld [vmem:[#allocation7 + $0x2b8] sm:$0xff]
        %v1641 = vld [vmem:[#allocation7 + $0x2c0] sm:$0xff]
        %v1642 = vld [vmem:[#allocation7 + $0x2c8] sm:$0xff]
        %v1643 = vld [vmem:[#allocation7 + $0x2d0] sm:$0xff]
        %v1644 = vld [vmem:[#allocation7 + $0x2d8] sm:$0xff]
        %v1645 = vld [vmem:[#allocation7 + $0x2e0] sm:$0xff]
        %v1646 = vld [vmem:[#allocation7 + $0x2e8] sm:$0xff]
        %v1647 = vld [vmem:[#allocation7 + $0x2f0] sm:$0xff]
        %v1648 = vld [vmem:[#allocation7 + $0x2f8] sm:$0xff]
        %v1649 = vld [vmem:[#allocation7 + $0x300] sm:$0xff]
        %v1650 = vld [vmem:[#allocation7 + $0x308] sm:$0xff]
        %v1651 = vld [vmem:[#allocation7 + $0x310] sm:$0xff]
        %v1652 = vld [vmem:[#allocation7 + $0x318] sm:$0xff]
        %vm1653 = vcmask 588800
        %v1655 = vsel %vm1653, %v1546, 0
        %v1658 = vsel %vm1653, %v1548, 0
        %v1661 = vsel %vm1653, %v1550, 0
        %v1664 = vsel %vm1653, %v1552, 0
        %1666 = vmatpush.msra.mxu0 %v1613
        %1667 = vmatpush.msra.mxu0 %v1609
        %1668 = vmatpush.msra.mxu0 %v1605
        %1669 = vmatpush.msra.mxu0 %v1601
        %1670 = vmatpush.msra.mxu0 %v1597
        %1671 = vmatpush.msra.mxu0 %v1593
        %1672 = vmatpush.msra.mxu0 %v1589
        %1673 = vmatpush.msra.mxu0 %v1585
        %1674 = vmatpush.msra.mxu0 %v1581
        %1675 = vmatpush.msra.mxu0 %v1577
        %1676 = vmatpush.msra.mxu0 %v1573
        %1677 = vmatpush.msra.mxu0 %v1569
        %1678 = vmatpush.msra.mxu0 %v1565
        %1679 = vmatpush.msra.mxu0 %v1561
        %1680 = vmatpush.msra.mxu0 %v1557
        %1681 = vmatpush.msra.mxu0 %v1553
        %1682 = vmatmul.f32.gmra.mxu0 %v1545
        %v1683 = vpop.f32.mrf.mxu0
        %v1684 = vadd.f32 0.0, %v1683
        %1685 = vmatmul.f32.gmra.mxu0 %v1547
        %v1686 = vpop.f32.mrf.mxu0
        %v1687 = vadd.f32 0.0, %v1686
        %1688 = vmatmul.f32.gmra.mxu0 %v1549
        %v1689 = vpop.f32.mrf.mxu0
        %v1690 = vadd.f32 0.0, %v1689
        %1691 = vmatmul.f32.gmra.mxu0 %v1551
        %v1692 = vpop.f32.mrf.mxu0
        %v1693 = vadd.f32 0.0, %v1692
        %1694 = vdwg.mxu0
        %1695 = vmatpush.msra.mxu0 0.0
        %1696 = vmatpush.msra.mxu0 0.0
        %1697 = vmatpush.msra.mxu0 0.0
        %1698 = vmatpush.msra.mxu0 0.0
        %1699 = vmatpush.msra.mxu0 0.0
        %1700 = vmatpush.msra.mxu0 0.0
        %1701 = vmatpush.msra.mxu0 0.0
        %1702 = vmatpush.msra.mxu0 %v1649
        %1703 = vmatpush.msra.mxu0 %v1645
        %1704 = vmatpush.msra.mxu0 %v1641
        %1705 = vmatpush.msra.mxu0 %v1637
        %1706 = vmatpush.msra.mxu0 %v1633
        %1707 = vmatpush.msra.mxu0 %v1629
        %1708 = vmatpush.msra.mxu0 %v1625
        %1709 = vmatpush.msra.mxu0 %v1621
        %1710 = vmatpush.msra.mxu0 %v1617
        %1711 = vmatmul.f32.gmra.mxu0 %v1655
        %v1712 = vpop.f32.mrf.mxu0
        %v1713 = vadd.f32 %v1684, %v1712
        %1714 = vmatmul.f32.gmra.mxu0 %v1658
        %v1715 = vpop.f32.mrf.mxu0
        %v1716 = vadd.f32 %v1687, %v1715
        %1717 = vmatmul.f32.gmra.mxu0 %v1661
        %v1718 = vpop.f32.mrf.mxu0
        %v1719 = vadd.f32 %v1690, %v1718
        %1720 = vmatmul.f32.gmra.mxu0 %v1664
        %v1721 = vpop.f32.mrf.mxu0
        %v1722 = vadd.f32 %v1693, %v1721
        %1723 = vdwg.mxu0
        %1724 = vmatpush.msra.mxu0 %v1614
        %1725 = vmatpush.msra.mxu0 %v1610
        %1726 = vmatpush.msra.mxu0 %v1606
        %1727 = vmatpush.msra.mxu0 %v1602
        %1728 = vmatpush.msra.mxu0 %v1598
        %1729 = vmatpush.msra.mxu0 %v1594
        %1730 = vmatpush.msra.mxu0 %v1590
        %1731 = vmatpush.msra.mxu0 %v1586
        %1732 = vmatpush.msra.mxu0 %v1582
        %1733 = vmatpush.msra.mxu0 %v1578
        %1734 = vmatpush.msra.mxu0 %v1574
        %1735 = vmatpush.msra.mxu0 %v1570
        %1736 = vmatpush.msra.mxu0 %v1566
        %1737 = vmatpush.msra.mxu0 %v1562
        %1738 = vmatpush.msra.mxu0 %v1558
        %1739 = vmatpush.msra.mxu0 %v1554
        %1740 = vmatmul.f32.gmra.mxu0 %v1545
        %v1741 = vpop.f32.mrf.mxu0
        %v1742 = vadd.f32 0.0, %v1741
        %1743 = vmatmul.f32.gmra.mxu0 %v1547
        %v1744 = vpop.f32.mrf.mxu0
        %v1745 = vadd.f32 0.0, %v1744
        %1746 = vmatmul.f32.gmra.mxu0 %v1549
        %v1747 = vpop.f32.mrf.mxu0
        %v1748 = vadd.f32 0.0, %v1747
        %1749 = vmatmul.f32.gmra.mxu0 %v1551
        %v1750 = vpop.f32.mrf.mxu0
        %v1751 = vadd.f32 0.0, %v1750
        %1752 = vdwg.mxu0
        %1753 = vmatpush.msra.mxu0 0.0
        %1754 = vmatpush.msra.mxu0 0.0
        %1755 = vmatpush.msra.mxu0 0.0
        %1756 = vmatpush.msra.mxu0 0.0
        %1757 = vmatpush.msra.mxu0 0.0
        %1758 = vmatpush.msra.mxu0 0.0
        %1759 = vmatpush.msra.mxu0 0.0
        %1760 = vmatpush.msra.mxu0 %v1650
        %1761 = vmatpush.msra.mxu0 %v1646
        %1762 = vmatpush.msra.mxu0 %v1642
        %1763 = vmatpush.msra.mxu0 %v1638
        %1764 = vmatpush.msra.mxu0 %v1634
        %1765 = vmatpush.msra.mxu0 %v1630
        %1766 = vmatpush.msra.mxu0 %v1626
        %1767 = vmatpush.msra.mxu0 %v1622
        %1768 = vmatpush.msra.mxu0 %v1618
        %1769 = vmatmul.f32.gmra.mxu0 %v1655
        %v1770 = vpop.f32.mrf.mxu0
        %v1771 = vadd.f32 %v1742, %v1770
        %1772 = vmatmul.f32.gmra.mxu0 %v1658
        %v1773 = vpop.f32.mrf.mxu0
        %v1774 = vadd.f32 %v1745, %v1773
        %1775 = vmatmul.f32.gmra.mxu0 %v1661
        %v1776 = vpop.f32.mrf.mxu0
        %v1777 = vadd.f32 %v1748, %v1776
        %1778 = vmatmul.f32.gmra.mxu0 %v1664
        %v1779 = vpop.f32.mrf.mxu0
        %v1780 = vadd.f32 %v1751, %v1779
        %1781 = vdwg.mxu0
        %1782 = vmatpush.msra.mxu0 %v1615
        %1783 = vmatpush.msra.mxu0 %v1611
        %1784 = vmatpush.msra.mxu0 %v1607
        %1785 = vmatpush.msra.mxu0 %v1603
        %1786 = vmatpush.msra.mxu0 %v1599
        %1787 = vmatpush.msra.mxu0 %v1595
        %1788 = vmatpush.msra.mxu0 %v1591
        %1789 = vmatpush.msra.mxu0 %v1587
        %1790 = vmatpush.msra.mxu0 %v1583
        %1791 = vmatpush.msra.mxu0 %v1579
        %1792 = vmatpush.msra.mxu0 %v1575
        %1793 = vmatpush.msra.mxu0 %v1571
        %1794 = vmatpush.msra.mxu0 %v1567
        %1795 = vmatpush.msra.mxu0 %v1563
        %1796 = vmatpush.msra.mxu0 %v1559
        %1797 = vmatpush.msra.mxu0 %v1555
        %1798 = vmatmul.f32.gmra.mxu0 %v1545
        %v1799 = vpop.f32.mrf.mxu0
        %v1800 = vadd.f32 0.0, %v1799
        %1801 = vmatmul.f32.gmra.mxu0 %v1547
        %v1802 = vpop.f32.mrf.mxu0
        %v1803 = vadd.f32 0.0, %v1802
        %1804 = vmatmul.f32.gmra.mxu0 %v1549
        %v1805 = vpop.f32.mrf.mxu0
        %v1806 = vadd.f32 0.0, %v1805
        %1807 = vmatmul.f32.gmra.mxu0 %v1551
        %v1808 = vpop.f32.mrf.mxu0
        %v1809 = vadd.f32 0.0, %v1808
        %1810 = vdwg.mxu0
        %1811 = vmatpush.msra.mxu0 0.0
        %1812 = vmatpush.msra.mxu0 0.0
        %1813 = vmatpush.msra.mxu0 0.0
        %1814 = vmatpush.msra.mxu0 0.0
        %1815 = vmatpush.msra.mxu0 0.0
        %1816 = vmatpush.msra.mxu0 0.0
        %1817 = vmatpush.msra.mxu0 0.0
        %1818 = vmatpush.msra.mxu0 %v1651
        %1819 = vmatpush.msra.mxu0 %v1647
        %1820 = vmatpush.msra.mxu0 %v1643
        %1821 = vmatpush.msra.mxu0 %v1639
        %1822 = vmatpush.msra.mxu0 %v1635
        %1823 = vmatpush.msra.mxu0 %v1631
        %1824 = vmatpush.msra.mxu0 %v1627
        %1825 = vmatpush.msra.mxu0 %v1623
        %1826 = vmatpush.msra.mxu0 %v1619
        %1827 = vmatmul.f32.gmra.mxu0 %v1655
        %v1828 = vpop.f32.mrf.mxu0
        %v1829 = vadd.f32 %v1800, %v1828
        %1830 = vmatmul.f32.gmra.mxu0 %v1658
        %v1831 = vpop.f32.mrf.mxu0
        %v1832 = vadd.f32 %v1803, %v1831
        %1833 = vmatmul.f32.gmra.mxu0 %v1661
        %v1834 = vpop.f32.mrf.mxu0
        %v1835 = vadd.f32 %v1806, %v1834
        %1836 = vmatmul.f32.gmra.mxu0 %v1664
        %v1837 = vpop.f32.mrf.mxu0
        %v1838 = vadd.f32 %v1809, %v1837
        %1839 = vdwg.mxu0
        %1840 = vmatpush.msra.mxu0 %v1616
        %1841 = vmatpush.msra.mxu0 %v1612
        %1842 = vmatpush.msra.mxu0 %v1608
        %1843 = vmatpush.msra.mxu0 %v1604
        %1844 = vmatpush.msra.mxu0 %v1600
        %1845 = vmatpush.msra.mxu0 %v1596
        %1846 = vmatpush.msra.mxu0 %v1592
        %1847 = vmatpush.msra.mxu0 %v1588
        %1848 = vmatpush.msra.mxu0 %v1584
        %1849 = vmatpush.msra.mxu0 %v1580
        %1850 = vmatpush.msra.mxu0 %v1576
        %1851 = vmatpush.msra.mxu0 %v1572
        %1852 = vmatpush.msra.mxu0 %v1568
        %1853 = vmatpush.msra.mxu0 %v1564
        %1854 = vmatpush.msra.mxu0 %v1560
        %1855 = vmatpush.msra.mxu0 %v1556
        %1856 = vmatmul.f32.gmra.mxu0 %v1545
        %v1857 = vpop.f32.mrf.mxu0
        %v1858 = vadd.f32 0.0, %v1857
        %1859 = vmatmul.f32.gmra.mxu0 %v1547
        %v1860 = vpop.f32.mrf.mxu0
        %v1861 = vadd.f32 0.0, %v1860
        %1862 = vmatmul.f32.gmra.mxu0 %v1549
        %v1863 = vpop.f32.mrf.mxu0
        %v1864 = vadd.f32 0.0, %v1863
        %1865 = vmatmul.f32.gmra.mxu0 %v1551
        %v1866 = vpop.f32.mrf.mxu0
        %v1867 = vadd.f32 0.0, %v1866
        %1868 = vdwg.mxu0
        %1869 = vmatpush.msra.mxu0 0.0
        %1870 = vmatpush.msra.mxu0 0.0
        %1871 = vmatpush.msra.mxu0 0.0
        %1872 = vmatpush.msra.mxu0 0.0
        %1873 = vmatpush.msra.mxu0 0.0
        %1874 = vmatpush.msra.mxu0 0.0
        %1875 = vmatpush.msra.mxu0 0.0
        %1876 = vmatpush.msra.mxu0 %v1652
        %1877 = vmatpush.msra.mxu0 %v1648
        %1878 = vmatpush.msra.mxu0 %v1644
        %1879 = vmatpush.msra.mxu0 %v1640
        %1880 = vmatpush.msra.mxu0 %v1636
        %1881 = vmatpush.msra.mxu0 %v1632
        %1882 = vmatpush.msra.mxu0 %v1628
        %1883 = vmatpush.msra.mxu0 %v1624
        %1884 = vmatpush.msra.mxu0 %v1620
        %1885 = vmatmul.f32.gmra.mxu0 %v1655
        %v1886 = vpop.f32.mrf.mxu0
        %v1887 = vadd.f32 %v1858, %v1886
        %1888 = vmatmul.f32.gmra.mxu0 %v1658
        %v1889 = vpop.f32.mrf.mxu0
        %v1890 = vadd.f32 %v1861, %v1889
        %1891 = vmatmul.f32.gmra.mxu0 %v1661
        %v1892 = vpop.f32.mrf.mxu0
        %v1893 = vadd.f32 %v1864, %v1892
        %1894 = vmatmul.f32.gmra.mxu0 %v1664
        %v1895 = vpop.f32.mrf.mxu0
        %v1896 = vadd.f32 %v1867, %v1895
        %1897 = vdwg.mxu0
        %v1898 = vadd.f32 %v1529, %v1713
        %v1899 = vadd.f32 %v1530, %v1771
        %v1900 = vadd.f32 %v1531, %v1829
        %v1901 = vadd.f32 %v1532, %v1887
        %v1902 = vadd.f32 %v1533, %v1716
        %v1903 = vadd.f32 %v1534, %v1774
        %v1904 = vadd.f32 %v1535, %v1832
        %v1905 = vadd.f32 %v1536, %v1890
        %v1906 = vadd.f32 %v1537, %v1719
        %v1907 = vadd.f32 %v1538, %v1777
        %v1908 = vadd.f32 %v1539, %v1835
        %v1909 = vadd.f32 %v1540, %v1893
        %v1910 = vadd.f32 %v1541, %v1722
        %v1911 = vadd.f32 %v1542, %v1780
        %v1912 = vadd.f32 %v1543, %v1838
        %v1913 = vadd.f32 %v1544, %v1896
        %v1914 = vxor.u32 %v1898, 2147483648
        %v1915 = vxor.u32 %v1899, 2147483648
        %v1916 = vxor.u32 %v1900, 2147483648
        %v1917 = vxor.u32 %v1901, 2147483648
        %v1918 = vmul.f32 %v1914, 1.442695
        %v1919 = vpow.pop %v1918
        %v1920 = vmul.f32 %v1915, 1.442695
        %v1921 = vpow.pop %v1920
        %v1922 = vmul.f32 %v1916, 1.442695
        %v1923 = vpow.pop %v1922
        %v1924 = vmul.f32 %v1917, 1.442695
        %v1925 = vpow.pop %v1924
        %v1926 = vadd.f32 %v1919, 1.0
        %v1927 = vadd.f32 %v1921, 1.0
        %v1928 = vadd.f32 %v1923, 1.0
        %v1929 = vadd.f32 %v1925, 1.0
        %v1930 = vrcp.pop %v1926
        %v1931 = vmul.f32 %v1926, %v1930
        %v1932 = vsub.f32 1.0, %v1931
        %v1933 = vmul.f32 %v1930, %v1932
        %v1934 = vadd.f32 %v1930, %v1933
        %vm1935 = vweird.f32 %v1926
        %vm1936 = vweird.f32 %v1930
        %vm1937 = vmor %vm1935, %vm1936
        %v1938 = vsel %vm1937, %v1930, %v1934
        %v1939 = vand.u32 2147483647, %v1926
        %vm1940 = vcmp.eq.f32.partialorder %v1939, 8.507059e+37
        %v1941 = vand.u32 %v1926, 2147483648
        %v1942 = vor.u32 1.1754944e-38, %v1941
        %v1943 = vsel %vm1940, %v1942, %v1938
        %v1944 = vmul.f32 1.0, %v1943
        %v1945 = vrcp.pop %v1927
        %v1946 = vmul.f32 %v1927, %v1945
        %v1947 = vsub.f32 1.0, %v1946
        %v1948 = vmul.f32 %v1945, %v1947
        %v1949 = vadd.f32 %v1945, %v1948
        %vm1950 = vweird.f32 %v1927
        %vm1951 = vweird.f32 %v1945
        %vm1952 = vmor %vm1950, %vm1951
        %v1953 = vsel %vm1952, %v1945, %v1949
        %v1954 = vand.u32 2147483647, %v1927
        %vm1955 = vcmp.eq.f32.partialorder %v1954, 8.507059e+37
        %v1956 = vand.u32 %v1927, 2147483648
        %v1957 = vor.u32 1.1754944e-38, %v1956
        %v1958 = vsel %vm1955, %v1957, %v1953
        %v1959 = vmul.f32 1.0, %v1958
        %v1960 = vrcp.pop %v1928
        %v1961 = vmul.f32 %v1928, %v1960
        %v1962 = vsub.f32 1.0, %v1961
        %v1963 = vmul.f32 %v1960, %v1962
        %v1964 = vadd.f32 %v1960, %v1963
        %vm1965 = vweird.f32 %v1928
        %vm1966 = vweird.f32 %v1960
        %vm1967 = vmor %vm1965, %vm1966
        %v1968 = vsel %vm1967, %v1960, %v1964
        %v1969 = vand.u32 2147483647, %v1928
        %vm1970 = vcmp.eq.f32.partialorder %v1969, 8.507059e+37
        %v1971 = vand.u32 %v1928, 2147483648
        %v1972 = vor.u32 1.1754944e-38, %v1971
        %v1973 = vsel %vm1970, %v1972, %v1968
        %v1974 = vmul.f32 1.0, %v1973
        %v1975 = vrcp.pop %v1929
        %v1976 = vmul.f32 %v1929, %v1975
        %v1977 = vsub.f32 1.0, %v1976
        %v1978 = vmul.f32 %v1975, %v1977
        %v1979 = vadd.f32 %v1975, %v1978
        %vm1980 = vweird.f32 %v1929
        %vm1981 = vweird.f32 %v1975
        %vm1982 = vmor %vm1980, %vm1981
        %v1983 = vsel %vm1982, %v1975, %v1979
        %v1984 = vand.u32 2147483647, %v1929
        %vm1985 = vcmp.eq.f32.partialorder %v1984, 8.507059e+37
        %v1986 = vand.u32 %v1929, 2147483648
        %v1987 = vor.u32 1.1754944e-38, %v1986
        %v1988 = vsel %vm1985, %v1987, %v1983
        %v1989 = vmul.f32 1.0, %v1988
        %v1990 = vxor.u32 %v1902, 2147483648
        %v1991 = vxor.u32 %v1903, 2147483648
        %v1992 = vxor.u32 %v1904, 2147483648
        %v1993 = vxor.u32 %v1905, 2147483648
        %v1994 = vmul.f32 %v1990, 1.442695
        %v1995 = vpow.pop %v1994
        %v1996 = vmul.f32 %v1991, 1.442695
        %v1997 = vpow.pop %v1996
        %v1998 = vmul.f32 %v1992, 1.442695
        %v1999 = vpow.pop %v1998
        %v2000 = vmul.f32 %v1993, 1.442695
        %v2001 = vpow.pop %v2000
        %v2002 = vadd.f32 %v1995, 1.0
        %v2003 = vadd.f32 %v1997, 1.0
        %v2004 = vadd.f32 %v1999, 1.0
        %v2005 = vadd.f32 %v2001, 1.0
        %v2006 = vrcp.pop %v2002
        %v2007 = vmul.f32 %v2002, %v2006
        %v2008 = vsub.f32 1.0, %v2007
        %v2009 = vmul.f32 %v2006, %v2008
        %v2010 = vadd.f32 %v2006, %v2009
        %vm2011 = vweird.f32 %v2002
        %vm2012 = vweird.f32 %v2006
        %vm2013 = vmor %vm2011, %vm2012
        %v2014 = vsel %vm2013, %v2006, %v2010
        %v2015 = vand.u32 2147483647, %v2002
        %vm2016 = vcmp.eq.f32.partialorder %v2015, 8.507059e+37
        %v2017 = vand.u32 %v2002, 2147483648
        %v2018 = vor.u32 1.1754944e-38, %v2017
        %v2019 = vsel %vm2016, %v2018, %v2014
        %v2020 = vmul.f32 1.0, %v2019
        %v2021 = vrcp.pop %v2003
        %v2022 = vmul.f32 %v2003, %v2021
        %v2023 = vsub.f32 1.0, %v2022
        %v2024 = vmul.f32 %v2021, %v2023
        %v2025 = vadd.f32 %v2021, %v2024
        %vm2026 = vweird.f32 %v2003
        %vm2027 = vweird.f32 %v2021
        %vm2028 = vmor %vm2026, %vm2027
        %v2029 = vsel %vm2028, %v2021, %v2025
        %v2030 = vand.u32 2147483647, %v2003
        %vm2031 = vcmp.eq.f32.partialorder %v2030, 8.507059e+37
        %v2032 = vand.u32 %v2003, 2147483648
        %v2033 = vor.u32 1.1754944e-38, %v2032
        %v2034 = vsel %vm2031, %v2033, %v2029
        %v2035 = vmul.f32 1.0, %v2034
        %v2036 = vrcp.pop %v2004
        %v2037 = vmul.f32 %v2004, %v2036
        %v2038 = vsub.f32 1.0, %v2037
        %v2039 = vmul.f32 %v2036, %v2038
        %v2040 = vadd.f32 %v2036, %v2039
        %vm2041 = vweird.f32 %v2004
        %vm2042 = vweird.f32 %v2036
        %vm2043 = vmor %vm2041, %vm2042
        %v2044 = vsel %vm2043, %v2036, %v2040
        %v2045 = vand.u32 2147483647, %v2004
        %vm2046 = vcmp.eq.f32.partialorder %v2045, 8.507059e+37
        %v2047 = vand.u32 %v2004, 2147483648
        %v2048 = vor.u32 1.1754944e-38, %v2047
        %v2049 = vsel %vm2046, %v2048, %v2044
        %v2050 = vmul.f32 1.0, %v2049
        %v2051 = vrcp.pop %v2005
        %v2052 = vmul.f32 %v2005, %v2051
        %v2053 = vsub.f32 1.0, %v2052
        %v2054 = vmul.f32 %v2051, %v2053
        %v2055 = vadd.f32 %v2051, %v2054
        %vm2056 = vweird.f32 %v2005
        %vm2057 = vweird.f32 %v2051
        %vm2058 = vmor %vm2056, %vm2057
        %v2059 = vsel %vm2058, %v2051, %v2055
        %v2060 = vand.u32 2147483647, %v2005
        %vm2061 = vcmp.eq.f32.partialorder %v2060, 8.507059e+37
        %v2062 = vand.u32 %v2005, 2147483648
        %v2063 = vor.u32 1.1754944e-38, %v2062
        %v2064 = vsel %vm2061, %v2063, %v2059
        %v2065 = vmul.f32 1.0, %v2064
        %v2066 = vtanh.pop %v1906
        %v2067 = vtanh.pop %v1907
        %v2068 = vtanh.pop %v1908
        %v2069 = vtanh.pop %v1909
        %v2070 = vxor.u32 %v1910, 2147483648
        %v2071 = vxor.u32 %v1911, 2147483648
        %v2072 = vxor.u32 %v1912, 2147483648
        %v2073 = vxor.u32 %v1913, 2147483648
        %v2074 = vmul.f32 %v2070, 1.442695
        %v2075 = vpow.pop %v2074
        %v2076 = vmul.f32 %v2071, 1.442695
        %v2077 = vpow.pop %v2076
        %v2078 = vmul.f32 %v2072, 1.442695
        %v2079 = vpow.pop %v2078
        %v2080 = vmul.f32 %v2073, 1.442695
        %v2081 = vpow.pop %v2080
        %v2082 = vadd.f32 %v2075, 1.0
        %v2083 = vadd.f32 %v2077, 1.0
        %v2084 = vadd.f32 %v2079, 1.0
        %v2085 = vadd.f32 %v2081, 1.0
        %v2086 = vrcp.pop %v2082
        %v2087 = vmul.f32 %v2082, %v2086
        %v2088 = vsub.f32 1.0, %v2087
        %v2089 = vmul.f32 %v2086, %v2088
        %v2090 = vadd.f32 %v2086, %v2089
        %vm2091 = vweird.f32 %v2082
        %vm2092 = vweird.f32 %v2086
        %vm2093 = vmor %vm2091, %vm2092
        %v2094 = vsel %vm2093, %v2086, %v2090
        %v2095 = vand.u32 2147483647, %v2082
        %vm2096 = vcmp.eq.f32.partialorder %v2095, 8.507059e+37
        %v2097 = vand.u32 %v2082, 2147483648
        %v2098 = vor.u32 1.1754944e-38, %v2097
        %v2099 = vsel %vm2096, %v2098, %v2094
        %v2100 = vmul.f32 1.0, %v2099
        %v2101 = vrcp.pop %v2083
        %v2102 = vmul.f32 %v2083, %v2101
        %v2103 = vsub.f32 1.0, %v2102
        %v2104 = vmul.f32 %v2101, %v2103
        %v2105 = vadd.f32 %v2101, %v2104
        %vm2106 = vweird.f32 %v2083
        %vm2107 = vweird.f32 %v2101
        %vm2108 = vmor %vm2106, %vm2107
        %v2109 = vsel %vm2108, %v2101, %v2105
        %v2110 = vand.u32 2147483647, %v2083
        %vm2111 = vcmp.eq.f32.partialorder %v2110, 8.507059e+37
        %v2112 = vand.u32 %v2083, 2147483648
        %v2113 = vor.u32 1.1754944e-38, %v2112
        %v2114 = vsel %vm2111, %v2113, %v2109
        %v2115 = vmul.f32 1.0, %v2114
        %v2116 = vrcp.pop %v2084
        %v2117 = vmul.f32 %v2084, %v2116
        %v2118 = vsub.f32 1.0, %v2117
        %v2119 = vmul.f32 %v2116, %v2118
        %v2120 = vadd.f32 %v2116, %v2119
        %vm2121 = vweird.f32 %v2084
        %vm2122 = vweird.f32 %v2116
        %vm2123 = vmor %vm2121, %vm2122
        %v2124 = vsel %vm2123, %v2116, %v2120
        %v2125 = vand.u32 2147483647, %v2084
        %vm2126 = vcmp.eq.f32.partialorder %v2125, 8.507059e+37
        %v2127 = vand.u32 %v2084, 2147483648
        %v2128 = vor.u32 1.1754944e-38, %v2127
        %v2129 = vsel %vm2126, %v2128, %v2124
        %v2130 = vmul.f32 1.0, %v2129
        %v2131 = vrcp.pop %v2085
        %v2132 = vmul.f32 %v2085, %v2131
        %v2133 = vsub.f32 1.0, %v2132
        %v2134 = vmul.f32 %v2131, %v2133
        %v2135 = vadd.f32 %v2131, %v2134
        %vm2136 = vweird.f32 %v2085
        %vm2137 = vweird.f32 %v2131
        %vm2138 = vmor %vm2136, %vm2137
        %v2139 = vsel %vm2138, %v2131, %v2135
        %v2140 = vand.u32 2147483647, %v2085
        %vm2141 = vcmp.eq.f32.partialorder %v2140, 8.507059e+37
        %v2142 = vand.u32 %v2085, 2147483648
        %v2143 = vor.u32 1.1754944e-38, %v2142
        %v2144 = vsel %vm2141, %v2143, %v2139
        %v2145 = vmul.f32 1.0, %v2144
        %v2146 = vld [vmem:[#allocation4] sm:$0xff]
        %v2147 = vld [vmem:[#allocation4 + $0x8] sm:$0xff]
        %v2148 = vld [vmem:[#allocation4 + $0x10] sm:$0xff]
        %v2149 = vld [vmem:[#allocation4 + $0x18] sm:$0xff]
        %v2150 = vmul.f32 %v2020, %v2146
        %v2151 = vmul.f32 %v2035, %v2147
        %v2152 = vmul.f32 %v2050, %v2148
        %v2153 = vmul.f32 %v2065, %v2149
        %v2154 = vmul.f32 %v1944, %v2066
        %v2155 = vmul.f32 %v1959, %v2067
        %v2156 = vmul.f32 %v1974, %v2068
        %v2157 = vmul.f32 %v1989, %v2069
        %v2158 = vadd.f32 %v2150, %v2154
        %v2159 = vadd.f32 %v2151, %v2155
        %v2160 = vadd.f32 %v2152, %v2156
        %v2161 = vadd.f32 %v2153, %v2157
        %2162 = vst [vmem:[#allocation4] sm:$0xff] %v2158
        %2163 = vst [vmem:[#allocation4 + $0x8] sm:$0xff] %v2159
        %2164 = vst [vmem:[#allocation4 + $0x10] sm:$0xff] %v2160
        %2165 = vst [vmem:[#allocation4 + $0x18] sm:$0xff] %v2161
        %v2166 = vtanh.pop %v2158
        %v2167 = vtanh.pop %v2159
        %v2168 = vtanh.pop %v2160
        %v2169 = vtanh.pop %v2161
        %v2170 = vmul.f32 %v2100, %v2166
        %v2171 = vmul.f32 %v2115, %v2167
        %v2172 = vmul.f32 %v2130, %v2168
        %v2173 = vmul.f32 %v2145, %v2169
        %2174 = vst [vmem:[#allocation3] sm:$0xff] %v2170
        %2175 = vst [vmem:[#allocation3 + $0x8] sm:$0xff] %v2171
        %2176 = vst [vmem:[#allocation3 + $0x10] sm:$0xff] %v2172
        %2177 = vst [vmem:[#allocation3 + $0x18] sm:$0xff] %v2173
        %2178 = vrot.lane.b32.xlu0 %v2170, 127
        %v2179 = vpop.permute.xlu0 %2178
        %2180 = vrot.lane.b32.xlu0 %v2171, 127
        %v2181 = vpop.permute.xlu0 %2180
        %2182 = vrot.lane.b32.xlu0 %v2172, 127
        %v2183 = vpop.permute.xlu0 %2182
        %2184 = vrot.lane.b32.xlu0 %v2173, 127
        %v2185 = vpop.permute.xlu0 %2184
        %v2186 = vsel %vm1153, %v2183, %v2185
        %v2187 = vsel %vm1153, %v2181, %v2183
        %v2188 = vsel %vm1153, %v2179, %v2181
        %v2189 = vsel %vm1153, %v2185, %v2179
        %v2190 = vmax.f32 %v2170, %v2188
        %v2191 = vmax.f32 %v2171, %v2187
        %v2192 = vmax.f32 %v2172, %v2186
        %v2193 = vmax.f32 %v2173, %v2189
        %2194 = vrot.lane.b32.xlu0 %v2190, 112
        %v2195 = vpop.permute.xlu0 %2194
        %2196 = vrot.lane.b32.xlu0 %v2191, 112
        %v2197 = vpop.permute.xlu0 %2196
        %2198 = vrot.lane.b32.xlu0 %v2192, 112
        %v2199 = vpop.permute.xlu0 %2198
        %2200 = vrot.lane.b32.xlu0 %v2193, 112
        %v2201 = vpop.permute.xlu0 %2200
        %v2202 = vsel %vm1281, %v2199, %v2201
        %v2203 = vsel %vm1281, %v2197, %v2199
        %v2204 = vsel %vm1281, %v2195, %v2197
        %v2205 = vsel %vm1281, %v2201, %v2195
        %v2206 = vmax.f32 %v2190, %v2204
        %v2207 = vmax.f32 %v2191, %v2203
        %v2208 = vmax.f32 %v2192, %v2202
        %v2209 = vmax.f32 %v2193, %v2205
        %v2210 = vld [vmem:[#allocation15] sm:$0xff]
        %v2211 = vld [vmem:[#allocation15 + $0x8] sm:$0xff]
        %v2212 = vld [vmem:[#allocation15 + $0x10] sm:$0xff]
        %v2213 = vld [vmem:[#allocation15 + $0x18] sm:$0xff]
        %v2214 = vld [vmem:[#allocation15 + $0x20] sm:$0xff]
        %v2215 = vld [vmem:[#allocation15 + $0x28] sm:$0xff]
        %v2216 = vld [vmem:[#allocation15 + $0x30] sm:$0xff]
        %v2217 = vld [vmem:[#allocation15 + $0x38] sm:$0xff]
        %v2218 = vld [vmem:[#allocation15 + $0x40] sm:$0xff]
        %v2219 = vld [vmem:[#allocation15 + $0x48] sm:$0xff]
        %v2220 = vld [vmem:[#allocation15 + $0x50] sm:$0xff]
        %v2221 = vld [vmem:[#allocation15 + $0x58] sm:$0xff]
        %v2222 = vld [vmem:[#allocation15 + $0x60] sm:$0xff]
        %v2223 = vld [vmem:[#allocation15 + $0x68] sm:$0xff]
        %v2224 = vld [vmem:[#allocation15 + $0x70] sm:$0xff]
        %v2225 = vld [vmem:[#allocation15 + $0x78] sm:$0xff]
        %v2226 = vld [vmem:[#allocation15 + $0x80] sm:$0xff]
        %v2227 = vld [vmem:[#allocation15 + $0x88] sm:$0xff]
        %v2228 = vld [vmem:[#allocation15 + $0x90] sm:$0xff]
        %v2229 = vld [vmem:[#allocation15 + $0x98] sm:$0xff]
        %v2230 = vld [vmem:[#allocation15 + $0xa0] sm:$0xff]
        %v2231 = vld [vmem:[#allocation15 + $0xa8] sm:$0xff]
        %v2232 = vld [vmem:[#allocation15 + $0xb0] sm:$0xff]
        %v2233 = vld [vmem:[#allocation15 + $0xb8] sm:$0xff]
        %v2234 = vld [vmem:[#allocation15 + $0xc0] sm:$0xff]
        %v2235 = vld [vmem:[#allocation15 + $0xc8] sm:$0xff]
        %v2236 = vld [vmem:[#allocation15 + $0xd0] sm:$0xff]
        %v2237 = vld [vmem:[#allocation15 + $0xd8] sm:$0xff]
        %v2238 = vld [vmem:[#allocation15 + $0xe0] sm:$0xff]
        %v2239 = vld [vmem:[#allocation15 + $0xe8] sm:$0xff]
        %v2240 = vld [vmem:[#allocation15 + $0xf0] sm:$0xff]
        %v2241 = vld [vmem:[#allocation15 + $0xf8] sm:$0xff]
        %v2242 = vld [vmem:[#allocation15 + $0x100] sm:$0xff]
        %v2243 = vld [vmem:[#allocation15 + $0x108] sm:$0xff]
        %v2244 = vld [vmem:[#allocation15 + $0x110] sm:$0xff]
        %v2245 = vld [vmem:[#allocation15 + $0x118] sm:$0xff]
        %v2246 = vld [vmem:[#allocation15 + $0x120] sm:$0xff]
        %v2247 = vld [vmem:[#allocation15 + $0x128] sm:$0xff]
        %v2248 = vld [vmem:[#allocation15 + $0x130] sm:$0xff]
        %v2249 = vld [vmem:[#allocation15 + $0x138] sm:$0xff]
        %v2250 = vld [vmem:[#allocation15 + $0x140] sm:$0xff]
        %v2251 = vld [vmem:[#allocation15 + $0x148] sm:$0xff]
        %v2252 = vld [vmem:[#allocation15 + $0x150] sm:$0xff]
        %v2253 = vld [vmem:[#allocation15 + $0x158] sm:$0xff]
        %v2254 = vld [vmem:[#allocation15 + $0x160] sm:$0xff]
        %v2255 = vld [vmem:[#allocation15 + $0x168] sm:$0xff]
        %v2256 = vld [vmem:[#allocation15 + $0x170] sm:$0xff]
        %v2257 = vld [vmem:[#allocation15 + $0x178] sm:$0xff]
        %v2258 = vld [vmem:[#allocation15 + $0x180] sm:$0xff]
        %v2259 = vld [vmem:[#allocation15 + $0x188] sm:$0xff]
        %v2260 = vld [vmem:[#allocation15 + $0x190] sm:$0xff]
        %v2261 = vld [vmem:[#allocation15 + $0x198] sm:$0xff]
        %v2262 = vld [vmem:[#allocation15 + $0x1a0] sm:$0xff]
        %v2263 = vld [vmem:[#allocation15 + $0x1a8] sm:$0xff]
        %v2264 = vld [vmem:[#allocation15 + $0x1b0] sm:$0xff]
        %v2265 = vld [vmem:[#allocation15 + $0x1b8] sm:$0xff]
        %v2266 = vld [vmem:[#allocation15 + $0x1c0] sm:$0xff]
        %v2267 = vld [vmem:[#allocation15 + $0x1c8] sm:$0xff]
        %v2268 = vld [vmem:[#allocation15 + $0x1d0] sm:$0xff]
        %v2269 = vld [vmem:[#allocation15 + $0x1d8] sm:$0xff]
        %v2270 = vld [vmem:[#allocation15 + $0x1e0] sm:$0xff]
        %v2271 = vld [vmem:[#allocation15 + $0x1e8] sm:$0xff]
        %v2272 = vld [vmem:[#allocation15 + $0x1f0] sm:$0xff]
        %v2273 = vld [vmem:[#allocation15 + $0x1f8] sm:$0xff]
        %2274 = vmatpush.msra.mxu0 %v2225
        %2275 = vmatpush.msra.mxu0 %v2224
        %2276 = vmatpush.msra.mxu0 %v2223
        %2277 = vmatpush.msra.mxu0 %v2222
        %2278 = vmatpush.msra.mxu0 %v2221
        %2279 = vmatpush.msra.mxu0 %v2220
        %2280 = vmatpush.msra.mxu0 %v2219
        %2281 = vmatpush.msra.mxu0 %v2218
        %2282 = vmatpush.msra.mxu0 %v2217
        %2283 = vmatpush.msra.mxu0 %v2216
        %2284 = vmatpush.msra.mxu0 %v2215
        %2285 = vmatpush.msra.mxu0 %v2214
        %2286 = vmatpush.msra.mxu0 %v2213
        %2287 = vmatpush.msra.mxu0 %v2212
        %2288 = vmatpush.msra.mxu0 %v2211
        %2289 = vmatpush.msra.mxu0 %v2210
        %2290 = vmatmul.f32.gmra.mxu0 %v2206
        %v2291 = vpop.f32.mrf.mxu0
        %v2292 = vadd.f32 0.0, %v2291
        %2293 = vdwg.mxu0
        %2294 = vmatpush.msra.mxu0 %v2241
        %2295 = vmatpush.msra.mxu0 %v2240
        %2296 = vmatpush.msra.mxu0 %v2239
        %2297 = vmatpush.msra.mxu0 %v2238
        %2298 = vmatpush.msra.mxu0 %v2237
        %2299 = vmatpush.msra.mxu0 %v2236
        %2300 = vmatpush.msra.mxu0 %v2235
        %2301 = vmatpush.msra.mxu0 %v2234
        %2302 = vmatpush.msra.mxu0 %v2233
        %2303 = vmatpush.msra.mxu0 %v2232
        %2304 = vmatpush.msra.mxu0 %v2231
        %2305 = vmatpush.msra.mxu0 %v2230
        %2306 = vmatpush.msra.mxu0 %v2229
        %2307 = vmatpush.msra.mxu0 %v2228
        %2308 = vmatpush.msra.mxu0 %v2227
        %2309 = vmatpush.msra.mxu0 %v2226
        %2310 = vmatmul.f32.gmra.mxu0 %v2207
        %v2311 = vpop.f32.mrf.mxu0
        %v2312 = vadd.f32 %v2292, %v2311
        %2313 = vdwg.mxu0
        %2314 = vmatpush.msra.mxu0 %v2257
        %2315 = vmatpush.msra.mxu0 %v2256
        %2316 = vmatpush.msra.mxu0 %v2255
        %2317 = vmatpush.msra.mxu0 %v2254
        %2318 = vmatpush.msra.mxu0 %v2253
        %2319 = vmatpush.msra.mxu0 %v2252
        %2320 = vmatpush.msra.mxu0 %v2251
        %2321 = vmatpush.msra.mxu0 %v2250
        %2322 = vmatpush.msra.mxu0 %v2249
        %2323 = vmatpush.msra.mxu0 %v2248
        %2324 = vmatpush.msra.mxu0 %v2247
        %2325 = vmatpush.msra.mxu0 %v2246
        %2326 = vmatpush.msra.mxu0 %v2245
        %2327 = vmatpush.msra.mxu0 %v2244
        %2328 = vmatpush.msra.mxu0 %v2243
        %2329 = vmatpush.msra.mxu0 %v2242
        %2330 = vmatmul.f32.gmra.mxu0 %v2208
        %v2331 = vpop.f32.mrf.mxu0
        %v2332 = vadd.f32 %v2312, %v2331
        %2333 = vdwg.mxu0
        %2334 = vmatpush.msra.mxu0 %v2273
        %2335 = vmatpush.msra.mxu0 %v2272
        %2336 = vmatpush.msra.mxu0 %v2271
        %2337 = vmatpush.msra.mxu0 %v2270
        %2338 = vmatpush.msra.mxu0 %v2269
        %2339 = vmatpush.msra.mxu0 %v2268
        %2340 = vmatpush.msra.mxu0 %v2267
        %2341 = vmatpush.msra.mxu0 %v2266
        %2342 = vmatpush.msra.mxu0 %v2265
        %2343 = vmatpush.msra.mxu0 %v2264
        %2344 = vmatpush.msra.mxu0 %v2263
        %2345 = vmatpush.msra.mxu0 %v2262
        %2346 = vmatpush.msra.mxu0 %v2261
        %2347 = vmatpush.msra.mxu0 %v2260
        %2348 = vmatpush.msra.mxu0 %v2259
        %2349 = vmatpush.msra.mxu0 %v2258
        %2350 = vmatmul.f32.gmra.mxu0 %v2209
        %v2351 = vpop.f32.mrf.mxu0
        %v2352 = vadd.f32 %v2332, %v2351
        %2353 = vdwg.mxu0
        %v2354 = vld [vmem:[#allocation5] sm:$0xff]
        %2355 = vrot.lane.b32.xlu0 %v2352, 18
        %v2356 = vpop.permute.xlu0 %2355
        %2357 = vrot.lane.b32.xlu0 %v2354, 18
        %v2358 = vpop.permute.xlu0 %2357
        %v2359 = vld [vmem:[#allocation18] sm:$0x1]
        %v2360 = vperm.slane %v2359, 0
        %v2361 = vmul.f32 %v2356, %v2360
        %v2362 = vmul.f32 %v2358, %v2360
        %2363 = vst [vmem:[#allocation8] sm:$0xff] %v2361
        %2364 = vst [vmem:[#allocation8 + $0x8] sm:$0xff] %v2362
        %2365 = vrot.lane.b32.xlu0 %v2352, 17
        %v2366 = vpop.permute.xlu0 %2365
        %2367 = vrot.lane.b32.xlu0 %v2354, 17
        %v2368 = vpop.permute.xlu0 %2367
        %v2369 = vld [vmem:[#allocation18 + $0x1] sm:$0x1]
        %v2370 = vperm.slane %v2369, 0
        %v2371 = vmul.f32 %v2366, %v2370
        %v2372 = vmul.f32 %v2368, %v2370
        %2373 = vst [vmem:[#allocation8 + $0x10] sm:$0xff] %v2371
        %2374 = vst [vmem:[#allocation8 + $0x18] sm:$0xff] %v2372
        %2375 = vrot.lane.b32.xlu0 %v2352, 16
        %v2376 = vpop.permute.xlu0 %2375
        %2377 = vrot.lane.b32.xlu0 %v2354, 16
        %v2378 = vpop.permute.xlu0 %2377
        %v2379 = vld [vmem:[#allocation18 + $0x2] sm:$0x1]
        %v2380 = vperm.slane %v2379, 0
        %v2381 = vmul.f32 %v2376, %v2380
        %v2382 = vmul.f32 %v2378, %v2380
        %2383 = vst [vmem:[#allocation8 + $0x20] sm:$0xff] %v2381
        %2384 = vst [vmem:[#allocation8 + $0x28] sm:$0xff] %v2382
        %2385 = vrot.lane.b32.xlu0 %v2352, 15
        %v2386 = vpop.permute.xlu0 %2385
        %2387 = vrot.lane.b32.xlu0 %v2354, 15
        %v2388 = vpop.permute.xlu0 %2387
        %v2389 = vld [vmem:[#allocation18 + $0x3] sm:$0x1]
        %v2390 = vperm.slane %v2389, 0
        %v2391 = vmul.f32 %v2386, %v2390
        %v2392 = vmul.f32 %v2388, %v2390
        %2393 = vst [vmem:[#allocation8 + $0x30] sm:$0xff] %v2391
        %2394 = vst [vmem:[#allocation8 + $0x38] sm:$0xff] %v2392
        %2395 = vrot.lane.b32.xlu0 %v2352, 14
        %v2396 = vpop.permute.xlu0 %2395
        %2397 = vrot.lane.b32.xlu0 %v2354, 14
        %v2398 = vpop.permute.xlu0 %2397
        %v2399 = vld [vmem:[#allocation18 + $0x4] sm:$0x1]
        %v2400 = vperm.slane %v2399, 0
        %v2401 = vmul.f32 %v2396, %v2400
        %v2402 = vmul.f32 %v2398, %v2400
        %2403 = vst [vmem:[#allocation8 + $0x40] sm:$0xff] %v2401
        %2404 = vst [vmem:[#allocation8 + $0x48] sm:$0xff] %v2402
        %2405 = vrot.lane.b32.xlu0 %v2352, 10
        %v2406 = vpop.permute.xlu0 %2405
        %2407 = vrot.lane.b32.xlu0 %v2354, 10
        %v2408 = vpop.permute.xlu0 %2407
        %v2409 = vld [vmem:[#allocation18 + $0x5] sm:$0x1]
        %v2410 = vperm.slane %v2409, 0
        %v2411 = vmul.f32 %v2406, %v2410
        %v2412 = vmul.f32 %v2408, %v2410
        %2413 = vst [vmem:[#allocation8 + $0x50] sm:$0xff] %v2411
        %2414 = vst [vmem:[#allocation8 + $0x58] sm:$0xff] %v2412
        %2415 = vrot.lane.b32.xlu0 %v2352, 9
        %v2416 = vpop.permute.xlu0 %2415
        %2417 = vrot.lane.b32.xlu0 %v2354, 9
        %v2418 = vpop.permute.xlu0 %2417
        %v2419 = vld [vmem:[#allocation18 + $0x6] sm:$0x1]
        %v2420 = vperm.slane %v2419, 0
        %v2421 = vmul.f32 %v2416, %v2420
        %v2422 = vmul.f32 %v2418, %v2420
        %2423 = vst [vmem:[#allocation8 + $0x60] sm:$0xff] %v2421
        %2424 = vst [vmem:[#allocation8 + $0x68] sm:$0xff] %v2422
        %2425 = vrot.lane.b32.xlu0 %v2352, 8
        %v2426 = vpop.permute.xlu0 %2425
        %2427 = vrot.lane.b32.xlu0 %v2354, 8
        %v2428 = vpop.permute.xlu0 %2427
        %v2429 = vld [vmem:[#allocation18 + $0x7] sm:$0x1]
        %v2430 = vperm.slane %v2429, 0
        %v2431 = vmul.f32 %v2426, %v2430
        %v2432 = vmul.f32 %v2428, %v2430
        %2433 = vst [vmem:[#allocation8 + $0x70] sm:$0xff] %v2431
        %2434 = vst [vmem:[#allocation8 + $0x78] sm:$0xff] %v2432
        %2435 = vrot.lane.b32.xlu0 %v2352, 7
        %v2436 = vpop.permute.xlu0 %2435
        %2437 = vrot.lane.b32.xlu0 %v2354, 7
        %v2438 = vpop.permute.xlu0 %2437
        %v2439 = vld [vmem:[#allocation18 + $0x8] sm:$0x1]
        %v2440 = vperm.slane %v2439, 0
        %v2441 = vmul.f32 %v2436, %v2440
        %v2442 = vmul.f32 %v2438, %v2440
        %2443 = vst [vmem:[#allocation8 + $0x80] sm:$0xff] %v2441
        %2444 = vst [vmem:[#allocation8 + $0x88] sm:$0xff] %v2442
        %2445 = vrot.lane.b32.xlu0 %v2352, 6
        %v2446 = vpop.permute.xlu0 %2445
        %2447 = vrot.lane.b32.xlu0 %v2354, 6
        %v2448 = vpop.permute.xlu0 %2447
        %v2449 = vld [vmem:[#allocation18 + $0x9] sm:$0x1]
        %v2450 = vperm.slane %v2449, 0
        %v2451 = vmul.f32 %v2446, %v2450
        %v2452 = vmul.f32 %v2448, %v2450
        %2453 = vst [vmem:[#allocation8 + $0x90] sm:$0xff] %v2451
        %2454 = vst [vmem:[#allocation8 + $0x98] sm:$0xff] %v2452
        %2455 = vrot.lane.b32.xlu0 %v2352, 2
        %v2456 = vpop.permute.xlu0 %2455
        %2457 = vrot.lane.b32.xlu0 %v2354, 2
        %v2458 = vpop.permute.xlu0 %2457
        %v2459 = vld [vmem:[#allocation18 + $0xa] sm:$0x1]
        %v2460 = vperm.slane %v2459, 0
        %v2461 = vmul.f32 %v2456, %v2460
        %v2462 = vmul.f32 %v2458, %v2460
        %2463 = vst [vmem:[#allocation8 + $0xa0] sm:$0xff] %v2461
        %2464 = vst [vmem:[#allocation8 + $0xa8] sm:$0xff] %v2462
        %2465 = vrot.lane.b32.xlu0 %v2352, 1
        %v2466 = vpop.permute.xlu0 %2465
        %2467 = vrot.lane.b32.xlu0 %v2354, 1
        %v2468 = vpop.permute.xlu0 %2467
        %v2469 = vld [vmem:[#allocation18 + $0xb] sm:$0x1]
        %v2470 = vperm.slane %v2469, 0
        %v2471 = vmul.f32 %v2466, %v2470
        %v2472 = vmul.f32 %v2468, %v2470
        %2473 = vst [vmem:[#allocation8 + $0xb0] sm:$0xff] %v2471
        %2474 = vst [vmem:[#allocation8 + $0xb8] sm:$0xff] %v2472
        %2475 = vst [vmem:[#allocation8 + $0xc0] sm:$0xff] %v2352
        %2476 = vst [vmem:[#allocation8 + $0xc8] sm:$0xff] %v2354
        %2477 = vrot.lane.b32.xlu0 %v2352, 127
        %v2478 = vpop.permute.xlu0 %2477
        %2479 = vrot.lane.b32.xlu0 %v2354, 127
        %v2480 = vpop.permute.xlu0 %2479
        %v2481 = vld [vmem:[#allocation18 + $0xd] sm:$0x1]
        %v2482 = vperm.slane %v2481, 0
        %v2483 = vmul.f32 %v2478, %v2482
        %v2484 = vmul.f32 %v2480, %v2482
        %2485 = vst [vmem:[#allocation8 + $0xd0] sm:$0xff] %v2483
        %2486 = vst [vmem:[#allocation8 + $0xd8] sm:$0xff] %v2484
        %2487 = vrot.lane.b32.xlu0 %v2352, 126
        %v2488 = vpop.permute.xlu0 %2487
        %2489 = vrot.lane.b32.xlu0 %v2354, 126
        %v2490 = vpop.permute.xlu0 %2489
        %v2491 = vld [vmem:[#allocation18 + $0xe] sm:$0x1]
        %v2492 = vperm.slane %v2491, 0
        %v2493 = vmul.f32 %v2488, %v2492
        %v2494 = vmul.f32 %v2490, %v2492
        %2495 = vst [vmem:[#allocation8 + $0xe0] sm:$0xff] %v2493
        %2496 = vst [vmem:[#allocation8 + $0xe8] sm:$0xff] %v2494
        %2497 = vrot.lane.b32.xlu0 %v2352, 122
        %v2498 = vpop.permute.xlu0 %2497
        %2499 = vrot.lane.b32.xlu0 %v2354, 122
        %v2500 = vpop.permute.xlu0 %2499
        %v2501 = vld [vmem:[#allocation18 + $0xf] sm:$0x1]
        %v2502 = vperm.slane %v2501, 0
        %v2503 = vmul.f32 %v2498, %v2502
        %v2504 = vmul.f32 %v2500, %v2502
        %2505 = vst [vmem:[#allocation8 + $0xf0] sm:$0xff] %v2503
        %2506 = vst [vmem:[#allocation8 + $0xf8] sm:$0xff] %v2504
        %2507 = vrot.lane.b32.xlu0 %v2352, 121
        %v2508 = vpop.permute.xlu0 %2507
        %2509 = vrot.lane.b32.xlu0 %v2354, 121
        %v2510 = vpop.permute.xlu0 %2509
        %v2511 = vld [vmem:[#allocation18 + $0x10] sm:$0x1]
        %v2512 = vperm.slane %v2511, 0
        %v2513 = vmul.f32 %v2508, %v2512
        %v2514 = vmul.f32 %v2510, %v2512
        %2515 = vst [vmem:[#allocation8 + $0x100] sm:$0xff] %v2513
        %2516 = vst [vmem:[#allocation8 + $0x108] sm:$0xff] %v2514
        %2517 = vrot.lane.b32.xlu0 %v2352, 120
        %v2518 = vpop.permute.xlu0 %2517
        %2519 = vrot.lane.b32.xlu0 %v2354, 120
        %v2520 = vpop.permute.xlu0 %2519
        %v2521 = vld [vmem:[#allocation18 + $0x11] sm:$0x1]
        %v2522 = vperm.slane %v2521, 0
        %v2523 = vmul.f32 %v2518, %v2522
        %v2524 = vmul.f32 %v2520, %v2522
        %2525 = vst [vmem:[#allocation8 + $0x110] sm:$0xff] %v2523
        %2526 = vst [vmem:[#allocation8 + $0x118] sm:$0xff] %v2524
        %2527 = vrot.lane.b32.xlu0 %v2352, 119
        %v2528 = vpop.permute.xlu0 %2527
        %2529 = vrot.lane.b32.xlu0 %v2354, 119
        %v2530 = vpop.permute.xlu0 %2529
        %v2531 = vld [vmem:[#allocation18 + $0x12] sm:$0x1]
        %v2532 = vperm.slane %v2531, 0
        %v2533 = vmul.f32 %v2528, %v2532
        %v2534 = vmul.f32 %v2530, %v2532
        %2535 = vst [vmem:[#allocation8 + $0x120] sm:$0xff] %v2533
        %2536 = vst [vmem:[#allocation8 + $0x128] sm:$0xff] %v2534
        %2537 = vrot.lane.b32.xlu0 %v2352, 118
        %v2538 = vpop.permute.xlu0 %2537
        %2539 = vrot.lane.b32.xlu0 %v2354, 118
        %v2540 = vpop.permute.xlu0 %2539
        %v2541 = vld [vmem:[#allocation18 + $0x13] sm:$0x1]
        %v2542 = vperm.slane %v2541, 0
        %v2543 = vmul.f32 %v2538, %v2542
        %v2544 = vmul.f32 %v2540, %v2542
        %2545 = vst [vmem:[#allocation8 + $0x130] sm:$0xff] %v2543
        %2546 = vst [vmem:[#allocation8 + $0x138] sm:$0xff] %v2544
        %2547 = vrot.lane.b32.xlu0 %v2352, 114
        %v2548 = vpop.permute.xlu0 %2547
        %2549 = vrot.lane.b32.xlu0 %v2354, 114
        %v2550 = vpop.permute.xlu0 %2549
        %v2551 = vld [vmem:[#allocation18 + $0x14] sm:$0x1]
        %v2552 = vperm.slane %v2551, 0
        %v2553 = vmul.f32 %v2548, %v2552
        %v2554 = vmul.f32 %v2550, %v2552
        %2555 = vst [vmem:[#allocation8 + $0x140] sm:$0xff] %v2553
        %2556 = vst [vmem:[#allocation8 + $0x148] sm:$0xff] %v2554
        %2557 = vrot.lane.b32.xlu0 %v2352, 113
        %v2558 = vpop.permute.xlu0 %2557
        %2559 = vrot.lane.b32.xlu0 %v2354, 113
        %v2560 = vpop.permute.xlu0 %2559
        %v2561 = vld [vmem:[#allocation18 + $0x15] sm:$0x1]
        %v2562 = vperm.slane %v2561, 0
        %v2563 = vmul.f32 %v2558, %v2562
        %v2564 = vmul.f32 %v2560, %v2562
        %2565 = vst [vmem:[#allocation8 + $0x150] sm:$0xff] %v2563
        %2566 = vst [vmem:[#allocation8 + $0x158] sm:$0xff] %v2564
        %2567 = vrot.lane.b32.xlu0 %v2352, 112
        %v2568 = vpop.permute.xlu0 %2567
        %2569 = vrot.lane.b32.xlu0 %v2354, 112
        %v2570 = vpop.permute.xlu0 %2569
        %v2571 = vld [vmem:[#allocation18 + $0x16] sm:$0x1]
        %v2572 = vperm.slane %v2571, 0
        %v2573 = vmul.f32 %v2568, %v2572
        %v2574 = vmul.f32 %v2570, %v2572
        %2575 = vst [vmem:[#allocation8 + $0x160] sm:$0xff] %v2573
        %2576 = vst [vmem:[#allocation8 + $0x168] sm:$0xff] %v2574
        %2577 = vrot.lane.b32.xlu0 %v2352, 111
        %v2578 = vpop.permute.xlu0 %2577
        %2579 = vrot.lane.b32.xlu0 %v2354, 111
        %v2580 = vpop.permute.xlu0 %2579
        %v2581 = vld [vmem:[#allocation18 + $0x17] sm:$0x1]
        %v2582 = vperm.slane %v2581, 0
        %v2583 = vmul.f32 %v2578, %v2582
        %v2584 = vmul.f32 %v2580, %v2582
        %2585 = vst [vmem:[#allocation8 + $0x170] sm:$0xff] %v2583
        %2586 = vst [vmem:[#allocation8 + $0x178] sm:$0xff] %v2584
        %2587 = vrot.lane.b32.xlu0 %v2352, 110
        %v2588 = vpop.permute.xlu0 %2587
        %2589 = vrot.lane.b32.xlu0 %v2354, 110
        %v2590 = vpop.permute.xlu0 %2589
        %v2591 = vld [vmem:[#allocation18 + $0x18] sm:$0x1]
        %v2592 = vperm.slane %v2591, 0
        %v2593 = vmul.f32 %v2588, %v2592
        %v2594 = vmul.f32 %v2590, %v2592
        %2595 = vst [vmem:[#allocation8 + $0x180] sm:$0xff] %v2593
        %2596 = vst [vmem:[#allocation8 + $0x188] sm:$0xff] %v2594
        %v2597 = vld [vmem:[%s7] sm:$0xff]
        %v2598 = vld [vmem:[%s7 + $0x8] sm:$0xff]
        %v2599 = vld [vmem:[%s7 + $0x10] sm:$0xff]
        %v2600 = vld [vmem:[%s7 + $0x18] sm:$0xff]
        %v2601 = vld [vmem:[#allocation17] sm:$0xff]
        %v2602 = vld [vmem:[#allocation17 + $0x8] sm:$0xff]
        %v2603 = vld [vmem:[#allocation17 + $0x10] sm:$0xff]
        %v2604 = vld [vmem:[#allocation17 + $0x18] sm:$0xff]
        %v2605 = vld [vmem:[#allocation17 + $0x20] sm:$0xff]
        %v2606 = vld [vmem:[#allocation17 + $0x28] sm:$0xff]
        %v2607 = vld [vmem:[#allocation17 + $0x30] sm:$0xff]
        %v2608 = vld [vmem:[#allocation17 + $0x38] sm:$0xff]
        %v2609 = vld [vmem:[#allocation17 + $0x40] sm:$0xff]
        %v2610 = vld [vmem:[#allocation17 + $0x48] sm:$0xff]
        %v2611 = vld [vmem:[#allocation17 + $0x50] sm:$0xff]
        %v2612 = vld [vmem:[#allocation17 + $0x58] sm:$0xff]
        %v2613 = vld [vmem:[#allocation17 + $0x60] sm:$0xff]
        %v2614 = vld [vmem:[#allocation17 + $0x68] sm:$0xff]
        %v2615 = vld [vmem:[#allocation17 + $0x70] sm:$0xff]
        %v2616 = vld [vmem:[#allocation17 + $0x78] sm:$0xff]
        %v2617 = vld [vmem:[#allocation8] sm:$0xff]
        %v2618 = vld [vmem:[#allocation8 + $0x8] sm:$0xff]
        %v2619 = vld [vmem:[#allocation8 + $0x10] sm:$0xff]
        %v2620 = vld [vmem:[#allocation8 + $0x18] sm:$0xff]
        %v2621 = vld [vmem:[#allocation8 + $0x20] sm:$0xff]
        %v2622 = vld [vmem:[#allocation8 + $0x28] sm:$0xff]
        %v2623 = vld [vmem:[#allocation8 + $0x30] sm:$0xff]
        %v2624 = vld [vmem:[#allocation8 + $0x38] sm:$0xff]
        %v2625 = vld [vmem:[#allocation8 + $0x40] sm:$0xff]
        %v2626 = vld [vmem:[#allocation8 + $0x48] sm:$0xff]
        %v2627 = vld [vmem:[#allocation8 + $0x50] sm:$0xff]
        %v2628 = vld [vmem:[#allocation8 + $0x58] sm:$0xff]
        %v2629 = vld [vmem:[#allocation8 + $0x60] sm:$0xff]
        %v2630 = vld [vmem:[#allocation8 + $0x68] sm:$0xff]
        %v2631 = vld [vmem:[#allocation8 + $0x70] sm:$0xff]
        %v2632 = vld [vmem:[#allocation8 + $0x78] sm:$0xff]
        %v2633 = vld [vmem:[#allocation8 + $0x80] sm:$0xff]
        %v2634 = vld [vmem:[#allocation8 + $0x88] sm:$0xff]
        %v2635 = vld [vmem:[#allocation8 + $0x90] sm:$0xff]
        %v2636 = vld [vmem:[#allocation8 + $0x98] sm:$0xff]
        %v2637 = vld [vmem:[#allocation8 + $0xa0] sm:$0xff]
        %v2638 = vld [vmem:[#allocation8 + $0xa8] sm:$0xff]
        %v2639 = vld [vmem:[#allocation8 + $0xb0] sm:$0xff]
        %v2640 = vld [vmem:[#allocation8 + $0xb8] sm:$0xff]
        %v2641 = vld [vmem:[#allocation8 + $0xc0] sm:$0xff]
        %v2642 = vld [vmem:[#allocation8 + $0xc8] sm:$0xff]
        %v2643 = vld [vmem:[#allocation8 + $0xd0] sm:$0xff]
        %v2644 = vld [vmem:[#allocation8 + $0xd8] sm:$0xff]
        %v2645 = vld [vmem:[#allocation8 + $0xe0] sm:$0xff]
        %v2646 = vld [vmem:[#allocation8 + $0xe8] sm:$0xff]
        %v2647 = vld [vmem:[#allocation8 + $0xf0] sm:$0xff]
        %v2648 = vld [vmem:[#allocation8 + $0xf8] sm:$0xff]
        %v2649 = vld [vmem:[#allocation8 + $0x100] sm:$0xff]
        %v2650 = vld [vmem:[#allocation8 + $0x108] sm:$0xff]
        %v2651 = vld [vmem:[#allocation8 + $0x110] sm:$0xff]
        %v2652 = vld [vmem:[#allocation8 + $0x118] sm:$0xff]
        %v2653 = vld [vmem:[#allocation8 + $0x120] sm:$0xff]
        %v2654 = vld [vmem:[#allocation8 + $0x128] sm:$0xff]
        %v2655 = vld [vmem:[#allocation8 + $0x130] sm:$0xff]
        %v2656 = vld [vmem:[#allocation8 + $0x138] sm:$0xff]
        %v2657 = vld [vmem:[#allocation8 + $0x140] sm:$0xff]
        %v2658 = vld [vmem:[#allocation8 + $0x148] sm:$0xff]
        %v2659 = vld [vmem:[#allocation8 + $0x150] sm:$0xff]
        %v2660 = vld [vmem:[#allocation8 + $0x158] sm:$0xff]
        %v2661 = vld [vmem:[#allocation8 + $0x160] sm:$0xff]
        %v2662 = vld [vmem:[#allocation8 + $0x168] sm:$0xff]
        %v2663 = vld [vmem:[#allocation8 + $0x170] sm:$0xff]
        %v2664 = vld [vmem:[#allocation8 + $0x178] sm:$0xff]
        %v2665 = vld [vmem:[#allocation8 + $0x180] sm:$0xff]
        %v2666 = vld [vmem:[#allocation8 + $0x188] sm:$0xff]
        %vm2667 = vcmask 130048
        %v2669 = vsel %vm2667, %v2604, 0
        %v2672 = vsel %vm2667, %v2608, 0
        %v2675 = vsel %vm2667, %v2612, 0
        %v2678 = vsel %vm2667, %v2616, 0
        %2680 = vmatpush.msra.mxu0 %v2632
        %2681 = vmatpush.msra.mxu0 %v2631
        %2682 = vmatpush.msra.mxu0 %v2630
        %2683 = vmatpush.msra.mxu0 %v2629
        %2684 = vmatpush.msra.mxu0 %v2628
        %2685 = vmatpush.msra.mxu0 %v2627
        %2686 = vmatpush.msra.mxu0 %v2626
        %2687 = vmatpush.msra.mxu0 %v2625
        %2688 = vmatpush.msra.mxu0 %v2624
        %2689 = vmatpush.msra.mxu0 %v2623
        %2690 = vmatpush.msra.mxu0 %v2622
        %2691 = vmatpush.msra.mxu0 %v2621
        %2692 = vmatpush.msra.mxu0 %v2620
        %2693 = vmatpush.msra.mxu0 %v2619
        %2694 = vmatpush.msra.mxu0 %v2618
        %2695 = vmatpush.msra.mxu0 %v2617
        %2696 = vmatmul.f32.gmra.mxu0 %v2601
        %v2697 = vpop.f32.mrf.mxu0
        %v2698 = vadd.f32 0.0, %v2697
        %2699 = vmatmul.f32.gmra.mxu0 %v2605
        %v2700 = vpop.f32.mrf.mxu0
        %v2701 = vadd.f32 0.0, %v2700
        %2702 = vmatmul.f32.gmra.mxu0 %v2609
        %v2703 = vpop.f32.mrf.mxu0
        %v2704 = vadd.f32 0.0, %v2703
        %2705 = vmatmul.f32.gmra.mxu0 %v2613
        %v2706 = vpop.f32.mrf.mxu0
        %v2707 = vadd.f32 0.0, %v2706
        %2708 = vdwg.mxu0
        %2709 = vmatpush.msra.mxu0 %v2648
        %2710 = vmatpush.msra.mxu0 %v2647
        %2711 = vmatpush.msra.mxu0 %v2646
        %2712 = vmatpush.msra.mxu0 %v2645
        %2713 = vmatpush.msra.mxu0 %v2644
        %2714 = vmatpush.msra.mxu0 %v2643
        %2715 = vmatpush.msra.mxu0 %v2642
        %2716 = vmatpush.msra.mxu0 %v2641
        %2717 = vmatpush.msra.mxu0 %v2640
        %2718 = vmatpush.msra.mxu0 %v2639
        %2719 = vmatpush.msra.mxu0 %v2638
        %2720 = vmatpush.msra.mxu0 %v2637
        %2721 = vmatpush.msra.mxu0 %v2636
        %2722 = vmatpush.msra.mxu0 %v2635
        %2723 = vmatpush.msra.mxu0 %v2634
        %2724 = vmatpush.msra.mxu0 %v2633
        %2725 = vmatmul.f32.gmra.mxu0 %v2602
        %v2726 = vpop.f32.mrf.mxu0
        %v2727 = vadd.f32 %v2698, %v2726
        %2728 = vmatmul.f32.gmra.mxu0 %v2606
        %v2729 = vpop.f32.mrf.mxu0
        %v2730 = vadd.f32 %v2701, %v2729
        %2731 = vmatmul.f32.gmra.mxu0 %v2610
        %v2732 = vpop.f32.mrf.mxu0
        %v2733 = vadd.f32 %v2704, %v2732
        %2734 = vmatmul.f32.gmra.mxu0 %v2614
        %v2735 = vpop.f32.mrf.mxu0
        %v2736 = vadd.f32 %v2707, %v2735
        %2737 = vdwg.mxu0
        %2738 = vmatpush.msra.mxu0 %v2664
        %2739 = vmatpush.msra.mxu0 %v2663
        %2740 = vmatpush.msra.mxu0 %v2662
        %2741 = vmatpush.msra.mxu0 %v2661
        %2742 = vmatpush.msra.mxu0 %v2660
        %2743 = vmatpush.msra.mxu0 %v2659
        %2744 = vmatpush.msra.mxu0 %v2658
        %2745 = vmatpush.msra.mxu0 %v2657
        %2746 = vmatpush.msra.mxu0 %v2656
        %2747 = vmatpush.msra.mxu0 %v2655
        %2748 = vmatpush.msra.mxu0 %v2654
        %2749 = vmatpush.msra.mxu0 %v2653
        %2750 = vmatpush.msra.mxu0 %v2652
        %2751 = vmatpush.msra.mxu0 %v2651
        %2752 = vmatpush.msra.mxu0 %v2650
        %2753 = vmatpush.msra.mxu0 %v2649
        %2754 = vmatmul.f32.gmra.mxu0 %v2603
        %v2755 = vpop.f32.mrf.mxu0
        %v2756 = vadd.f32 %v2727, %v2755
        %2757 = vmatmul.f32.gmra.mxu0 %v2607
        %v2758 = vpop.f32.mrf.mxu0
        %v2759 = vadd.f32 %v2730, %v2758
        %2760 = vmatmul.f32.gmra.mxu0 %v2611
        %v2761 = vpop.f32.mrf.mxu0
        %v2762 = vadd.f32 %v2733, %v2761
        %2763 = vmatmul.f32.gmra.mxu0 %v2615
        %v2764 = vpop.f32.mrf.mxu0
        %v2765 = vadd.f32 %v2736, %v2764
        %2766 = vdwg.mxu0
        %2767 = vmatpush.msra.mxu0 0.0
        %2768 = vmatpush.msra.mxu0 0.0
        %2769 = vmatpush.msra.mxu0 0.0
        %2770 = vmatpush.msra.mxu0 0.0
        %2771 = vmatpush.msra.mxu0 0.0
        %2772 = vmatpush.msra.mxu0 0.0
        %2773 = vmatpush.msra.mxu0 0.0
        %2774 = vmatpush.msra.mxu0 0.0
        %2775 = vmatpush.msra.mxu0 0.0
        %2776 = vmatpush.msra.mxu0 0.0
        %2777 = vmatpush.msra.mxu0 0.0
        %2778 = vmatpush.msra.mxu0 0.0
        %2779 = vmatpush.msra.mxu0 0.0
        %2780 = vmatpush.msra.mxu0 0.0
        %2781 = vmatpush.msra.mxu0 %v2666
        %2782 = vmatpush.msra.mxu0 %v2665
        %2783 = vmatmul.f32.gmra.mxu0 %v2669
        %v2784 = vpop.f32.mrf.mxu0
        %v2785 = vadd.f32 %v2756, %v2784
        %2786 = vmatmul.f32.gmra.mxu0 %v2672
        %v2787 = vpop.f32.mrf.mxu0
        %v2788 = vadd.f32 %v2759, %v2787
        %2789 = vmatmul.f32.gmra.mxu0 %v2675
        %v2790 = vpop.f32.mrf.mxu0
        %v2791 = vadd.f32 %v2762, %v2790
        %2792 = vmatmul.f32.gmra.mxu0 %v2678
        %v2793 = vpop.f32.mrf.mxu0
        %v2794 = vadd.f32 %v2765, %v2793
        %2795 = vdwg.mxu0
        %2797 = vset.pattern.permute.xlu0 0
        %2798 = vperm.xlu0 %2797, %v2597
        %v2799 = vpop.permute.xlu0 %2798
        %2802 = vset.pattern.permute.xlu0 0
        %2803 = vperm.xlu0 %2802, %v2598
        %v2804 = vpop.permute.xlu0 %2803
        %2807 = vset.pattern.permute.xlu0 0
        %2808 = vperm.xlu0 %2807, %v2599
        %v2809 = vpop.permute.xlu0 %2808
        %2812 = vset.pattern.permute.xlu0 0
        %2813 = vperm.xlu0 %2812, %v2600
        %v2814 = vpop.permute.xlu0 %2813
        %v2816 = vadd.f32 %v2799, %v2785
        %v2817 = vadd.f32 %v2804, %v2788
        %v2818 = vadd.f32 %v2809, %v2791
        %v2819 = vadd.f32 %v2814, %v2794
        %v2820 = vxor.u32 %v2816, 2147483648
        %v2821 = vmul.f32 %v2820, 1.442695
        %v2822 = vpow.pop %v2821
        %v2823 = vadd.f32 %v2822, 1.0
        %v2824 = vrcp.pop %v2823
        %v2825 = vmul.f32 %v2823, %v2824
        %v2826 = vsub.f32 1.0, %v2825
        %v2827 = vmul.f32 %v2824, %v2826
        %v2828 = vadd.f32 %v2824, %v2827
        %vm2829 = vweird.f32 %v2823
        %vm2830 = vweird.f32 %v2824
        %vm2831 = vmor %vm2829, %vm2830
        %v2832 = vsel %vm2831, %v2824, %v2828
        %v2833 = vand.u32 2147483647, %v2823
        %vm2834 = vcmp.eq.f32.partialorder %v2833, 8.507059e+37
        %v2835 = vand.u32 %v2823, 2147483648
        %v2836 = vor.u32 1.1754944e-38, %v2835
        %v2837 = vsel %vm2834, %v2836, %v2832
        %v2838 = vmul.f32 1.0, %v2837
        %v2839 = vxor.u32 %v2817, 2147483648
        %v2840 = vmul.f32 %v2839, 1.442695
        %v2841 = vpow.pop %v2840
        %v2842 = vadd.f32 %v2841, 1.0
        %v2843 = vrcp.pop %v2842
        %v2844 = vmul.f32 %v2842, %v2843
        %v2845 = vsub.f32 1.0, %v2844
        %v2846 = vmul.f32 %v2843, %v2845
        %v2847 = vadd.f32 %v2843, %v2846
        %vm2848 = vweird.f32 %v2842
        %vm2849 = vweird.f32 %v2843
        %vm2850 = vmor %vm2848, %vm2849
        %v2851 = vsel %vm2850, %v2843, %v2847
        %v2852 = vand.u32 2147483647, %v2842
        %vm2853 = vcmp.eq.f32.partialorder %v2852, 8.507059e+37
        %v2854 = vand.u32 %v2842, 2147483648
        %v2855 = vor.u32 1.1754944e-38, %v2854
        %v2856 = vsel %vm2853, %v2855, %v2851
        %v2857 = vmul.f32 1.0, %v2856
        %v2858 = vtanh.pop %v2818
        %v2859 = vxor.u32 %v2819, 2147483648
        %v2860 = vmul.f32 %v2859, 1.442695
        %v2861 = vpow.pop %v2860
        %v2862 = vadd.f32 %v2861, 1.0
        %v2863 = vrcp.pop %v2862
        %v2864 = vmul.f32 %v2862, %v2863
        %v2865 = vsub.f32 1.0, %v2864
        %v2866 = vmul.f32 %v2863, %v2865
        %v2867 = vadd.f32 %v2863, %v2866
        %vm2868 = vweird.f32 %v2862
        %vm2869 = vweird.f32 %v2863
        %vm2870 = vmor %vm2868, %vm2869
        %v2871 = vsel %vm2870, %v2863, %v2867
        %v2872 = vand.u32 2147483647, %v2862
        %vm2873 = vcmp.eq.f32.partialorder %v2872, 8.507059e+37
        %v2874 = vand.u32 %v2862, 2147483648
        %v2875 = vor.u32 1.1754944e-38, %v2874
        %v2876 = vsel %vm2873, %v2875, %v2871
        %v2877 = vmul.f32 1.0, %v2876
        %v2878 = vld [vmem:[#allocation6] sm:$0xff]
        %v2879 = vmul.f32 %v2857, %v2878
        %v2880 = vmul.f32 %v2838, %v2858
        %v2881 = vadd.f32 %v2879, %v2880
        %2882 = vst [vmem:[#allocation6] sm:$0xff] %v2881
        %v2883 = vtanh.pop %v2881
        %v2884 = vmul.f32 %v2877, %v2883
        %2885 = vst [vmem:[#allocation5] sm:$0xff] %v2884
        %p2886 = scmp.eq.s32.totalorder %s28, 3
        // Predicated region
        $region101: #{tpu_custom_call.1} parent=67 // pred_check
          %p2887 = pneg %p2886
        $region102: #{tpu_custom_call.1} parent=67 // pred_check_branch
          %2889 = sbr.rel (%p2887) target = $region104
        $region103: #{tpu_custom_call.1} parent=67 // pred_region
          %2890 = vrot.lane.b32.xlu0 %v2884, 127
          %v2891 = vpop.permute.xlu0 %2890
          %v2892 = vmax.f32 %v2884, %v2891
          %2893 = vrot.lane.b32.xlu0 %v2892, 120
          %v2894 = vpop.permute.xlu0 %2893
          %v2895 = vmax.f32 %v2892, %v2894
          %v2896 = vld [vmem:[%s9] sm:$0xff]
          %v2897 = vld [vmem:[%s9 + $0x8] sm:$0xff]
          %v2898 = vld [vmem:[%s9 + $0x10] sm:$0xff]
          %v2899 = vld [vmem:[%s9 + $0x18] sm:$0xff]
          %v2900 = vld [vmem:[%s9 + $0x20] sm:$0xff]
          %v2901 = vld [vmem:[%s9 + $0x28] sm:$0xff]
          %v2902 = vld [vmem:[%s9 + $0x30] sm:$0xff]
          %v2903 = vld [vmem:[%s9 + $0x38] sm:$0xff]
          %v2904 = vld [vmem:[%s9 + $0x40] sm:$0xff]
          %v2905 = vld [vmem:[%s9 + $0x48] sm:$0xff]
          %v2906 = vld [vmem:[%s9 + $0x50] sm:$0xff]
          %v2907 = vld [vmem:[%s9 + $0x58] sm:$0xff]
          %v2908 = vld [vmem:[%s9 + $0x60] sm:$0xff]
          %v2909 = vld [vmem:[%s9 + $0x68] sm:$0xff]
          %v2910 = vld [vmem:[%s9 + $0x70] sm:$0xff]
          %v2911 = vld [vmem:[%s9 + $0x78] sm:$0xff]
          %2912 = vmatpush.msra.mxu0 %v2911
          %2913 = vmatpush.msra.mxu0 %v2910
          %2914 = vmatpush.msra.mxu0 %v2909
          %2915 = vmatpush.msra.mxu0 %v2908
          %2916 = vmatpush.msra.mxu0 %v2907
          %2917 = vmatpush.msra.mxu0 %v2906
          %2918 = vmatpush.msra.mxu0 %v2905
          %2919 = vmatpush.msra.mxu0 %v2904
          %2920 = vmatpush.msra.mxu0 %v2903
          %2921 = vmatpush.msra.mxu0 %v2902
          %2922 = vmatpush.msra.mxu0 %v2901
          %2923 = vmatpush.msra.mxu0 %v2900
          %2924 = vmatpush.msra.mxu0 %v2899
          %2925 = vmatpush.msra.mxu0 %v2898
          %2926 = vmatpush.msra.mxu0 %v2897
          %2927 = vmatpush.msra.mxu0 %v2896
          %2928 = vmatmul.f32.gmra.mxu0 %v2895
          %v2929 = vpop.f32.mrf.mxu0
          %v2930 = vadd.f32 0.0, %v2929
          %2931 = vdwg.mxu0
          %v2932 = vld [vmem:[%s11] sm:$0x1]
          %v2933 = vld [vmem:[#allocation20] sm:$0xff]
          %v2934 = vld [vmem:[#allocation20 + $0x8] sm:$0xff]
          %v2936 = vsel %vm2667, %v2930, 0
          %2938 = vmatpush.msra.mxu0 0.0
          %2939 = vmatpush.msra.mxu0 0.0
          %2940 = vmatpush.msra.mxu0 0.0
          %2941 = vmatpush.msra.mxu0 0.0
          %2942 = vmatpush.msra.mxu0 0.0
          %2943 = vmatpush.msra.mxu0 0.0
          %2944 = vmatpush.msra.mxu0 0.0
          %2945 = vmatpush.msra.mxu0 0.0
          %2946 = vmatpush.msra.mxu0 0.0
          %2947 = vmatpush.msra.mxu0 0.0
          %2948 = vmatpush.msra.mxu0 0.0
          %2949 = vmatpush.msra.mxu0 0.0
          %2950 = vmatpush.msra.mxu0 0.0
          %2951 = vmatpush.msra.mxu0 0.0
          %2952 = vmatpush.msra.mxu0 %v2934
          %2953 = vmatpush.msra.mxu0 %v2933
          %2954 = vmatmul.f32.gmra.mxu0 %v2936
          %v2955 = vpop.f32.mrf.mxu0
          %v2956 = vadd.f32 0.0, %v2955
          %2957 = vdwg.mxu0
          %v2958 = vadd.f32 %v2932, %v2956
          %s2959 = scalar_lea.vmem [#allocation20], 16
          %v2960 = vld [vmem:[%s2959] sm:$0xff]
          %v2961 = vld [vmem:[%s2959 + $0x8] sm:$0xff]
          %v2962 = vrot.slane %v2930, 1
          %v2963 = vsel %vm2667, %v2962, 0
          %2965 = vmatpush.msra.mxu0 0.0
          %2966 = vmatpush.msra.mxu0 0.0
          %2967 = vmatpush.msra.mxu0 0.0
          %2968 = vmatpush.msra.mxu0 0.0
          %2969 = vmatpush.msra.mxu0 0.0
          %2970 = vmatpush.msra.mxu0 0.0
          %2971 = vmatpush.msra.mxu0 0.0
          %2972 = vmatpush.msra.mxu0 0.0
          %2973 = vmatpush.msra.mxu0 0.0
          %2974 = vmatpush.msra.mxu0 0.0
          %2975 = vmatpush.msra.mxu0 0.0
          %2976 = vmatpush.msra.mxu0 0.0
          %2977 = vmatpush.msra.mxu0 0.0
          %2978 = vmatpush.msra.mxu0 0.0
          %2979 = vmatpush.msra.mxu0 %v2961
          %2980 = vmatpush.msra.mxu0 %v2960
          %2981 = vmatmul.f32.gmra.mxu0 %v2963
          %v2982 = vpop.f32.mrf.mxu0
          %v2983 = vadd.f32 0.0, %v2982
          %2984 = vdwg.mxu0
          %v2985 = vadd.f32 %v2958, %v2983
          %s2986 = scalar_lea.vmem [#allocation20], 32
          %v2987 = vld [vmem:[%s2986] sm:$0xff]
          %v2988 = vld [vmem:[%s2986 + $0x8] sm:$0xff]
          %v2989 = vrot.slane %v2930, 2
          %v2990 = vsel %vm2667, %v2989, 0
          %2992 = vmatpush.msra.mxu0 0.0
          %2993 = vmatpush.msra.mxu0 0.0
          %2994 = vmatpush.msra.mxu0 0.0
          %2995 = vmatpush.msra.mxu0 0.0
          %2996 = vmatpush.msra.mxu0 0.0
          %2997 = vmatpush.msra.mxu0 0.0
          %2998 = vmatpush.msra.mxu0 0.0
          %2999 = vmatpush.msra.mxu0 0.0
          %3000 = vmatpush.msra.mxu0 0.0
          %3001 = vmatpush.msra.mxu0 0.0
          %3002 = vmatpush.msra.mxu0 0.0
          %3003 = vmatpush.msra.mxu0 0.0
          %3004 = vmatpush.msra.mxu0 0.0
          %3005 = vmatpush.msra.mxu0 0.0
          %3006 = vmatpush.msra.mxu0 %v2988
          %3007 = vmatpush.msra.mxu0 %v2987
          %3008 = vmatmul.f32.gmra.mxu0 %v2990
          %v3009 = vpop.f32.mrf.mxu0
          %v3010 = vadd.f32 0.0, %v3009
          %3011 = vdwg.mxu0
          %v3012 = vadd.f32 %v2985, %v3010
          %s3013 = scalar_lea.vmem [#allocation20], 48
          %v3014 = vld [vmem:[%s3013] sm:$0xff]
          %v3015 = vld [vmem:[%s3013 + $0x8] sm:$0xff]
          %v3016 = vrot.slane %v2930, 3
          %v3017 = vsel %vm2667, %v3016, 0
          %3019 = vmatpush.msra.mxu0 0.0
          %3020 = vmatpush.msra.mxu0 0.0
          %3021 = vmatpush.msra.mxu0 0.0
          %3022 = vmatpush.msra.mxu0 0.0
          %3023 = vmatpush.msra.mxu0 0.0
          %3024 = vmatpush.msra.mxu0 0.0
          %3025 = vmatpush.msra.mxu0 0.0
          %3026 = vmatpush.msra.mxu0 0.0
          %3027 = vmatpush.msra.mxu0 0.0
          %3028 = vmatpush.msra.mxu0 0.0
          %3029 = vmatpush.msra.mxu0 0.0
          %3030 = vmatpush.msra.mxu0 0.0
          %3031 = vmatpush.msra.mxu0 0.0
          %3032 = vmatpush.msra.mxu0 0.0
          %3033 = vmatpush.msra.mxu0 %v3015
          %3034 = vmatpush.msra.mxu0 %v3014
          %3035 = vmatmul.f32.gmra.mxu0 %v3017
          %v3036 = vpop.f32.mrf.mxu0
          %v3037 = vadd.f32 0.0, %v3036
          %3038 = vdwg.mxu0
          %v3039 = vadd.f32 %v3012, %v3037
          %s3040 = scalar_lea.vmem [#allocation20], 64
          %v3041 = vld [vmem:[%s3040] sm:$0xff]
          %v3042 = vld [vmem:[%s3040 + $0x8] sm:$0xff]
          %v3043 = vrot.slane %v2930, 4
          %v3044 = vsel %vm2667, %v3043, 0
          %3046 = vmatpush.msra.mxu0 0.0
          %3047 = vmatpush.msra.mxu0 0.0
          %3048 = vmatpush.msra.mxu0 0.0
          %3049 = vmatpush.msra.mxu0 0.0
          %3050 = vmatpush.msra.mxu0 0.0
          %3051 = vmatpush.msra.mxu0 0.0
          %3052 = vmatpush.msra.mxu0 0.0
          %3053 = vmatpush.msra.mxu0 0.0
          %3054 = vmatpush.msra.mxu0 0.0
          %3055 = vmatpush.msra.mxu0 0.0
          %3056 = vmatpush.msra.mxu0 0.0
          %3057 = vmatpush.msra.mxu0 0.0
          %3058 = vmatpush.msra.mxu0 0.0
          %3059 = vmatpush.msra.mxu0 0.0
          %3060 = vmatpush.msra.mxu0 %v3042
          %3061 = vmatpush.msra.mxu0 %v3041
          %3062 = vmatmul.f32.gmra.mxu0 %v3044
          %v3063 = vpop.f32.mrf.mxu0
          %v3064 = vadd.f32 0.0, %v3063
          %3065 = vdwg.mxu0
          %v3066 = vadd.f32 %v3039, %v3064
          %s3067 = scalar_lea.vmem [#allocation20], 80
          %v3068 = vld [vmem:[%s3067] sm:$0xff]
          %v3069 = vld [vmem:[%s3067 + $0x8] sm:$0xff]
          %v3070 = vrot.slane %v2930, 5
          %v3071 = vsel %vm2667, %v3070, 0
          %3073 = vmatpush.msra.mxu0 0.0
          %3074 = vmatpush.msra.mxu0 0.0
          %3075 = vmatpush.msra.mxu0 0.0
          %3076 = vmatpush.msra.mxu0 0.0
          %3077 = vmatpush.msra.mxu0 0.0
          %3078 = vmatpush.msra.mxu0 0.0
          %3079 = vmatpush.msra.mxu0 0.0
          %3080 = vmatpush.msra.mxu0 0.0
          %3081 = vmatpush.msra.mxu0 0.0
          %3082 = vmatpush.msra.mxu0 0.0
          %3083 = vmatpush.msra.mxu0 0.0
          %3084 = vmatpush.msra.mxu0 0.0
          %3085 = vmatpush.msra.mxu0 0.0
          %3086 = vmatpush.msra.mxu0 0.0
          %3087 = vmatpush.msra.mxu0 %v3069
          %3088 = vmatpush.msra.mxu0 %v3068
          %3089 = vmatmul.f32.gmra.mxu0 %v3071
          %v3090 = vpop.f32.mrf.mxu0
          %v3091 = vadd.f32 0.0, %v3090
          %3092 = vdwg.mxu0
          %v3093 = vadd.f32 %v3066, %v3091
          %s3094 = scalar_lea.vmem [#allocation20], 96
          %v3095 = vld [vmem:[%s3094] sm:$0xff]
          %v3096 = vld [vmem:[%s3094 + $0x8] sm:$0xff]
          %v3097 = vrot.slane %v2930, 6
          %v3098 = vsel %vm2667, %v3097, 0
          %3100 = vmatpush.msra.mxu0 0.0
          %3101 = vmatpush.msra.mxu0 0.0
          %3102 = vmatpush.msra.mxu0 0.0
          %3103 = vmatpush.msra.mxu0 0.0
          %3104 = vmatpush.msra.mxu0 0.0
          %3105 = vmatpush.msra.mxu0 0.0
          %3106 = vmatpush.msra.mxu0 0.0
          %3107 = vmatpush.msra.mxu0 0.0
          %3108 = vmatpush.msra.mxu0 0.0
          %3109 = vmatpush.msra.mxu0 0.0
          %3110 = vmatpush.msra.mxu0 0.0
          %3111 = vmatpush.msra.mxu0 0.0
          %3112 = vmatpush.msra.mxu0 0.0
          %3113 = vmatpush.msra.mxu0 0.0
          %3114 = vmatpush.msra.mxu0 %v3096
          %3115 = vmatpush.msra.mxu0 %v3095
          %3116 = vmatmul.f32.gmra.mxu0 %v3098
          %v3117 = vpop.f32.mrf.mxu0
          %v3118 = vadd.f32 0.0, %v3117
          %3119 = vdwg.mxu0
          %v3120 = vadd.f32 %v3093, %v3118
          %s3121 = scalar_lea.vmem [#allocation20], 112
          %v3122 = vld [vmem:[%s3121] sm:$0xff]
          %v3123 = vld [vmem:[%s3121 + $0x8] sm:$0xff]
          %v3124 = vrot.slane %v2930, 7
          %v3125 = vsel %vm2667, %v3124, 0
          %3127 = vmatpush.msra.mxu0 0.0
          %3128 = vmatpush.msra.mxu0 0.0
          %3129 = vmatpush.msra.mxu0 0.0
          %3130 = vmatpush.msra.mxu0 0.0
          %3131 = vmatpush.msra.mxu0 0.0
          %3132 = vmatpush.msra.mxu0 0.0
          %3133 = vmatpush.msra.mxu0 0.0
          %3134 = vmatpush.msra.mxu0 0.0
          %3135 = vmatpush.msra.mxu0 0.0
          %3136 = vmatpush.msra.mxu0 0.0
          %3137 = vmatpush.msra.mxu0 0.0
          %3138 = vmatpush.msra.mxu0 0.0
          %3139 = vmatpush.msra.mxu0 0.0
          %3140 = vmatpush.msra.mxu0 0.0
          %3141 = vmatpush.msra.mxu0 %v3123
          %3142 = vmatpush.msra.mxu0 %v3122
          %3143 = vmatmul.f32.gmra.mxu0 %v3125
          %v3144 = vpop.f32.mrf.mxu0
          %v3145 = vadd.f32 0.0, %v3144
          %3146 = vdwg.mxu0
          %v3147 = vadd.f32 %v3120, %v3145
          %3148 = vst [vmem:[#allocation21] sm:$0x1] %v3147
          %s3149 = scalar_lea.vmem %s9, 128
          %v3150 = vld [vmem:[%s3149] sm:$0xff]
          %v3151 = vld [vmem:[%s3149 + $0x8] sm:$0xff]
          %v3152 = vld [vmem:[%s3149 + $0x10] sm:$0xff]
          %v3153 = vld [vmem:[%s3149 + $0x18] sm:$0xff]
          %v3154 = vld [vmem:[%s3149 + $0x20] sm:$0xff]
          %v3155 = vld [vmem:[%s3149 + $0x28] sm:$0xff]
          %v3156 = vld [vmem:[%s3149 + $0x30] sm:$0xff]
          %v3157 = vld [vmem:[%s3149 + $0x38] sm:$0xff]
          %v3158 = vld [vmem:[%s3149 + $0x40] sm:$0xff]
          %v3159 = vld [vmem:[%s3149 + $0x48] sm:$0xff]
          %v3160 = vld [vmem:[%s3149 + $0x50] sm:$0xff]
          %v3161 = vld [vmem:[%s3149 + $0x58] sm:$0xff]
          %v3162 = vld [vmem:[%s3149 + $0x60] sm:$0xff]
          %v3163 = vld [vmem:[%s3149 + $0x68] sm:$0xff]
          %v3164 = vld [vmem:[%s3149 + $0x70] sm:$0xff]
          %v3165 = vld [vmem:[%s3149 + $0x78] sm:$0xff]
          %3166 = vmatpush.msra.mxu0 %v3165
          %3167 = vmatpush.msra.mxu0 %v3164
          %3168 = vmatpush.msra.mxu0 %v3163
          %3169 = vmatpush.msra.mxu0 %v3162
          %3170 = vmatpush.msra.mxu0 %v3161
          %3171 = vmatpush.msra.mxu0 %v3160
          %3172 = vmatpush.msra.mxu0 %v3159
          %3173 = vmatpush.msra.mxu0 %v3158
          %3174 = vmatpush.msra.mxu0 %v3157
          %3175 = vmatpush.msra.mxu0 %v3156
          %3176 = vmatpush.msra.mxu0 %v3155
          %3177 = vmatpush.msra.mxu0 %v3154
          %3178 = vmatpush.msra.mxu0 %v3153
          %3179 = vmatpush.msra.mxu0 %v3152
          %3180 = vmatpush.msra.mxu0 %v3151
          %3181 = vmatpush.msra.mxu0 %v3150
          %3182 = vmatmul.f32.gmra.mxu0 %v2895
          %v3183 = vpop.f32.mrf.mxu0
          %v3184 = vadd.f32 0.0, %v3183
          %3185 = vdwg.mxu0
          %v3186 = vld [vmem:[%s11] sm:$0x1]
          %v3187 = vld [vmem:[#allocation20] sm:$0xff]
          %v3188 = vld [vmem:[#allocation20 + $0x8] sm:$0xff]
          %v3190 = vsel %vm2667, %v3184, 0
          %3192 = vmatpush.msra.mxu0 0.0
          %3193 = vmatpush.msra.mxu0 0.0
          %3194 = vmatpush.msra.mxu0 0.0
          %3195 = vmatpush.msra.mxu0 0.0
          %3196 = vmatpush.msra.mxu0 0.0
          %3197 = vmatpush.msra.mxu0 0.0
          %3198 = vmatpush.msra.mxu0 0.0
          %3199 = vmatpush.msra.mxu0 0.0
          %3200 = vmatpush.msra.mxu0 0.0
          %3201 = vmatpush.msra.mxu0 0.0
          %3202 = vmatpush.msra.mxu0 0.0
          %3203 = vmatpush.msra.mxu0 0.0
          %3204 = vmatpush.msra.mxu0 0.0
          %3205 = vmatpush.msra.mxu0 0.0
          %3206 = vmatpush.msra.mxu0 %v3188
          %3207 = vmatpush.msra.mxu0 %v3187
          %3208 = vmatmul.f32.gmra.mxu0 %v3190
          %v3209 = vpop.f32.mrf.mxu0
          %v3210 = vadd.f32 0.0, %v3209
          %3211 = vdwg.mxu0
          %v3212 = vadd.f32 %v3186, %v3210
          %v3213 = vld [vmem:[%s2959] sm:$0xff]
          %v3214 = vld [vmem:[%s2959 + $0x8] sm:$0xff]
          %v3215 = vrot.slane %v3184, 1
          %v3216 = vsel %vm2667, %v3215, 0
          %3218 = vmatpush.msra.mxu0 0.0
          %3219 = vmatpush.msra.mxu0 0.0
          %3220 = vmatpush.msra.mxu0 0.0
          %3221 = vmatpush.msra.mxu0 0.0
          %3222 = vmatpush.msra.mxu0 0.0
          %3223 = vmatpush.msra.mxu0 0.0
          %3224 = vmatpush.msra.mxu0 0.0
          %3225 = vmatpush.msra.mxu0 0.0
          %3226 = vmatpush.msra.mxu0 0.0
          %3227 = vmatpush.msra.mxu0 0.0
          %3228 = vmatpush.msra.mxu0 0.0
          %3229 = vmatpush.msra.mxu0 0.0
          %3230 = vmatpush.msra.mxu0 0.0
          %3231 = vmatpush.msra.mxu0 0.0
          %3232 = vmatpush.msra.mxu0 %v3214
          %3233 = vmatpush.msra.mxu0 %v3213
          %3234 = vmatmul.f32.gmra.mxu0 %v3216
          %v3235 = vpop.f32.mrf.mxu0
          %v3236 = vadd.f32 0.0, %v3235
          %3237 = vdwg.mxu0
          %v3238 = vadd.f32 %v3212, %v3236
          %v3239 = vld [vmem:[%s2986] sm:$0xff]
          %v3240 = vld [vmem:[%s2986 + $0x8] sm:$0xff]
          %v3241 = vrot.slane %v3184, 2
          %v3242 = vsel %vm2667, %v3241, 0
          %3244 = vmatpush.msra.mxu0 0.0
          %3245 = vmatpush.msra.mxu0 0.0
          %3246 = vmatpush.msra.mxu0 0.0
          %3247 = vmatpush.msra.mxu0 0.0
          %3248 = vmatpush.msra.mxu0 0.0
          %3249 = vmatpush.msra.mxu0 0.0
          %3250 = vmatpush.msra.mxu0 0.0
          %3251 = vmatpush.msra.mxu0 0.0
          %3252 = vmatpush.msra.mxu0 0.0
          %3253 = vmatpush.msra.mxu0 0.0
          %3254 = vmatpush.msra.mxu0 0.0
          %3255 = vmatpush.msra.mxu0 0.0
          %3256 = vmatpush.msra.mxu0 0.0
          %3257 = vmatpush.msra.mxu0 0.0
          %3258 = vmatpush.msra.mxu0 %v3240
          %3259 = vmatpush.msra.mxu0 %v3239
          %3260 = vmatmul.f32.gmra.mxu0 %v3242
          %v3261 = vpop.f32.mrf.mxu0
          %v3262 = vadd.f32 0.0, %v3261
          %3263 = vdwg.mxu0
          %v3264 = vadd.f32 %v3238, %v3262
          %v3265 = vld [vmem:[%s3013] sm:$0xff]
          %v3266 = vld [vmem:[%s3013 + $0x8] sm:$0xff]
          %v3267 = vrot.slane %v3184, 3
          %v3268 = vsel %vm2667, %v3267, 0
          %3270 = vmatpush.msra.mxu0 0.0
          %3271 = vmatpush.msra.mxu0 0.0
          %3272 = vmatpush.msra.mxu0 0.0
          %3273 = vmatpush.msra.mxu0 0.0
          %3274 = vmatpush.msra.mxu0 0.0
          %3275 = vmatpush.msra.mxu0 0.0
          %3276 = vmatpush.msra.mxu0 0.0
          %3277 = vmatpush.msra.mxu0 0.0
          %3278 = vmatpush.msra.mxu0 0.0
          %3279 = vmatpush.msra.mxu0 0.0
          %3280 = vmatpush.msra.mxu0 0.0
          %3281 = vmatpush.msra.mxu0 0.0
          %3282 = vmatpush.msra.mxu0 0.0
          %3283 = vmatpush.msra.mxu0 0.0
          %3284 = vmatpush.msra.mxu0 %v3266
          %3285 = vmatpush.msra.mxu0 %v3265
          %3286 = vmatmul.f32.gmra.mxu0 %v3268
          %v3287 = vpop.f32.mrf.mxu0
          %v3288 = vadd.f32 0.0, %v3287
          %3289 = vdwg.mxu0
          %v3290 = vadd.f32 %v3264, %v3288
          %v3291 = vld [vmem:[%s3040] sm:$0xff]
          %v3292 = vld [vmem:[%s3040 + $0x8] sm:$0xff]
          %v3293 = vrot.slane %v3184, 4
          %v3294 = vsel %vm2667, %v3293, 0
          %3296 = vmatpush.msra.mxu0 0.0
          %3297 = vmatpush.msra.mxu0 0.0
          %3298 = vmatpush.msra.mxu0 0.0
          %3299 = vmatpush.msra.mxu0 0.0
          %3300 = vmatpush.msra.mxu0 0.0
          %3301 = vmatpush.msra.mxu0 0.0
          %3302 = vmatpush.msra.mxu0 0.0
          %3303 = vmatpush.msra.mxu0 0.0
          %3304 = vmatpush.msra.mxu0 0.0
          %3305 = vmatpush.msra.mxu0 0.0
          %3306 = vmatpush.msra.mxu0 0.0
          %3307 = vmatpush.msra.mxu0 0.0
          %3308 = vmatpush.msra.mxu0 0.0
          %3309 = vmatpush.msra.mxu0 0.0
          %3310 = vmatpush.msra.mxu0 %v3292
          %3311 = vmatpush.msra.mxu0 %v3291
          %3312 = vmatmul.f32.gmra.mxu0 %v3294
          %v3313 = vpop.f32.mrf.mxu0
          %v3314 = vadd.f32 0.0, %v3313
          %3315 = vdwg.mxu0
          %v3316 = vadd.f32 %v3290, %v3314
          %v3317 = vld [vmem:[%s3067] sm:$0xff]
          %v3318 = vld [vmem:[%s3067 + $0x8] sm:$0xff]
          %v3319 = vrot.slane %v3184, 5
          %v3320 = vsel %vm2667, %v3319, 0
          %3322 = vmatpush.msra.mxu0 0.0
          %3323 = vmatpush.msra.mxu0 0.0
          %3324 = vmatpush.msra.mxu0 0.0
          %3325 = vmatpush.msra.mxu0 0.0
          %3326 = vmatpush.msra.mxu0 0.0
          %3327 = vmatpush.msra.mxu0 0.0
          %3328 = vmatpush.msra.mxu0 0.0
          %3329 = vmatpush.msra.mxu0 0.0
          %3330 = vmatpush.msra.mxu0 0.0
          %3331 = vmatpush.msra.mxu0 0.0
          %3332 = vmatpush.msra.mxu0 0.0
          %3333 = vmatpush.msra.mxu0 0.0
          %3334 = vmatpush.msra.mxu0 0.0
          %3335 = vmatpush.msra.mxu0 0.0
          %3336 = vmatpush.msra.mxu0 %v3318
          %3337 = vmatpush.msra.mxu0 %v3317
          %3338 = vmatmul.f32.gmra.mxu0 %v3320
          %v3339 = vpop.f32.mrf.mxu0
          %v3340 = vadd.f32 0.0, %v3339
          %3341 = vdwg.mxu0
          %v3342 = vadd.f32 %v3316, %v3340
          %v3343 = vld [vmem:[%s3094] sm:$0xff]
          %v3344 = vld [vmem:[%s3094 + $0x8] sm:$0xff]
          %v3345 = vrot.slane %v3184, 6
          %v3346 = vsel %vm2667, %v3345, 0
          %3348 = vmatpush.msra.mxu0 0.0
          %3349 = vmatpush.msra.mxu0 0.0
          %3350 = vmatpush.msra.mxu0 0.0
          %3351 = vmatpush.msra.mxu0 0.0
          %3352 = vmatpush.msra.mxu0 0.0
          %3353 = vmatpush.msra.mxu0 0.0
          %3354 = vmatpush.msra.mxu0 0.0
          %3355 = vmatpush.msra.mxu0 0.0
          %3356 = vmatpush.msra.mxu0 0.0
          %3357 = vmatpush.msra.mxu0 0.0
          %3358 = vmatpush.msra.mxu0 0.0
          %3359 = vmatpush.msra.mxu0 0.0
          %3360 = vmatpush.msra.mxu0 0.0
          %3361 = vmatpush.msra.mxu0 0.0
          %3362 = vmatpush.msra.mxu0 %v3344
          %3363 = vmatpush.msra.mxu0 %v3343
          %3364 = vmatmul.f32.gmra.mxu0 %v3346
          %v3365 = vpop.f32.mrf.mxu0
          %v3366 = vadd.f32 0.0, %v3365
          %3367 = vdwg.mxu0
          %v3368 = vadd.f32 %v3342, %v3366
          %v3369 = vld [vmem:[%s3121] sm:$0xff]
          %v3370 = vld [vmem:[%s3121 + $0x8] sm:$0xff]
          %v3371 = vrot.slane %v3184, 7
          %v3372 = vsel %vm2667, %v3371, 0
          %3374 = vmatpush.msra.mxu0 0.0
          %3375 = vmatpush.msra.mxu0 0.0
          %3376 = vmatpush.msra.mxu0 0.0
          %3377 = vmatpush.msra.mxu0 0.0
          %3378 = vmatpush.msra.mxu0 0.0
          %3379 = vmatpush.msra.mxu0 0.0
          %3380 = vmatpush.msra.mxu0 0.0
          %3381 = vmatpush.msra.mxu0 0.0
          %3382 = vmatpush.msra.mxu0 0.0
          %3383 = vmatpush.msra.mxu0 0.0
          %3384 = vmatpush.msra.mxu0 0.0
          %3385 = vmatpush.msra.mxu0 0.0
          %3386 = vmatpush.msra.mxu0 0.0
          %3387 = vmatpush.msra.mxu0 0.0
          %3388 = vmatpush.msra.mxu0 %v3370
          %3389 = vmatpush.msra.mxu0 %v3369
          %3390 = vmatmul.f32.gmra.mxu0 %v3372
          %v3391 = vpop.f32.mrf.mxu0
          %v3392 = vadd.f32 0.0, %v3391
          %3393 = vdwg.mxu0
          %v3394 = vadd.f32 %v3368, %v3392
          %3395 = vst [vmem:[#allocation21 + $0x1] sm:$0x1] %v3394
        $region104: #{tpu_custom_call.1} parent=67 // pred_fallthru
          _
        // Predicated region
        $region105: #{tpu_custom_call.1} parent=67 // pred_check
          %p3396 = pneg %p293
        $region106: #{tpu_custom_call.1} parent=67 // pred_check_branch
          %3398 = sbr.rel (%p3396) target = $region108
        $region107: #{tpu_custom_call.1} parent=67 // pred_region
          %3400 = vsyncadd [#allocation11], 0
          %s3402 = sshll.u32 [#allocation21], 4
          %s3403 = int_to_ptr.vmem [resolvable:$true] %s3402
          %s3404 = sshll.u32 %s12, 4
          %s3405 = int_to_ptr.hbm [resolvable:$true] %s3404
          %3407 = dma.vmem_to_hbm [thread:$0]  %s3403, 32, %s3405, [#allocation11]
        $region108: #{tpu_custom_call.1} parent=67 // pred_fallthru
          _
        // Predicated region
        $region109: #{tpu_custom_call.1} parent=67 // pred_check
          %p3408 = pneg %p293
        $region110: #{tpu_custom_call.1} parent=67 // pred_check_branch
          %3410 = sbr.rel (%p3408) target = $region112
        $region111: #{tpu_custom_call.1} parent=67 // pred_region
          %3412 = dma.done [#allocation11], 32
        $region112: #{tpu_custom_call.1} parent=67 // pred_fallthru
          _
      $region68: #{tpu_custom_call.1} parent=5 // pred_fallthru
        _
      %p3413 = scmp.le.s32.totalorder 2, %s23
      // Predicated region
      $region113: #{tpu_custom_call.1} parent=5 // pred_check
        %p3414 = pneg %p3413
      $region114: #{tpu_custom_call.1} parent=5 // pred_check_branch
        %3416 = sbr.rel (%p3414) target = $region116
      $region115: #{tpu_custom_call.1} parent=5 // pred_region
        %s3417 = ssub.s32 %s23, 2
      $region116: #{tpu_custom_call.1} parent=5 // pred_fallthru
        _
    $region6: #{tpu_custom_call.1} parent=1 // loop_footer
      %s27 = sadd.s32 1, %s23
    $region7: #{tpu_custom_call.1} parent=1 // loop_footer_branch
      %22 = sbr.rel target = $region3
    $region8: #{tpu_custom_call.1} parent=1 // loop_exit
      _
    %3418 = vsyncpa [#allocation10], 1
    %s3419 = scalar_lea.sflag [#allocation10], 1
    %3420 = vsyncpa %s3419, 1
    %3421 = vsyncpa [#allocation13], 1
    %3422 = vsyncpa [#allocation16], 1
    %3423 = vsyncpa [#allocation19], 1
    %3424 = vsyncpa [#allocation11], 1
    %s3425 = scalar_lea.sflag [#allocation11], 1
    %3426 = vsyncpa %s3425, 1

</llo_original>
